<compile_context>
chip_gen: v6e
topology: v6e:2x2x1
jax: 0.10.0
libtpu: 0.0.40
codegen_flags: <defaults>
</compile_context>

<pallas_src>
import functools

import jax
import jax.numpy as jnp
from jax import lax
from jax.experimental import pallas as pl
from jax.experimental.pallas import tpu as pltpu

# --- config matching BaseAffinityPrediction.__init__ ---------------------------------
NUM_EMB = 64
TRANSF_OUT = NUM_EMB * 2          # 128
NUM_LAYERS = 3
NUM_HEADS = 2
HEAD_DIM = NUM_EMB // NUM_HEADS   # 32
FFN_DIM = NUM_EMB * 4             # 256
OUT_WIDTH = 2 * TRANSF_OUT        # 256 lanes: [graph_emb(128) | pred broadcast(128)]

ENC_PARAM_ORDER = [
    "x2h_w1", "x2h_b1", "x2h_w2", "x2h_b2",
    "c2h_w1", "c2h_b1", "c2h_w2", "c2h_b2",
    "ln_params",                  # (L, 4, E): rows = [ln1_g, ln1_b, ln2_g, ln2_b]
    "wqkv", "bqkv",               # fused QKV: (L, E, 3E), (L, 1, 3E)
    "wo", "bo",
    "wf1", "bf1", "wf2", "bf2",
    "reg_w1", "reg_b1", "reg_w2", "reg_b2",
]


# ======================================================================================
# Fused kernel: encoder + readout + regressor, G graphs per grid step
# ======================================================================================
def _fused_kernel(
    x_ref, nmask_ref, cond_ref,
    x2h_w1, x2h_b1, x2h_w2, x2h_b2,
    c2h_w1, c2h_b1, c2h_w2, c2h_b2,
    ln_params, wqkv, bqkv, wo, bo, wf1, bf1, wf2, bf2,
    reg_w1, reg_b1, reg_w2, reg_b2,
    out_ref,
    *, n_virt,
):
    f32 = jnp.float32
    bf16 = jnp.bfloat16
    G, NAUG, x_dim = x_ref.shape
    M = G * NAUG
    E = NUM_EMB

    def dot(a, b):
        # bf16 MXU fast path, f32 accumulation (weights are stored bf16 already).
        return jnp.dot(a.astype(bf16), b.astype(bf16), preferred_element_type=f32)

    def layer_norm(z, g, b_):
        mu = jnp.mean(z, axis=-1, keepdims=True)
        var = jnp.mean(jnp.square(z - mu), axis=-1, keepdims=True)
        return (z - mu) * lax.rsqrt(var + 1e-5) * g + b_

    # --- masks generated in-kernel (no tiny mask DMAs) --------------------------------
    nmask = nmask_ref[...]                                       # (G, NAUG), 1.0 = real node
    lane_pos = lax.broadcasted_iota(jnp.int32, (G, NAUG), 1)
    vsel = (lane_pos == n_virt).astype(f32)                      # virtual-node one-hot (lanes)
    valid_keys = jnp.maximum(nmask, vsel)                        # real or virtual
    key_bias = ((valid_keys - 1.0) * 1e30).reshape(G, 1, NAUG)   # 0 valid, -1e30 invalid

    # --- input embedding MLPs (x2h for nodes, c2h for pharmacophore conditioning) -----
    x2 = x_ref[...].reshape(M, x_dim)
    h = jnp.maximum(dot(x2, x2h_w1[...]) + x2h_b1[...], 0.0)
    h = dot(h, x2h_w2[...]) + x2h_b2[...]                        # (M, E)

    c = jnp.maximum(dot(cond_ref[...], c2h_w1[...]) + c2h_b1[...], 0.0)
    c = dot(c, c2h_w2[...]) + c2h_b2[...]                        # (G, E)

    # virtual node (row n_virt of each graph) carries the conditioning vector
    sub_pos = lax.broadcasted_iota(jnp.int32, (G, NAUG, 1), 1)
    vrow = (sub_pos == n_virt).astype(f32)                       # (G, NAUG, 1)
    o3 = h.reshape(G, NAUG, E) * (1.0 - vrow) + c.reshape(G, 1, E) * vrow
    o = o3.reshape(M, E)

    scale = 1.0 / (HEAD_DIM ** 0.5)

    # NOTE: padded rows are never re-masked on the residual path; they are excluded as
    # attention keys (key_bias) and at readout (nmask / vsel), so real-node results are
    # unaffected.
    for l in range(NUM_LAYERS):                 # static unroll over 3 transformer layers
        ln = ln_params[l]                       # (4, E)

        # --- masked multi-head self-attention (pre-LN), fused QKV ---------------------
        z = layer_norm(o, ln[0:1], ln[1:2])
        qkv = dot(z, wqkv[l]) + bqkv[l]                          # (M, 3E) f32
        # TODO(synk): a single multi-batch einsum ('gqhd,gkhd->ghqk') over both heads is
        # not used because Mosaic dot_general with >1 batch dim is a lowering risk; with
        # NUM_HEADS=2 the per-head loop is kept and only the output projection is fused.
        heads_ctx = []
        for hd in range(NUM_HEADS):
            lo = hd * HEAD_DIM
            qh = qkv[:, lo:lo + HEAD_DIM].reshape(G, NAUG, HEAD_DIM).astype(bf16)
            kh = qkv[:, E + lo:E + lo + HEAD_DIM].reshape(G, NAUG, HEAD_DIM).astype(bf16)
            vh = qkv[:, 2 * E + lo:2 * E + lo + HEAD_DIM].reshape(G, NAUG, HEAD_DIM).astype(bf16)
            s = jnp.einsum("gqd,gkd->gqk", qh, kh,
                           preferred_element_type=f32) * scale + key_bias
            s = s - jnp.max(s, axis=-1, keepdims=True)
            p = jnp.exp(s)
            p = p * pl.reciprocal(jnp.sum(p, axis=-1, keepdims=True), approx=True)
            ctx = jnp.einsum("gqk,gkd->gqd", p.astype(bf16), vh,
                             preferred_element_type=f32)
            heads_ctx.append(ctx.reshape(M, HEAD_DIM))
        ctx_cat = jnp.concatenate(heads_ctx, axis=-1)            # (M, E): one K=64 matmul
        o = o + dot(ctx_cat, wo[l]) + bo[l]

        # --- feed-forward block (pre-LN) ----------------------------------------------
        z = layer_norm(o, ln[2:3], ln[3:4])
        ff = jnp.maximum(dot(z, wf1[l]) + bf1[l], 0.0)
        o = o + dot(ff, wf2[l]) + bf2[l]

    # --- readout: [masked mean-pool || virtual node] -> graph emb -> regressor --------
    o3 = o.reshape(G, NAUG, E)
    counts = jnp.maximum(jnp.sum(nmask, axis=-1, keepdims=True), 1.0)          # (G, 1)
    poolw = nmask * (1.0 / counts)                                             # exact mean
    gmean = jnp.sum(o3 * poolw[:, :, None], axis=1)                            # (G, E) VPU+XLU
    gvirt = o3[:, n_virt, :]                                                   # (G, E) static slice
    graph_cat = jnp.concatenate([gmean, gvirt], axis=-1)                       # (G, 2E)

    # regressor: Linear(128,128) -> ReLU -> Linear(128,1) on the already-built concat
    h1 = jnp.maximum(dot(graph_cat, reg_w1[...]) + reg_b1[...], 0.0)           # (G, 2E)
    pred = dot(h1, reg_w2[...]) + reg_b2[...]                                  # (G, 1)

    # lane-dense store: [graph_emb | pred broadcast over last 128 lanes] -> (G, 256)
    out_ref[...] = jnp.concatenate(
        [graph_cat, jnp.broadcast_to(pred, (G, TRANSF_OUT))], axis=-1)


# ======================================================================================
# Wrapper: pad/batch graphs, single pallas_call
# ======================================================================================
def _round_up(v, m):
    return ((v + m - 1) // m) * m


def _pick_g(B, graphs_per_step):
    """Graphs per grid step: multiple of 8, big enough to fill MXU rows, but capped so
    large batches always produce >= 2 grid steps (v7x has 2 TCs on the parallel axis)."""
    if B <= 8:
        return B, B                                   # single tiny step, block dims == full dims
    g_cap = max(8, _round_up((B + 1) // 2, 8))        # ensures >= 2 steps
    G = max(8, min(_round_up(graphs_per_step, 8), g_cap))
    b_pad = _round_up(B, G)
    return G, b_pad


def encode_and_predict(x, node_mask, pharm_cond, params, graphs_per_step=64):
    """x: [B, N, x_dim] (padded), node_mask: [B, N], pharm_cond: [B, pharm_dim]."""
    B, N, x_dim = x.shape
    pharm_dim = pharm_cond.shape[-1]
    f32 = jnp.float32

    naug = _round_up(N + 1, 8)          # real nodes + 1 virtual node, tile-aligned sublanes
    G, b_pad = _pick_g(B, graphs_per_step)
    steps = b_pad // G

    x_aug = jnp.pad(x.astype(f32), ((0, b_pad - B), (0, naug - N), (0, 0)))
    nmask = jnp.pad(node_mask.astype(f32), ((0, b_pad - B), (0, naug - N)))
    cond = jnp.pad(pharm_cond.astype(f32), ((0, b_pad - B), (0, 0)))

    weights = [params[name] for name in ENC_PARAM_ORDER]

    def _full(shape):
        nd = len(shape)
        return pl.BlockSpec(shape, lambda i, _nd=nd: (0,) * _nd)

    in_specs = [
        pl.BlockSpec((G, naug, x_dim), lambda i: (i, 0, 0)),
        pl.BlockSpec((G, naug), lambda i: (i, 0)),
        pl.BlockSpec((G, pharm_dim), lambda i: (i, 0)),
    ] + [_full(w.shape) for w in weights]

    out_shape = jax.ShapeDtypeStruct((b_pad, OUT_WIDTH), f32)
    out_specs = pl.BlockSpec((G, OUT_WIDTH), lambda i: (i, 0))

    # advisory cost estimate (flops dominated by the 3 transformer layers)
    M, E, F = G * naug, NUM_EMB, FFN_DIM
    per_step_flops = (
        2 * M * x_dim * E + 2 * M * E * E
        + 2 * G * (pharm_dim * E + E * E)
        + NUM_LAYERS * (2 * M * E * 3 * E + 4 * G * naug * naug * E
                        + 2 * M * E * E + 4 * M * E * F)
        + 2 * G * (TRANSF_OUT * TRANSF_OUT + TRANSF_OUT)
    )
    per_step_transc = NUM_LAYERS * (NUM_HEADS * G * naug * naug + 2 * M)
    weight_bytes = sum(int(w.size) * w.dtype.itemsize for w in weights)
    bytes_accessed = (int(x_aug.size + nmask.size + cond.size) * 4
                      + b_pad * OUT_WIDTH * 4 + weight_bytes)
    cost = pl.CostEstimate(flops=int(steps * per_step_flops),
                           transcendentals=int(steps * per_step_transc),
                           bytes_accessed=int(bytes_accessed))

    combined = pl.pallas_call(
        functools.partial(_fused_kernel, n_virt=N),
        out_shape=out_shape,
        grid=(steps,),
        in_specs=in_specs,
        out_specs=out_specs,
        compiler_params=pltpu.CompilerParams(dimension_semantics=("parallel",)),
        cost_estimate=cost,
    )(x_aug, nmask, cond, *weights)

    graph_emb = combined[:B, :TRANSF_OUT]
    pred = combined[:B, TRANSF_OUT:TRANSF_OUT + 1]
    return graph_emb, pred


# ======================================================================================
# Deterministic parameter init (synthetic weights; shapes implied by __init__)
# ======================================================================================
def init_params(key, x_dim, pharm_dim):
    keys = jax.random.split(key, 32)
    it = iter(keys)

    def w(shape):
        fan_in = shape[-2]
        v = (jax.random.normal(next(it), shape, jnp.float32) /
             jnp.sqrt(jnp.float32(fan_in)))
        return v.astype(jnp.bfloat16)          # matmul weights stored bf16 (MXU fast path)

    def b(shape):
        return jnp.zeros(shape, jnp.float32)

    L, E, F = NUM_LAYERS, NUM_EMB, FFN_DIM
    # (L, 4, E): rows = [ln1_gamma, ln1_beta, ln2_gamma, ln2_beta]
    ln = jnp.tile(jnp.array([1.0, 0.0, 1.0, 0.0], jnp.float32)[None, :, None], (L, 1, E))
    return {
        "x2h_w1": w((x_dim, E)), "x2h_b1": b((1, E)),
        "x2h_w2": w((E, E)),     "x2h_b2": b((1, E)),
        "c2h_w1": w((pharm_dim, E)), "c2h_b1": b((1, E)),
        "c2h_w2": w((E, E)),         "c2h_b2": b((1, E)),
        "ln_params": ln,
        "wqkv": w((L, E, 3 * E)), "bqkv": b((L, 1, 3 * E)),
        "wo": w((L, E, E)),       "bo": b((L, 1, E)),
        "wf1": w((L, E, F)),      "bf1": b((L, 1, F)),
        "wf2": w((L, F, E)),      "bf2": b((L, 1, E)),
        "reg_w1": w((TRANSF_OUT, TRANSF_OUT)), "reg_b1": b((1, TRANSF_OUT)),
        "reg_w2": w((TRANSF_OUT, 1)),          "reg_b2": b((1, 1)),
    }


def base_affinity_prediction(x, node_mask, pharm_x, params, graphs_per_step=64):
    """Forward pass: (mol graph, pharmacophore graph) -> affinity [B, 1]."""
    # TODO(synk): the pharmacophore graph is reduced by an unmasked mean over its nodes;
    # a padded (variable-P) pharmacophore batch would need its own validity mask here.
    pharm_cond = jnp.mean(pharm_x, axis=1)                      # (B, pharm_dim)
    _graph_emb, pred = encode_and_predict(x, node_mask, pharm_cond, params,
                                          graphs_per_step=graphs_per_step)
    return pred                                                  # (B, 1)


if __name__ == "__main__":
    B, N, P = 2, 16, 8
    NUM_NODE_DIM, NUM_EDGE_DIM, PHARMACOPHORE_DIM = 16, 4, 16
    # TODO(synk): NUM_EDGE_DIM (edge features) is unused by the dense-attention approximation.

    key = jax.random.PRNGKey(0)
    k_x, k_p, k_param = jax.random.split(key, 3)

    x = jax.random.normal(k_x, (B, N, NUM_NODE_DIM), jnp.float32)
    n_nodes = jnp.array([16, 12], jnp.int32)                    # graph 1 has 4 padded nodes
    node_mask = (jnp.arange(N)[None, :] < n_nodes[:, None]).astype(jnp.float32)
    pharm_x = jax.random.normal(k_p, (B, P, PHARMACOPHORE_DIM), jnp.float32)

    params = init_params(k_param, NUM_NODE_DIM, PHARMACOPHORE_DIM)

    pred = base_affinity_prediction(x, node_mask, pharm_x, params)
    pred = jax.block_until_ready(pred)
    assert pred.shape == (B, 1) and pred.dtype == jnp.float32
    assert bool(jnp.all(jnp.isfinite(pred)))
    print("KERNEL_OK")
</pallas_src>

<mosaic_0001>
module attributes {stable_mosaic.version = 11 : i64} {
  func.func @_fused_kernel(%arg0: i32, %arg1: memref<2x24x16xf32, #tpu.memory_space<vmem>>, %arg2: memref<2x24xf32, #tpu.memory_space<vmem>>, %arg3: memref<2x16xf32, #tpu.memory_space<vmem>>, %arg4: memref<16x64xbf16, #tpu.memory_space<vmem>>, %arg5: memref<1x64xf32, #tpu.memory_space<vmem>>, %arg6: memref<64x64xbf16, #tpu.memory_space<vmem>>, %arg7: memref<1x64xf32, #tpu.memory_space<vmem>>, %arg8: memref<16x64xbf16, #tpu.memory_space<vmem>>, %arg9: memref<1x64xf32, #tpu.memory_space<vmem>>, %arg10: memref<64x64xbf16, #tpu.memory_space<vmem>>, %arg11: memref<1x64xf32, #tpu.memory_space<vmem>>, %arg12: memref<3x4x64xf32, #tpu.memory_space<vmem>>, %arg13: memref<3x64x192xbf16, #tpu.memory_space<vmem>>, %arg14: memref<3x1x192xf32, #tpu.memory_space<vmem>>, %arg15: memref<3x64x64xbf16, #tpu.memory_space<vmem>>, %arg16: memref<3x1x64xf32, #tpu.memory_space<vmem>>, %arg17: memref<3x64x256xbf16, #tpu.memory_space<vmem>>, %arg18: memref<3x1x256xf32, #tpu.memory_space<vmem>>, %arg19: memref<3x256x64xbf16, #tpu.memory_space<vmem>>, %arg20: memref<3x1x64xf32, #tpu.memory_space<vmem>>, %arg21: memref<128x128xbf16, #tpu.memory_space<vmem>>, %arg22: memref<1x128xf32, #tpu.memory_space<vmem>>, %arg23: memref<128x1xbf16, #tpu.memory_space<vmem>>, %arg24: memref<1x1xf32, #tpu.memory_space<vmem>>, %arg25: memref<2x256xf32, #tpu.memory_space<vmem>>) attributes {dimension_semantics = [#tpu.dimension_semantics<parallel>], iteration_bounds = array<i64: 1>, scalar_prefetch = 0 : i64, scratch_operands = 0 : i64, tpu.core_type = #tpu.core_type<tc>, window_params = [{transform_indices = @transform_0, window_bounds = array<i64: 2, 24, 16>}, {transform_indices = @transform_1, window_bounds = array<i64: 2, 24>}, {transform_indices = @transform_2, window_bounds = array<i64: 2, 16>}, {pipeline_mode = #tpu.pipeline_mode<synchronous>, transform_indices = @transform_3, window_bounds = array<i64: 16, 64>}, {pipeline_mode = #tpu.pipeline_mode<synchronous>, transform_indices = @transform_4, window_bounds = array<i64: 1, 64>}, {pipeline_mode = #tpu.pipeline_mode<synchronous>, transform_indices = @transform_5, window_bounds = array<i64: 64, 64>}, {pipeline_mode = #tpu.pipeline_mode<synchronous>, transform_indices = @transform_6, window_bounds = array<i64: 1, 64>}, {pipeline_mode = #tpu.pipeline_mode<synchronous>, transform_indices = @transform_7, window_bounds = array<i64: 16, 64>}, {pipeline_mode = #tpu.pipeline_mode<synchronous>, transform_indices = @transform_8, window_bounds = array<i64: 1, 64>}, {pipeline_mode = #tpu.pipeline_mode<synchronous>, transform_indices = @transform_9, window_bounds = array<i64: 64, 64>}, {pipeline_mode = #tpu.pipeline_mode<synchronous>, transform_indices = @transform_10, window_bounds = array<i64: 1, 64>}, {pipeline_mode = #tpu.pipeline_mode<synchronous>, transform_indices = @transform_11, window_bounds = array<i64: 3, 4, 64>}, {pipeline_mode = #tpu.pipeline_mode<synchronous>, transform_indices = @transform_12, window_bounds = array<i64: 3, 64, 192>}, {pipeline_mode = #tpu.pipeline_mode<synchronous>, transform_indices = @transform_13, window_bounds = array<i64: 3, 1, 192>}, {pipeline_mode = #tpu.pipeline_mode<synchronous>, transform_indices = @transform_14, window_bounds = array<i64: 3, 64, 64>}, {pipeline_mode = #tpu.pipeline_mode<synchronous>, transform_indices = @transform_15, window_bounds = array<i64: 3, 1, 64>}, {pipeline_mode = #tpu.pipeline_mode<synchronous>, transform_indices = @transform_16, window_bounds = array<i64: 3, 64, 256>}, {pipeline_mode = #tpu.pipeline_mode<synchronous>, transform_indices = @transform_17, window_bounds = array<i64: 3, 1, 256>}, {pipeline_mode = #tpu.pipeline_mode<synchronous>, transform_indices = @transform_18, window_bounds = array<i64: 3, 256, 64>}, {pipeline_mode = #tpu.pipeline_mode<synchronous>, transform_indices = @transform_19, window_bounds = array<i64: 3, 1, 64>}, {pipeline_mode = #tpu.pipeline_mode<synchronous>, transform_indices = @transform_20, window_bounds = array<i64: 128, 128>}, {pipeline_mode = #tpu.pipeline_mode<synchronous>, transform_indices = @transform_21, window_bounds = array<i64: 1, 128>}, {pipeline_mode = #tpu.pipeline_mode<synchronous>, transform_indices = @transform_22, window_bounds = array<i64: 128, 1>}, {pipeline_mode = #tpu.pipeline_mode<synchronous>, transform_indices = @transform_23, window_bounds = array<i64: 1, 1>}, {transform_indices = @transform_24, window_bounds = array<i64: 2, 256>}]} {
    %c0 = arith.constant 0 : index
    %c0_0 = arith.constant 0 : index
    %0 = vector.load %arg2[%c0, %c0_0] : memref<2x24xf32, #tpu.memory_space<vmem>>, vector<2x24xf32>
    %1 = tpu.iota {dimensions = array<i32: 1>} : vector<2x24xi32>
    %c16_i32 = arith.constant 16 : i32
    %2 = vector.broadcast %c16_i32 : i32 to vector<2x24xi32>
    %3 = arith.cmpi eq, %1, %2 : vector<2x24xi32>
    %4 = arith.extui %3 : vector<2x24xi1> to vector<2x24xi32>
    %5 = arith.sitofp %4 : vector<2x24xi32> to vector<2x24xf32>
    %6 = arith.maximumf %0, %5 : vector<2x24xf32>
    %cst = arith.constant 1.000000e+00 : f32
    %7 = vector.broadcast %cst : f32 to vector<2x24xf32>
    %8 = arith.subf %6, %7 : vector<2x24xf32>
    %cst_1 = arith.constant 1.000000e+30 : f32
    %9 = vector.broadcast %cst_1 : f32 to vector<2x24xf32>
    %10 = arith.mulf %8, %9 : vector<2x24xf32>
    %11 = vector.shape_cast %10 : vector<2x24xf32> to vector<2x1x24xf32>
    %c0_2 = arith.constant 0 : index
    %c0_3 = arith.constant 0 : index
    %c0_4 = arith.constant 0 : index
    %12 = vector.load %arg1[%c0_2, %c0_3, %c0_4] : memref<2x24x16xf32, #tpu.memory_space<vmem>>, vector<2x24x16xf32>
    %13 = vector.shape_cast %12 : vector<2x24x16xf32> to vector<48x16xf32>
    %c0_5 = arith.constant 0 : index
    %c0_6 = arith.constant 0 : index
    %14 = vector.load %arg4[%c0_5, %c0_6] : memref<16x64xbf16, #tpu.memory_space<vmem>>, vector<16x64xbf16>
    %15 = arith.truncf %13 : vector<48x16xf32> to vector<48x16xbf16>
    %cst_7 = arith.constant dense<0.000000e+00> : vector<48x64xf32>
    %16 = tpu.matmul %15, %14, %cst_7 {dimension_numbers = #tpu.dot_dimension_numbers<[1], [0], [0], [1], [0, 0, 1, 1], [], []>} : vector<48x16xbf16>, vector<16x64xbf16>, vector<48x64xf32> -> vector<48x64xf32>
    %c0_8 = arith.constant 0 : index
    %c0_9 = arith.constant 0 : index
    %17 = vector.load %arg5[%c0_8, %c0_9] : memref<1x64xf32, #tpu.memory_space<vmem>>, vector<1x64xf32>
    %18 = vector.broadcast %17 : vector<1x64xf32> to vector<48x64xf32>
    %19 = arith.addf %16, %18 : vector<48x64xf32>
    %cst_10 = arith.constant 0.000000e+00 : f32
    %20 = vector.broadcast %cst_10 : f32 to vector<48x64xf32>
    %21 = arith.maximumf %19, %20 : vector<48x64xf32>
    %c0_11 = arith.constant 0 : index
    %c0_12 = arith.constant 0 : index
    %22 = vector.load %arg6[%c0_11, %c0_12] : memref<64x64xbf16, #tpu.memory_space<vmem>>, vector<64x64xbf16>
    %23 = arith.truncf %21 : vector<48x64xf32> to vector<48x64xbf16>
    %cst_13 = arith.constant dense<0.000000e+00> : vector<48x64xf32>
    %24 = tpu.matmul %23, %22, %cst_13 {dimension_numbers = #tpu.dot_dimension_numbers<[1], [0], [0], [1], [0, 0, 1, 1], [], []>} : vector<48x64xbf16>, vector<64x64xbf16>, vector<48x64xf32> -> vector<48x64xf32>
    %c0_14 = arith.constant 0 : index
    %c0_15 = arith.constant 0 : index
    %25 = vector.load %arg7[%c0_14, %c0_15] : memref<1x64xf32, #tpu.memory_space<vmem>>, vector<1x64xf32>
    %26 = vector.broadcast %25 : vector<1x64xf32> to vector<48x64xf32>
    %27 = arith.addf %24, %26 : vector<48x64xf32>
    %c0_16 = arith.constant 0 : index
    %c0_17 = arith.constant 0 : index
    %28 = vector.load %arg3[%c0_16, %c0_17] : memref<2x16xf32, #tpu.memory_space<vmem>>, vector<2x16xf32>
    %c0_18 = arith.constant 0 : index
    %c0_19 = arith.constant 0 : index
    %29 = vector.load %arg8[%c0_18, %c0_19] : memref<16x64xbf16, #tpu.memory_space<vmem>>, vector<16x64xbf16>
    %30 = arith.truncf %28 : vector<2x16xf32> to vector<2x16xbf16>
    %cst_20 = arith.constant dense<0.000000e+00> : vector<2x64xf32>
    %31 = tpu.matmul %30, %29, %cst_20 {dimension_numbers = #tpu.dot_dimension_numbers<[1], [0], [0], [1], [0, 0, 1, 1], [], []>} : vector<2x16xbf16>, vector<16x64xbf16>, vector<2x64xf32> -> vector<2x64xf32>
    %c0_21 = arith.constant 0 : index
    %c0_22 = arith.constant 0 : index
    %32 = vector.load %arg9[%c0_21, %c0_22] : memref<1x64xf32, #tpu.memory_space<vmem>>, vector<1x64xf32>
    %33 = vector.broadcast %32 : vector<1x64xf32> to vector<2x64xf32>
    %34 = arith.addf %31, %33 : vector<2x64xf32>
    %cst_23 = arith.constant 0.000000e+00 : f32
    %35 = vector.broadcast %cst_23 : f32 to vector<2x64xf32>
    %36 = arith.maximumf %34, %35 : vector<2x64xf32>
    %c0_24 = arith.constant 0 : index
    %c0_25 = arith.constant 0 : index
    %37 = vector.load %arg10[%c0_24, %c0_25] : memref<64x64xbf16, #tpu.memory_space<vmem>>, vector<64x64xbf16>
    %38 = arith.truncf %36 : vector<2x64xf32> to vector<2x64xbf16>
    %cst_26 = arith.constant dense<0.000000e+00> : vector<2x64xf32>
    %39 = tpu.matmul %38, %37, %cst_26 {dimension_numbers = #tpu.dot_dimension_numbers<[1], [0], [0], [1], [0, 0, 1, 1], [], []>} : vector<2x64xbf16>, vector<64x64xbf16>, vector<2x64xf32> -> vector<2x64xf32>
    %c0_27 = arith.constant 0 : index
    %c0_28 = arith.constant 0 : index
    %40 = vector.load %arg11[%c0_27, %c0_28] : memref<1x64xf32, #tpu.memory_space<vmem>>, vector<1x64xf32>
    %41 = vector.broadcast %40 : vector<1x64xf32> to vector<2x64xf32>
    %42 = arith.addf %39, %41 : vector<2x64xf32>
    %43 = tpu.iota {dimensions = array<i32: 1>} : vector<2x24x1xi32>
    %c16_i32_29 = arith.constant 16 : i32
    %44 = vector.broadcast %c16_i32_29 : i32 to vector<2x24x1xi32>
    %45 = arith.cmpi eq, %43, %44 : vector<2x24x1xi32>
    %46 = arith.extui %45 : vector<2x24x1xi1> to vector<2x24x1xi32>
    %47 = arith.sitofp %46 : vector<2x24x1xi32> to vector<2x24x1xf32>
    %48 = vector.shape_cast %27 : vector<48x64xf32> to vector<2x24x64xf32>
    %cst_30 = arith.constant 1.000000e+00 : f32
    %49 = vector.broadcast %cst_30 : f32 to vector<2x24x1xf32>
    %50 = arith.subf %49, %47 : vector<2x24x1xf32>
    %51 = vector.broadcast %50 : vector<2x24x1xf32> to vector<2x24x64xf32>
    %52 = arith.mulf %48, %51 : vector<2x24x64xf32>
    %53 = vector.shape_cast %42 : vector<2x64xf32> to vector<2x1x64xf32>
    %54 = vector.broadcast %53 : vector<2x1x64xf32> to vector<2x24x64xf32>
    %55 = vector.broadcast %47 : vector<2x24x1xf32> to vector<2x24x64xf32>
    %56 = arith.mulf %54, %55 : vector<2x24x64xf32>
    %57 = arith.addf %52, %56 : vector<2x24x64xf32>
    %58 = vector.shape_cast %57 : vector<2x24x64xf32> to vector<48x64xf32>
    %c0_31 = arith.constant 0 : index
    %c0_32 = arith.constant 0 : index
    %c0_33 = arith.constant 0 : index
    %59 = vector.load %arg12[%c0_31, %c0_32, %c0_33] : memref<3x4x64xf32, #tpu.memory_space<vmem>>, vector<1x4x64xf32>
    %60 = vector.shape_cast %59 : vector<1x4x64xf32> to vector<4x64xf32>
    %61 = vector.extract_strided_slice %60 {offsets = [0, 0], sizes = [1, 64], strides = [1, 1]} : vector<4x64xf32> to vector<1x64xf32>
    %62 = vector.extract_strided_slice %60 {offsets = [1, 0], sizes = [1, 64], strides = [1, 1]} : vector<4x64xf32> to vector<1x64xf32>
    %cst_34 = arith.constant dense<0.000000e+00> : vector<48xf32>
    %63 = vector.multi_reduction <add>, %58, %cst_34 [1] : vector<48x64xf32> to vector<48xf32>
    %64 = vector.shape_cast %63 : vector<48xf32> to vector<48x1xf32>
    %cst_35 = arith.constant 6.400000e+01 : f32
    %65 = vector.broadcast %cst_35 : f32 to vector<48x1xf32>
    %66 = arith.divf %64, %65 : vector<48x1xf32>
    %67 = vector.broadcast %66 : vector<48x1xf32> to vector<48x64xf32>
    %68 = arith.subf %58, %67 : vector<48x64xf32>
    %69 = arith.mulf %68, %68 : vector<48x64xf32>
    %cst_36 = arith.constant dense<0.000000e+00> : vector<48xf32>
    %70 = vector.multi_reduction <add>, %69, %cst_36 [1] : vector<48x64xf32> to vector<48xf32>
    %71 = vector.shape_cast %70 : vector<48xf32> to vector<48x1xf32>
    %cst_37 = arith.constant 6.400000e+01 : f32
    %72 = vector.broadcast %cst_37 : f32 to vector<48x1xf32>
    %73 = arith.divf %71, %72 : vector<48x1xf32>
    %74 = vector.broadcast %66 : vector<48x1xf32> to vector<48x64xf32>
    %75 = arith.subf %58, %74 : vector<48x64xf32>
    %cst_38 = arith.constant 9.99999974E-6 : f32
    %76 = vector.broadcast %cst_38 : f32 to vector<48x1xf32>
    %77 = arith.addf %73, %76 : vector<48x1xf32>
    %78 = math.rsqrt %77 : vector<48x1xf32>
    %79 = vector.broadcast %78 : vector<48x1xf32> to vector<48x64xf32>
    %80 = arith.mulf %75, %79 : vector<48x64xf32>
    %81 = vector.broadcast %61 : vector<1x64xf32> to vector<48x64xf32>
    %82 = arith.mulf %80, %81 : vector<48x64xf32>
    %83 = vector.broadcast %62 : vector<1x64xf32> to vector<48x64xf32>
    %84 = arith.addf %82, %83 : vector<48x64xf32>
    %c0_39 = arith.constant 0 : index
    %c0_40 = arith.constant 0 : index
    %c0_41 = arith.constant 0 : index
    %85 = vector.load %arg13[%c0_39, %c0_40, %c0_41] : memref<3x64x192xbf16, #tpu.memory_space<vmem>>, vector<1x64x192xbf16>
    %86 = vector.shape_cast %85 : vector<1x64x192xbf16> to vector<64x192xbf16>
    %87 = arith.truncf %84 : vector<48x64xf32> to vector<48x64xbf16>
    %cst_42 = arith.constant dense<0.000000e+00> : vector<48x192xf32>
    %88 = tpu.matmul %87, %86, %cst_42 {dimension_numbers = #tpu.dot_dimension_numbers<[1], [0], [0], [1], [0, 0, 1, 1], [], []>} : vector<48x64xbf16>, vector<64x192xbf16>, vector<48x192xf32> -> vector<48x192xf32>
    %c0_43 = arith.constant 0 : index
    %c0_44 = arith.constant 0 : index
    %c0_45 = arith.constant 0 : index
    %89 = vector.load %arg14[%c0_43, %c0_44, %c0_45] : memref<3x1x192xf32, #tpu.memory_space<vmem>>, vector<1x1x192xf32>
    %90 = vector.shape_cast %89 : vector<1x1x192xf32> to vector<1x192xf32>
    %91 = vector.broadcast %90 : vector<1x192xf32> to vector<48x192xf32>
    %92 = arith.addf %88, %91 : vector<48x192xf32>
    %93 = vector.extract_strided_slice %92 {offsets = [0, 0], sizes = [48, 32], strides = [1, 1]} : vector<48x192xf32> to vector<48x32xf32>
    %94 = vector.shape_cast %93 : vector<48x32xf32> to vector<2x24x32xf32>
    %95 = arith.truncf %94 : vector<2x24x32xf32> to vector<2x24x32xbf16>
    %96 = vector.extract_strided_slice %92 {offsets = [0, 64], sizes = [48, 32], strides = [1, 1]} : vector<48x192xf32> to vector<48x32xf32>
    %97 = vector.shape_cast %96 : vector<48x32xf32> to vector<2x24x32xf32>
    %98 = arith.truncf %97 : vector<2x24x32xf32> to vector<2x24x32xbf16>
    %99 = vector.extract_strided_slice %92 {offsets = [0, 128], sizes = [48, 32], strides = [1, 1]} : vector<48x192xf32> to vector<48x32xf32>
    %100 = vector.shape_cast %99 : vector<48x32xf32> to vector<2x24x32xf32>
    %101 = arith.truncf %100 : vector<2x24x32xf32> to vector<2x24x32xbf16>
    "tpu.trace_start"() <{level = 10 : i32, message = "gqd,gkd->gqk"}> : () -> ()
    %cst_46 = arith.constant dense<0.000000e+00> : vector<2x24x24xf32>
    %102 = tpu.matmul %95, %98, %cst_46 {dimension_numbers = #tpu.dot_dimension_numbers<[2], [2], [1], [1], [0, 0, 0, 1, 1, 1], [0], [0]>} : vector<2x24x32xbf16>, vector<2x24x32xbf16>, vector<2x24x24xf32> -> vector<2x24x24xf32>
    "tpu.trace_stop"() : () -> ()
    %cst_47 = arith.constant 0.176776692 : f32
    %103 = vector.broadcast %cst_47 : f32 to vector<2x24x24xf32>
    %104 = arith.mulf %102, %103 : vector<2x24x24xf32>
    %105 = vector.broadcast %11 : vector<2x1x24xf32> to vector<2x24x24xf32>
    %106 = arith.addf %104, %105 : vector<2x24x24xf32>
    %cst_48 = arith.constant dense<0xFF800000> : vector<2x24xf32>
    %107 = vector.multi_reduction <maximumf>, %106, %cst_48 [2] : vector<2x24x24xf32> to vector<2x24xf32>
    %108 = vector.shape_cast %107 : vector<2x24xf32> to vector<2x24x1xf32>
    %109 = vector.broadcast %108 : vector<2x24x1xf32> to vector<2x24x24xf32>
    %110 = arith.subf %106, %109 : vector<2x24x24xf32>
    %111 = math.exp %110 : vector<2x24x24xf32>
    %cst_49 = arith.constant dense<0.000000e+00> : vector<2x24xf32>
    %112 = vector.multi_reduction <add>, %111, %cst_49 [2] : vector<2x24x24xf32> to vector<2x24xf32>
    %113 = vector.shape_cast %112 : vector<2x24xf32> to vector<2x24x1xf32>
    %114 = tpu.reciprocal %113 {approx = true} : vector<2x24x1xf32> -> vector<2x24x1xf32>
    %115 = vector.broadcast %114 : vector<2x24x1xf32> to vector<2x24x24xf32>
    %116 = arith.mulf %111, %115 : vector<2x24x24xf32>
    %117 = arith.truncf %116 : vector<2x24x24xf32> to vector<2x24x24xbf16>
    "tpu.trace_start"() <{level = 10 : i32, message = "gqk,gkd->gqd"}> : () -> ()
    %cst_50 = arith.constant dense<0.000000e+00> : vector<2x24x32xf32>
    %118 = tpu.matmul %117, %101, %cst_50 {dimension_numbers = #tpu.dot_dimension_numbers<[2], [1], [1], [2], [0, 0, 0, 1, 1, 2], [0], [0]>} : vector<2x24x24xbf16>, vector<2x24x32xbf16>, vector<2x24x32xf32> -> vector<2x24x32xf32>
    "tpu.trace_stop"() : () -> ()
    %119 = vector.shape_cast %118 : vector<2x24x32xf32> to vector<48x32xf32>
    %120 = vector.extract_strided_slice %92 {offsets = [0, 32], sizes = [48, 32], strides = [1, 1]} : vector<48x192xf32> to vector<48x32xf32>
    %121 = vector.shape_cast %120 : vector<48x32xf32> to vector<2x24x32xf32>
    %122 = arith.truncf %121 : vector<2x24x32xf32> to vector<2x24x32xbf16>
    %123 = vector.extract_strided_slice %92 {offsets = [0, 96], sizes = [48, 32], strides = [1, 1]} : vector<48x192xf32> to vector<48x32xf32>
    %124 = vector.shape_cast %123 : vector<48x32xf32> to vector<2x24x32xf32>
    %125 = arith.truncf %124 : vector<2x24x32xf32> to vector<2x24x32xbf16>
    %126 = vector.extract_strided_slice %92 {offsets = [0, 160], sizes = [48, 32], strides = [1, 1]} : vector<48x192xf32> to vector<48x32xf32>
    %127 = vector.shape_cast %126 : vector<48x32xf32> to vector<2x24x32xf32>
    %128 = arith.truncf %127 : vector<2x24x32xf32> to vector<2x24x32xbf16>
    "tpu.trace_start"() <{level = 10 : i32, message = "gqd,gkd->gqk"}> : () -> ()
    %cst_51 = arith.constant dense<0.000000e+00> : vector<2x24x24xf32>
    %129 = tpu.matmul %122, %125, %cst_51 {dimension_numbers = #tpu.dot_dimension_numbers<[2], [2], [1], [1], [0, 0, 0, 1, 1, 1], [0], [0]>} : vector<2x24x32xbf16>, vector<2x24x32xbf16>, vector<2x24x24xf32> -> vector<2x24x24xf32>
    "tpu.trace_stop"() : () -> ()
    %cst_52 = arith.constant 0.176776692 : f32
    %130 = vector.broadcast %cst_52 : f32 to vector<2x24x24xf32>
    %131 = arith.mulf %129, %130 : vector<2x24x24xf32>
    %132 = vector.broadcast %11 : vector<2x1x24xf32> to vector<2x24x24xf32>
    %133 = arith.addf %131, %132 : vector<2x24x24xf32>
    %cst_53 = arith.constant dense<0xFF800000> : vector<2x24xf32>
    %134 = vector.multi_reduction <maximumf>, %133, %cst_53 [2] : vector<2x24x24xf32> to vector<2x24xf32>
    %135 = vector.shape_cast %134 : vector<2x24xf32> to vector<2x24x1xf32>
    %136 = vector.broadcast %135 : vector<2x24x1xf32> to vector<2x24x24xf32>
    %137 = arith.subf %133, %136 : vector<2x24x24xf32>
    %138 = math.exp %137 : vector<2x24x24xf32>
    %cst_54 = arith.constant dense<0.000000e+00> : vector<2x24xf32>
    %139 = vector.multi_reduction <add>, %138, %cst_54 [2] : vector<2x24x24xf32> to vector<2x24xf32>
    %140 = vector.shape_cast %139 : vector<2x24xf32> to vector<2x24x1xf32>
    %141 = tpu.reciprocal %140 {approx = true} : vector<2x24x1xf32> -> vector<2x24x1xf32>
    %142 = vector.broadcast %141 : vector<2x24x1xf32> to vector<2x24x24xf32>
    %143 = arith.mulf %138, %142 : vector<2x24x24xf32>
    %144 = arith.truncf %143 : vector<2x24x24xf32> to vector<2x24x24xbf16>
    "tpu.trace_start"() <{level = 10 : i32, message = "gqk,gkd->gqd"}> : () -> ()
    %cst_55 = arith.constant dense<0.000000e+00> : vector<2x24x32xf32>
    %145 = tpu.matmul %144, %128, %cst_55 {dimension_numbers = #tpu.dot_dimension_numbers<[2], [1], [1], [2], [0, 0, 0, 1, 1, 2], [0], [0]>} : vector<2x24x24xbf16>, vector<2x24x32xbf16>, vector<2x24x32xf32> -> vector<2x24x32xf32>
    "tpu.trace_stop"() : () -> ()
    %146 = vector.shape_cast %145 : vector<2x24x32xf32> to vector<48x32xf32>
    %147 = tpu.concatenate %119, %146 in 1 : vector<48x32xf32>, vector<48x32xf32> -> vector<48x64xf32>
    %c0_56 = arith.constant 0 : index
    %c0_57 = arith.constant 0 : index
    %c0_58 = arith.constant 0 : index
    %148 = vector.load %arg15[%c0_56, %c0_57, %c0_58] : memref<3x64x64xbf16, #tpu.memory_space<vmem>>, vector<1x64x64xbf16>
    %149 = vector.shape_cast %148 : vector<1x64x64xbf16> to vector<64x64xbf16>
    %150 = arith.truncf %147 : vector<48x64xf32> to vector<48x64xbf16>
    %cst_59 = arith.constant dense<0.000000e+00> : vector<48x64xf32>
    %151 = tpu.matmul %150, %149, %cst_59 {dimension_numbers = #tpu.dot_dimension_numbers<[1], [0], [0], [1], [0, 0, 1, 1], [], []>} : vector<48x64xbf16>, vector<64x64xbf16>, vector<48x64xf32> -> vector<48x64xf32>
    %152 = arith.addf %58, %151 : vector<48x64xf32>
    %c0_60 = arith.constant 0 : index
    %c0_61 = arith.constant 0 : index
    %c0_62 = arith.constant 0 : index
    %153 = vector.load %arg16[%c0_60, %c0_61, %c0_62] : memref<3x1x64xf32, #tpu.memory_space<vmem>>, vector<1x1x64xf32>
    %154 = vector.shape_cast %153 : vector<1x1x64xf32> to vector<1x64xf32>
    %155 = vector.broadcast %154 : vector<1x64xf32> to vector<48x64xf32>
    %156 = arith.addf %152, %155 : vector<48x64xf32>
    %157 = vector.extract_strided_slice %60 {offsets = [2, 0], sizes = [1, 64], strides = [1, 1]} : vector<4x64xf32> to vector<1x64xf32>
    %158 = vector.extract_strided_slice %60 {offsets = [3, 0], sizes = [1, 64], strides = [1, 1]} : vector<4x64xf32> to vector<1x64xf32>
    %cst_63 = arith.constant dense<0.000000e+00> : vector<48xf32>
    %159 = vector.multi_reduction <add>, %156, %cst_63 [1] : vector<48x64xf32> to vector<48xf32>
    %160 = vector.shape_cast %159 : vector<48xf32> to vector<48x1xf32>
    %cst_64 = arith.constant 6.400000e+01 : f32
    %161 = vector.broadcast %cst_64 : f32 to vector<48x1xf32>
    %162 = arith.divf %160, %161 : vector<48x1xf32>
    %163 = vector.broadcast %162 : vector<48x1xf32> to vector<48x64xf32>
    %164 = arith.subf %156, %163 : vector<48x64xf32>
    %165 = arith.mulf %164, %164 : vector<48x64xf32>
    %cst_65 = arith.constant dense<0.000000e+00> : vector<48xf32>
    %166 = vector.multi_reduction <add>, %165, %cst_65 [1] : vector<48x64xf32> to vector<48xf32>
    %167 = vector.shape_cast %166 : vector<48xf32> to vector<48x1xf32>
    %cst_66 = arith.constant 6.400000e+01 : f32
    %168 = vector.broadcast %cst_66 : f32 to vector<48x1xf32>
    %169 = arith.divf %167, %168 : vector<48x1xf32>
    %170 = vector.broadcast %162 : vector<48x1xf32> to vector<48x64xf32>
    %171 = arith.subf %156, %170 : vector<48x64xf32>
    %cst_67 = arith.constant 9.99999974E-6 : f32
    %172 = vector.broadcast %cst_67 : f32 to vector<48x1xf32>
    %173 = arith.addf %169, %172 : vector<48x1xf32>
    %174 = math.rsqrt %173 : vector<48x1xf32>
    %175 = vector.broadcast %174 : vector<48x1xf32> to vector<48x64xf32>
    %176 = arith.mulf %171, %175 : vector<48x64xf32>
    %177 = vector.broadcast %157 : vector<1x64xf32> to vector<48x64xf32>
    %178 = arith.mulf %176, %177 : vector<48x64xf32>
    %179 = vector.broadcast %158 : vector<1x64xf32> to vector<48x64xf32>
    %180 = arith.addf %178, %179 : vector<48x64xf32>
    %c0_68 = arith.constant 0 : index
    %c0_69 = arith.constant 0 : index
    %c0_70 = arith.constant 0 : index
    %181 = vector.load %arg17[%c0_68, %c0_69, %c0_70] : memref<3x64x256xbf16, #tpu.memory_space<vmem>>, vector<1x64x256xbf16>
    %182 = vector.shape_cast %181 : vector<1x64x256xbf16> to vector<64x256xbf16>
    %183 = arith.truncf %180 : vector<48x64xf32> to vector<48x64xbf16>
    %cst_71 = arith.constant dense<0.000000e+00> : vector<48x256xf32>
    %184 = tpu.matmul %183, %182, %cst_71 {dimension_numbers = #tpu.dot_dimension_numbers<[1], [0], [0], [1], [0, 0, 1, 1], [], []>} : vector<48x64xbf16>, vector<64x256xbf16>, vector<48x256xf32> -> vector<48x256xf32>
    %c0_72 = arith.constant 0 : index
    %c0_73 = arith.constant 0 : index
    %c0_74 = arith.constant 0 : index
    %185 = vector.load %arg18[%c0_72, %c0_73, %c0_74] : memref<3x1x256xf32, #tpu.memory_space<vmem>>, vector<1x1x256xf32>
    %186 = vector.shape_cast %185 : vector<1x1x256xf32> to vector<1x256xf32>
    %187 = vector.broadcast %186 : vector<1x256xf32> to vector<48x256xf32>
    %188 = arith.addf %184, %187 : vector<48x256xf32>
    %cst_75 = arith.constant 0.000000e+00 : f32
    %189 = vector.broadcast %cst_75 : f32 to vector<48x256xf32>
    %190 = arith.maximumf %188, %189 : vector<48x256xf32>
    %c0_76 = arith.constant 0 : index
    %c0_77 = arith.constant 0 : index
    %c0_78 = arith.constant 0 : index
    %191 = vector.load %arg19[%c0_76, %c0_77, %c0_78] : memref<3x256x64xbf16, #tpu.memory_space<vmem>>, vector<1x256x64xbf16>
    %192 = vector.shape_cast %191 : vector<1x256x64xbf16> to vector<256x64xbf16>
    %193 = arith.truncf %190 : vector<48x256xf32> to vector<48x256xbf16>
    %cst_79 = arith.constant dense<0.000000e+00> : vector<48x64xf32>
    %194 = tpu.matmul %193, %192, %cst_79 {dimension_numbers = #tpu.dot_dimension_numbers<[1], [0], [0], [1], [0, 0, 1, 1], [], []>} : vector<48x256xbf16>, vector<256x64xbf16>, vector<48x64xf32> -> vector<48x64xf32>
    %195 = arith.addf %156, %194 : vector<48x64xf32>
    %c0_80 = arith.constant 0 : index
    %c0_81 = arith.constant 0 : index
    %c0_82 = arith.constant 0 : index
    %196 = vector.load %arg20[%c0_80, %c0_81, %c0_82] : memref<3x1x64xf32, #tpu.memory_space<vmem>>, vector<1x1x64xf32>
    %197 = vector.shape_cast %196 : vector<1x1x64xf32> to vector<1x64xf32>
    %198 = vector.broadcast %197 : vector<1x64xf32> to vector<48x64xf32>
    %199 = arith.addf %195, %198 : vector<48x64xf32>
    %c1 = arith.constant 1 : index
    %c0_83 = arith.constant 0 : index
    %c0_84 = arith.constant 0 : index
    %200 = vector.load %arg12[%c1, %c0_83, %c0_84] : memref<3x4x64xf32, #tpu.memory_space<vmem>>, vector<1x4x64xf32>
    %201 = vector.shape_cast %200 : vector<1x4x64xf32> to vector<4x64xf32>
    %202 = vector.extract_strided_slice %201 {offsets = [0, 0], sizes = [1, 64], strides = [1, 1]} : vector<4x64xf32> to vector<1x64xf32>
    %203 = vector.extract_strided_slice %201 {offsets = [1, 0], sizes = [1, 64], strides = [1, 1]} : vector<4x64xf32> to vector<1x64xf32>
    %cst_85 = arith.constant dense<0.000000e+00> : vector<48xf32>
    %204 = vector.multi_reduction <add>, %199, %cst_85 [1] : vector<48x64xf32> to vector<48xf32>
    %205 = vector.shape_cast %204 : vector<48xf32> to vector<48x1xf32>
    %cst_86 = arith.constant 6.400000e+01 : f32
    %206 = vector.broadcast %cst_86 : f32 to vector<48x1xf32>
    %207 = arith.divf %205, %206 : vector<48x1xf32>
    %208 = vector.broadcast %207 : vector<48x1xf32> to vector<48x64xf32>
    %209 = arith.subf %199, %208 : vector<48x64xf32>
    %210 = arith.mulf %209, %209 : vector<48x64xf32>
    %cst_87 = arith.constant dense<0.000000e+00> : vector<48xf32>
    %211 = vector.multi_reduction <add>, %210, %cst_87 [1] : vector<48x64xf32> to vector<48xf32>
    %212 = vector.shape_cast %211 : vector<48xf32> to vector<48x1xf32>
    %cst_88 = arith.constant 6.400000e+01 : f32
    %213 = vector.broadcast %cst_88 : f32 to vector<48x1xf32>
    %214 = arith.divf %212, %213 : vector<48x1xf32>
    %215 = vector.broadcast %207 : vector<48x1xf32> to vector<48x64xf32>
    %216 = arith.subf %199, %215 : vector<48x64xf32>
    %cst_89 = arith.constant 9.99999974E-6 : f32
    %217 = vector.broadcast %cst_89 : f32 to vector<48x1xf32>
    %218 = arith.addf %214, %217 : vector<48x1xf32>
    %219 = math.rsqrt %218 : vector<48x1xf32>
    %220 = vector.broadcast %219 : vector<48x1xf32> to vector<48x64xf32>
    %221 = arith.mulf %216, %220 : vector<48x64xf32>
    %222 = vector.broadcast %202 : vector<1x64xf32> to vector<48x64xf32>
    %223 = arith.mulf %221, %222 : vector<48x64xf32>
    %224 = vector.broadcast %203 : vector<1x64xf32> to vector<48x64xf32>
    %225 = arith.addf %223, %224 : vector<48x64xf32>
    %c1_90 = arith.constant 1 : index
    %c0_91 = arith.constant 0 : index
    %c0_92 = arith.constant 0 : index
    %226 = vector.load %arg13[%c1_90, %c0_91, %c0_92] : memref<3x64x192xbf16, #tpu.memory_space<vmem>>, vector<1x64x192xbf16>
    %227 = vector.shape_cast %226 : vector<1x64x192xbf16> to vector<64x192xbf16>
    %228 = arith.truncf %225 : vector<48x64xf32> to vector<48x64xbf16>
    %cst_93 = arith.constant dense<0.000000e+00> : vector<48x192xf32>
    %229 = tpu.matmul %228, %227, %cst_93 {dimension_numbers = #tpu.dot_dimension_numbers<[1], [0], [0], [1], [0, 0, 1, 1], [], []>} : vector<48x64xbf16>, vector<64x192xbf16>, vector<48x192xf32> -> vector<48x192xf32>
    %c1_94 = arith.constant 1 : index
    %c0_95 = arith.constant 0 : index
    %c0_96 = arith.constant 0 : index
    %230 = vector.load %arg14[%c1_94, %c0_95, %c0_96] : memref<3x1x192xf32, #tpu.memory_space<vmem>>, vector<1x1x192xf32>
    %231 = vector.shape_cast %230 : vector<1x1x192xf32> to vector<1x192xf32>
    %232 = vector.broadcast %231 : vector<1x192xf32> to vector<48x192xf32>
    %233 = arith.addf %229, %232 : vector<48x192xf32>
    %234 = vector.extract_strided_slice %233 {offsets = [0, 0], sizes = [48, 32], strides = [1, 1]} : vector<48x192xf32> to vector<48x32xf32>
    %235 = vector.shape_cast %234 : vector<48x32xf32> to vector<2x24x32xf32>
    %236 = arith.truncf %235 : vector<2x24x32xf32> to vector<2x24x32xbf16>
    %237 = vector.extract_strided_slice %233 {offsets = [0, 64], sizes = [48, 32], strides = [1, 1]} : vector<48x192xf32> to vector<48x32xf32>
    %238 = vector.shape_cast %237 : vector<48x32xf32> to vector<2x24x32xf32>
    %239 = arith.truncf %238 : vector<2x24x32xf32> to vector<2x24x32xbf16>
    %240 = vector.extract_strided_slice %233 {offsets = [0, 128], sizes = [48, 32], strides = [1, 1]} : vector<48x192xf32> to vector<48x32xf32>
    %241 = vector.shape_cast %240 : vector<48x32xf32> to vector<2x24x32xf32>
    %242 = arith.truncf %241 : vector<2x24x32xf32> to vector<2x24x32xbf16>
    "tpu.trace_start"() <{level = 10 : i32, message = "gqd,gkd->gqk"}> : () -> ()
    %cst_97 = arith.constant dense<0.000000e+00> : vector<2x24x24xf32>
    %243 = tpu.matmul %236, %239, %cst_97 {dimension_numbers = #tpu.dot_dimension_numbers<[2], [2], [1], [1], [0, 0, 0, 1, 1, 1], [0], [0]>} : vector<2x24x32xbf16>, vector<2x24x32xbf16>, vector<2x24x24xf32> -> vector<2x24x24xf32>
    "tpu.trace_stop"() : () -> ()
    %cst_98 = arith.constant 0.176776692 : f32
    %244 = vector.broadcast %cst_98 : f32 to vector<2x24x24xf32>
    %245 = arith.mulf %243, %244 : vector<2x24x24xf32>
    %246 = vector.broadcast %11 : vector<2x1x24xf32> to vector<2x24x24xf32>
    %247 = arith.addf %245, %246 : vector<2x24x24xf32>
    %cst_99 = arith.constant dense<0xFF800000> : vector<2x24xf32>
    %248 = vector.multi_reduction <maximumf>, %247, %cst_99 [2] : vector<2x24x24xf32> to vector<2x24xf32>
    %249 = vector.shape_cast %248 : vector<2x24xf32> to vector<2x24x1xf32>
    %250 = vector.broadcast %249 : vector<2x24x1xf32> to vector<2x24x24xf32>
    %251 = arith.subf %247, %250 : vector<2x24x24xf32>
    %252 = math.exp %251 : vector<2x24x24xf32>
    %cst_100 = arith.constant dense<0.000000e+00> : vector<2x24xf32>
    %253 = vector.multi_reduction <add>, %252, %cst_100 [2] : vector<2x24x24xf32> to vector<2x24xf32>
    %254 = vector.shape_cast %253 : vector<2x24xf32> to vector<2x24x1xf32>
    %255 = tpu.reciprocal %254 {approx = true} : vector<2x24x1xf32> -> vector<2x24x1xf32>
    %256 = vector.broadcast %255 : vector<2x24x1xf32> to vector<2x24x24xf32>
    %257 = arith.mulf %252, %256 : vector<2x24x24xf32>
    %258 = arith.truncf %257 : vector<2x24x24xf32> to vector<2x24x24xbf16>
    "tpu.trace_start"() <{level = 10 : i32, message = "gqk,gkd->gqd"}> : () -> ()
    %cst_101 = arith.constant dense<0.000000e+00> : vector<2x24x32xf32>
    %259 = tpu.matmul %258, %242, %cst_101 {dimension_numbers = #tpu.dot_dimension_numbers<[2], [1], [1], [2], [0, 0, 0, 1, 1, 2], [0], [0]>} : vector<2x24x24xbf16>, vector<2x24x32xbf16>, vector<2x24x32xf32> -> vector<2x24x32xf32>
    "tpu.trace_stop"() : () -> ()
    %260 = vector.shape_cast %259 : vector<2x24x32xf32> to vector<48x32xf32>
    %261 = vector.extract_strided_slice %233 {offsets = [0, 32], sizes = [48, 32], strides = [1, 1]} : vector<48x192xf32> to vector<48x32xf32>
    %262 = vector.shape_cast %261 : vector<48x32xf32> to vector<2x24x32xf32>
    %263 = arith.truncf %262 : vector<2x24x32xf32> to vector<2x24x32xbf16>
    %264 = vector.extract_strided_slice %233 {offsets = [0, 96], sizes = [48, 32], strides = [1, 1]} : vector<48x192xf32> to vector<48x32xf32>
    %265 = vector.shape_cast %264 : vector<48x32xf32> to vector<2x24x32xf32>
    %266 = arith.truncf %265 : vector<2x24x32xf32> to vector<2x24x32xbf16>
    %267 = vector.extract_strided_slice %233 {offsets = [0, 160], sizes = [48, 32], strides = [1, 1]} : vector<48x192xf32> to vector<48x32xf32>
    %268 = vector.shape_cast %267 : vector<48x32xf32> to vector<2x24x32xf32>
    %269 = arith.truncf %268 : vector<2x24x32xf32> to vector<2x24x32xbf16>
    "tpu.trace_start"() <{level = 10 : i32, message = "gqd,gkd->gqk"}> : () -> ()
    %cst_102 = arith.constant dense<0.000000e+00> : vector<2x24x24xf32>
    %270 = tpu.matmul %263, %266, %cst_102 {dimension_numbers = #tpu.dot_dimension_numbers<[2], [2], [1], [1], [0, 0, 0, 1, 1, 1], [0], [0]>} : vector<2x24x32xbf16>, vector<2x24x32xbf16>, vector<2x24x24xf32> -> vector<2x24x24xf32>
    "tpu.trace_stop"() : () -> ()
    %cst_103 = arith.constant 0.176776692 : f32
    %271 = vector.broadcast %cst_103 : f32 to vector<2x24x24xf32>
    %272 = arith.mulf %270, %271 : vector<2x24x24xf32>
    %273 = vector.broadcast %11 : vector<2x1x24xf32> to vector<2x24x24xf32>
    %274 = arith.addf %272, %273 : vector<2x24x24xf32>
    %cst_104 = arith.constant dense<0xFF800000> : vector<2x24xf32>
    %275 = vector.multi_reduction <maximumf>, %274, %cst_104 [2] : vector<2x24x24xf32> to vector<2x24xf32>
    %276 = vector.shape_cast %275 : vector<2x24xf32> to vector<2x24x1xf32>
    %277 = vector.broadcast %276 : vector<2x24x1xf32> to vector<2x24x24xf32>
    %278 = arith.subf %274, %277 : vector<2x24x24xf32>
    %279 = math.exp %278 : vector<2x24x24xf32>
    %cst_105 = arith.constant dense<0.000000e+00> : vector<2x24xf32>
    %280 = vector.multi_reduction <add>, %279, %cst_105 [2] : vector<2x24x24xf32> to vector<2x24xf32>
    %281 = vector.shape_cast %280 : vector<2x24xf32> to vector<2x24x1xf32>
    %282 = tpu.reciprocal %281 {approx = true} : vector<2x24x1xf32> -> vector<2x24x1xf32>
    %283 = vector.broadcast %282 : vector<2x24x1xf32> to vector<2x24x24xf32>
    %284 = arith.mulf %279, %283 : vector<2x24x24xf32>
    %285 = arith.truncf %284 : vector<2x24x24xf32> to vector<2x24x24xbf16>
    "tpu.trace_start"() <{level = 10 : i32, message = "gqk,gkd->gqd"}> : () -> ()
    %cst_106 = arith.constant dense<0.000000e+00> : vector<2x24x32xf32>
    %286 = tpu.matmul %285, %269, %cst_106 {dimension_numbers = #tpu.dot_dimension_numbers<[2], [1], [1], [2], [0, 0, 0, 1, 1, 2], [0], [0]>} : vector<2x24x24xbf16>, vector<2x24x32xbf16>, vector<2x24x32xf32> -> vector<2x24x32xf32>
    "tpu.trace_stop"() : () -> ()
    %287 = vector.shape_cast %286 : vector<2x24x32xf32> to vector<48x32xf32>
    %288 = tpu.concatenate %260, %287 in 1 : vector<48x32xf32>, vector<48x32xf32> -> vector<48x64xf32>
    %c1_107 = arith.constant 1 : index
    %c0_108 = arith.constant 0 : index
    %c0_109 = arith.constant 0 : index
    %289 = vector.load %arg15[%c1_107, %c0_108, %c0_109] : memref<3x64x64xbf16, #tpu.memory_space<vmem>>, vector<1x64x64xbf16>
    %290 = vector.shape_cast %289 : vector<1x64x64xbf16> to vector<64x64xbf16>
    %291 = arith.truncf %288 : vector<48x64xf32> to vector<48x64xbf16>
    %cst_110 = arith.constant dense<0.000000e+00> : vector<48x64xf32>
    %292 = tpu.matmul %291, %290, %cst_110 {dimension_numbers = #tpu.dot_dimension_numbers<[1], [0], [0], [1], [0, 0, 1, 1], [], []>} : vector<48x64xbf16>, vector<64x64xbf16>, vector<48x64xf32> -> vector<48x64xf32>
    %293 = arith.addf %199, %292 : vector<48x64xf32>
    %c1_111 = arith.constant 1 : index
    %c0_112 = arith.constant 0 : index
    %c0_113 = arith.constant 0 : index
    %294 = vector.load %arg16[%c1_111, %c0_112, %c0_113] : memref<3x1x64xf32, #tpu.memory_space<vmem>>, vector<1x1x64xf32>
    %295 = vector.shape_cast %294 : vector<1x1x64xf32> to vector<1x64xf32>
    %296 = vector.broadcast %295 : vector<1x64xf32> to vector<48x64xf32>
    %297 = arith.addf %293, %296 : vector<48x64xf32>
    %298 = vector.extract_strided_slice %201 {offsets = [2, 0], sizes = [1, 64], strides = [1, 1]} : vector<4x64xf32> to vector<1x64xf32>
    %299 = vector.extract_strided_slice %201 {offsets = [3, 0], sizes = [1, 64], strides = [1, 1]} : vector<4x64xf32> to vector<1x64xf32>
    %cst_114 = arith.constant dense<0.000000e+00> : vector<48xf32>
    %300 = vector.multi_reduction <add>, %297, %cst_114 [1] : vector<48x64xf32> to vector<48xf32>
    %301 = vector.shape_cast %300 : vector<48xf32> to vector<48x1xf32>
    %cst_115 = arith.constant 6.400000e+01 : f32
    %302 = vector.broadcast %cst_115 : f32 to vector<48x1xf32>
    %303 = arith.divf %301, %302 : vector<48x1xf32>
    %304 = vector.broadcast %303 : vector<48x1xf32> to vector<48x64xf32>
    %305 = arith.subf %297, %304 : vector<48x64xf32>
    %306 = arith.mulf %305, %305 : vector<48x64xf32>
    %cst_116 = arith.constant dense<0.000000e+00> : vector<48xf32>
    %307 = vector.multi_reduction <add>, %306, %cst_116 [1] : vector<48x64xf32> to vector<48xf32>
    %308 = vector.shape_cast %307 : vector<48xf32> to vector<48x1xf32>
    %cst_117 = arith.constant 6.400000e+01 : f32
    %309 = vector.broadcast %cst_117 : f32 to vector<48x1xf32>
    %310 = arith.divf %308, %309 : vector<48x1xf32>
    %311 = vector.broadcast %303 : vector<48x1xf32> to vector<48x64xf32>
    %312 = arith.subf %297, %311 : vector<48x64xf32>
    %cst_118 = arith.constant 9.99999974E-6 : f32
    %313 = vector.broadcast %cst_118 : f32 to vector<48x1xf32>
    %314 = arith.addf %310, %313 : vector<48x1xf32>
    %315 = math.rsqrt %314 : vector<48x1xf32>
    %316 = vector.broadcast %315 : vector<48x1xf32> to vector<48x64xf32>
    %317 = arith.mulf %312, %316 : vector<48x64xf32>
    %318 = vector.broadcast %298 : vector<1x64xf32> to vector<48x64xf32>
    %319 = arith.mulf %317, %318 : vector<48x64xf32>
    %320 = vector.broadcast %299 : vector<1x64xf32> to vector<48x64xf32>
    %321 = arith.addf %319, %320 : vector<48x64xf32>
    %c1_119 = arith.constant 1 : index
    %c0_120 = arith.constant 0 : index
    %c0_121 = arith.constant 0 : index
    %322 = vector.load %arg17[%c1_119, %c0_120, %c0_121] : memref<3x64x256xbf16, #tpu.memory_space<vmem>>, vector<1x64x256xbf16>
    %323 = vector.shape_cast %322 : vector<1x64x256xbf16> to vector<64x256xbf16>
    %324 = arith.truncf %321 : vector<48x64xf32> to vector<48x64xbf16>
    %cst_122 = arith.constant dense<0.000000e+00> : vector<48x256xf32>
    %325 = tpu.matmul %324, %323, %cst_122 {dimension_numbers = #tpu.dot_dimension_numbers<[1], [0], [0], [1], [0, 0, 1, 1], [], []>} : vector<48x64xbf16>, vector<64x256xbf16>, vector<48x256xf32> -> vector<48x256xf32>
    %c1_123 = arith.constant 1 : index
    %c0_124 = arith.constant 0 : index
    %c0_125 = arith.constant 0 : index
    %326 = vector.load %arg18[%c1_123, %c0_124, %c0_125] : memref<3x1x256xf32, #tpu.memory_space<vmem>>, vector<1x1x256xf32>
    %327 = vector.shape_cast %326 : vector<1x1x256xf32> to vector<1x256xf32>
    %328 = vector.broadcast %327 : vector<1x256xf32> to vector<48x256xf32>
    %329 = arith.addf %325, %328 : vector<48x256xf32>
    %cst_126 = arith.constant 0.000000e+00 : f32
    %330 = vector.broadcast %cst_126 : f32 to vector<48x256xf32>
    %331 = arith.maximumf %329, %330 : vector<48x256xf32>
    %c1_127 = arith.constant 1 : index
    %c0_128 = arith.constant 0 : index
    %c0_129 = arith.constant 0 : index
    %332 = vector.load %arg19[%c1_127, %c0_128, %c0_129] : memref<3x256x64xbf16, #tpu.memory_space<vmem>>, vector<1x256x64xbf16>
    %333 = vector.shape_cast %332 : vector<1x256x64xbf16> to vector<256x64xbf16>
    %334 = arith.truncf %331 : vector<48x256xf32> to vector<48x256xbf16>
    %cst_130 = arith.constant dense<0.000000e+00> : vector<48x64xf32>
    %335 = tpu.matmul %334, %333, %cst_130 {dimension_numbers = #tpu.dot_dimension_numbers<[1], [0], [0], [1], [0, 0, 1, 1], [], []>} : vector<48x256xbf16>, vector<256x64xbf16>, vector<48x64xf32> -> vector<48x64xf32>
    %336 = arith.addf %297, %335 : vector<48x64xf32>
    %c1_131 = arith.constant 1 : index
    %c0_132 = arith.constant 0 : index
    %c0_133 = arith.constant 0 : index
    %337 = vector.load %arg20[%c1_131, %c0_132, %c0_133] : memref<3x1x64xf32, #tpu.memory_space<vmem>>, vector<1x1x64xf32>
    %338 = vector.shape_cast %337 : vector<1x1x64xf32> to vector<1x64xf32>
    %339 = vector.broadcast %338 : vector<1x64xf32> to vector<48x64xf32>
    %340 = arith.addf %336, %339 : vector<48x64xf32>
    %c2 = arith.constant 2 : index
    %c0_134 = arith.constant 0 : index
    %c0_135 = arith.constant 0 : index
    %341 = vector.load %arg12[%c2, %c0_134, %c0_135] : memref<3x4x64xf32, #tpu.memory_space<vmem>>, vector<1x4x64xf32>
    %342 = vector.shape_cast %341 : vector<1x4x64xf32> to vector<4x64xf32>
    %343 = vector.extract_strided_slice %342 {offsets = [0, 0], sizes = [1, 64], strides = [1, 1]} : vector<4x64xf32> to vector<1x64xf32>
    %344 = vector.extract_strided_slice %342 {offsets = [1, 0], sizes = [1, 64], strides = [1, 1]} : vector<4x64xf32> to vector<1x64xf32>
    %cst_136 = arith.constant dense<0.000000e+00> : vector<48xf32>
    %345 = vector.multi_reduction <add>, %340, %cst_136 [1] : vector<48x64xf32> to vector<48xf32>
    %346 = vector.shape_cast %345 : vector<48xf32> to vector<48x1xf32>
    %cst_137 = arith.constant 6.400000e+01 : f32
    %347 = vector.broadcast %cst_137 : f32 to vector<48x1xf32>
    %348 = arith.divf %346, %347 : vector<48x1xf32>
    %349 = vector.broadcast %348 : vector<48x1xf32> to vector<48x64xf32>
    %350 = arith.subf %340, %349 : vector<48x64xf32>
    %351 = arith.mulf %350, %350 : vector<48x64xf32>
    %cst_138 = arith.constant dense<0.000000e+00> : vector<48xf32>
    %352 = vector.multi_reduction <add>, %351, %cst_138 [1] : vector<48x64xf32> to vector<48xf32>
    %353 = vector.shape_cast %352 : vector<48xf32> to vector<48x1xf32>
    %cst_139 = arith.constant 6.400000e+01 : f32
    %354 = vector.broadcast %cst_139 : f32 to vector<48x1xf32>
    %355 = arith.divf %353, %354 : vector<48x1xf32>
    %356 = vector.broadcast %348 : vector<48x1xf32> to vector<48x64xf32>
    %357 = arith.subf %340, %356 : vector<48x64xf32>
    %cst_140 = arith.constant 9.99999974E-6 : f32
    %358 = vector.broadcast %cst_140 : f32 to vector<48x1xf32>
    %359 = arith.addf %355, %358 : vector<48x1xf32>
    %360 = math.rsqrt %359 : vector<48x1xf32>
    %361 = vector.broadcast %360 : vector<48x1xf32> to vector<48x64xf32>
    %362 = arith.mulf %357, %361 : vector<48x64xf32>
    %363 = vector.broadcast %343 : vector<1x64xf32> to vector<48x64xf32>
    %364 = arith.mulf %362, %363 : vector<48x64xf32>
    %365 = vector.broadcast %344 : vector<1x64xf32> to vector<48x64xf32>
    %366 = arith.addf %364, %365 : vector<48x64xf32>
    %c2_141 = arith.constant 2 : index
    %c0_142 = arith.constant 0 : index
    %c0_143 = arith.constant 0 : index
    %367 = vector.load %arg13[%c2_141, %c0_142, %c0_143] : memref<3x64x192xbf16, #tpu.memory_space<vmem>>, vector<1x64x192xbf16>
    %368 = vector.shape_cast %367 : vector<1x64x192xbf16> to vector<64x192xbf16>
    %369 = arith.truncf %366 : vector<48x64xf32> to vector<48x64xbf16>
    %cst_144 = arith.constant dense<0.000000e+00> : vector<48x192xf32>
    %370 = tpu.matmul %369, %368, %cst_144 {dimension_numbers = #tpu.dot_dimension_numbers<[1], [0], [0], [1], [0, 0, 1, 1], [], []>} : vector<48x64xbf16>, vector<64x192xbf16>, vector<48x192xf32> -> vector<48x192xf32>
    %c2_145 = arith.constant 2 : index
    %c0_146 = arith.constant 0 : index
    %c0_147 = arith.constant 0 : index
    %371 = vector.load %arg14[%c2_145, %c0_146, %c0_147] : memref<3x1x192xf32, #tpu.memory_space<vmem>>, vector<1x1x192xf32>
    %372 = vector.shape_cast %371 : vector<1x1x192xf32> to vector<1x192xf32>
    %373 = vector.broadcast %372 : vector<1x192xf32> to vector<48x192xf32>
    %374 = arith.addf %370, %373 : vector<48x192xf32>
    %375 = vector.extract_strided_slice %374 {offsets = [0, 0], sizes = [48, 32], strides = [1, 1]} : vector<48x192xf32> to vector<48x32xf32>
    %376 = vector.shape_cast %375 : vector<48x32xf32> to vector<2x24x32xf32>
    %377 = arith.truncf %376 : vector<2x24x32xf32> to vector<2x24x32xbf16>
    %378 = vector.extract_strided_slice %374 {offsets = [0, 64], sizes = [48, 32], strides = [1, 1]} : vector<48x192xf32> to vector<48x32xf32>
    %379 = vector.shape_cast %378 : vector<48x32xf32> to vector<2x24x32xf32>
    %380 = arith.truncf %379 : vector<2x24x32xf32> to vector<2x24x32xbf16>
    %381 = vector.extract_strided_slice %374 {offsets = [0, 128], sizes = [48, 32], strides = [1, 1]} : vector<48x192xf32> to vector<48x32xf32>
    %382 = vector.shape_cast %381 : vector<48x32xf32> to vector<2x24x32xf32>
    %383 = arith.truncf %382 : vector<2x24x32xf32> to vector<2x24x32xbf16>
    "tpu.trace_start"() <{level = 10 : i32, message = "gqd,gkd->gqk"}> : () -> ()
    %cst_148 = arith.constant dense<0.000000e+00> : vector<2x24x24xf32>
    %384 = tpu.matmul %377, %380, %cst_148 {dimension_numbers = #tpu.dot_dimension_numbers<[2], [2], [1], [1], [0, 0, 0, 1, 1, 1], [0], [0]>} : vector<2x24x32xbf16>, vector<2x24x32xbf16>, vector<2x24x24xf32> -> vector<2x24x24xf32>
    "tpu.trace_stop"() : () -> ()
    %cst_149 = arith.constant 0.176776692 : f32
    %385 = vector.broadcast %cst_149 : f32 to vector<2x24x24xf32>
    %386 = arith.mulf %384, %385 : vector<2x24x24xf32>
    %387 = vector.broadcast %11 : vector<2x1x24xf32> to vector<2x24x24xf32>
    %388 = arith.addf %386, %387 : vector<2x24x24xf32>
    %cst_150 = arith.constant dense<0xFF800000> : vector<2x24xf32>
    %389 = vector.multi_reduction <maximumf>, %388, %cst_150 [2] : vector<2x24x24xf32> to vector<2x24xf32>
    %390 = vector.shape_cast %389 : vector<2x24xf32> to vector<2x24x1xf32>
    %391 = vector.broadcast %390 : vector<2x24x1xf32> to vector<2x24x24xf32>
    %392 = arith.subf %388, %391 : vector<2x24x24xf32>
    %393 = math.exp %392 : vector<2x24x24xf32>
    %cst_151 = arith.constant dense<0.000000e+00> : vector<2x24xf32>
    %394 = vector.multi_reduction <add>, %393, %cst_151 [2] : vector<2x24x24xf32> to vector<2x24xf32>
    %395 = vector.shape_cast %394 : vector<2x24xf32> to vector<2x24x1xf32>
    %396 = tpu.reciprocal %395 {approx = true} : vector<2x24x1xf32> -> vector<2x24x1xf32>
    %397 = vector.broadcast %396 : vector<2x24x1xf32> to vector<2x24x24xf32>
    %398 = arith.mulf %393, %397 : vector<2x24x24xf32>
    %399 = arith.truncf %398 : vector<2x24x24xf32> to vector<2x24x24xbf16>
    "tpu.trace_start"() <{level = 10 : i32, message = "gqk,gkd->gqd"}> : () -> ()
    %cst_152 = arith.constant dense<0.000000e+00> : vector<2x24x32xf32>
    %400 = tpu.matmul %399, %383, %cst_152 {dimension_numbers = #tpu.dot_dimension_numbers<[2], [1], [1], [2], [0, 0, 0, 1, 1, 2], [0], [0]>} : vector<2x24x24xbf16>, vector<2x24x32xbf16>, vector<2x24x32xf32> -> vector<2x24x32xf32>
    "tpu.trace_stop"() : () -> ()
    %401 = vector.shape_cast %400 : vector<2x24x32xf32> to vector<48x32xf32>
    %402 = vector.extract_strided_slice %374 {offsets = [0, 32], sizes = [48, 32], strides = [1, 1]} : vector<48x192xf32> to vector<48x32xf32>
    %403 = vector.shape_cast %402 : vector<48x32xf32> to vector<2x24x32xf32>
    %404 = arith.truncf %403 : vector<2x24x32xf32> to vector<2x24x32xbf16>
    %405 = vector.extract_strided_slice %374 {offsets = [0, 96], sizes = [48, 32], strides = [1, 1]} : vector<48x192xf32> to vector<48x32xf32>
    %406 = vector.shape_cast %405 : vector<48x32xf32> to vector<2x24x32xf32>
    %407 = arith.truncf %406 : vector<2x24x32xf32> to vector<2x24x32xbf16>
    %408 = vector.extract_strided_slice %374 {offsets = [0, 160], sizes = [48, 32], strides = [1, 1]} : vector<48x192xf32> to vector<48x32xf32>
    %409 = vector.shape_cast %408 : vector<48x32xf32> to vector<2x24x32xf32>
    %410 = arith.truncf %409 : vector<2x24x32xf32> to vector<2x24x32xbf16>
    "tpu.trace_start"() <{level = 10 : i32, message = "gqd,gkd->gqk"}> : () -> ()
    %cst_153 = arith.constant dense<0.000000e+00> : vector<2x24x24xf32>
    %411 = tpu.matmul %404, %407, %cst_153 {dimension_numbers = #tpu.dot_dimension_numbers<[2], [2], [1], [1], [0, 0, 0, 1, 1, 1], [0], [0]>} : vector<2x24x32xbf16>, vector<2x24x32xbf16>, vector<2x24x24xf32> -> vector<2x24x24xf32>
    "tpu.trace_stop"() : () -> ()
    %cst_154 = arith.constant 0.176776692 : f32
    %412 = vector.broadcast %cst_154 : f32 to vector<2x24x24xf32>
    %413 = arith.mulf %411, %412 : vector<2x24x24xf32>
    %414 = vector.broadcast %11 : vector<2x1x24xf32> to vector<2x24x24xf32>
    %415 = arith.addf %413, %414 : vector<2x24x24xf32>
    %cst_155 = arith.constant dense<0xFF800000> : vector<2x24xf32>
    %416 = vector.multi_reduction <maximumf>, %415, %cst_155 [2] : vector<2x24x24xf32> to vector<2x24xf32>
    %417 = vector.shape_cast %416 : vector<2x24xf32> to vector<2x24x1xf32>
    %418 = vector.broadcast %417 : vector<2x24x1xf32> to vector<2x24x24xf32>
    %419 = arith.subf %415, %418 : vector<2x24x24xf32>
    %420 = math.exp %419 : vector<2x24x24xf32>
    %cst_156 = arith.constant dense<0.000000e+00> : vector<2x24xf32>
    %421 = vector.multi_reduction <add>, %420, %cst_156 [2] : vector<2x24x24xf32> to vector<2x24xf32>
    %422 = vector.shape_cast %421 : vector<2x24xf32> to vector<2x24x1xf32>
    %423 = tpu.reciprocal %422 {approx = true} : vector<2x24x1xf32> -> vector<2x24x1xf32>
    %424 = vector.broadcast %423 : vector<2x24x1xf32> to vector<2x24x24xf32>
    %425 = arith.mulf %420, %424 : vector<2x24x24xf32>
    %426 = arith.truncf %425 : vector<2x24x24xf32> to vector<2x24x24xbf16>
    "tpu.trace_start"() <{level = 10 : i32, message = "gqk,gkd->gqd"}> : () -> ()
    %cst_157 = arith.constant dense<0.000000e+00> : vector<2x24x32xf32>
    %427 = tpu.matmul %426, %410, %cst_157 {dimension_numbers = #tpu.dot_dimension_numbers<[2], [1], [1], [2], [0, 0, 0, 1, 1, 2], [0], [0]>} : vector<2x24x24xbf16>, vector<2x24x32xbf16>, vector<2x24x32xf32> -> vector<2x24x32xf32>
    "tpu.trace_stop"() : () -> ()
    %428 = vector.shape_cast %427 : vector<2x24x32xf32> to vector<48x32xf32>
    %429 = tpu.concatenate %401, %428 in 1 : vector<48x32xf32>, vector<48x32xf32> -> vector<48x64xf32>
    %c2_158 = arith.constant 2 : index
    %c0_159 = arith.constant 0 : index
    %c0_160 = arith.constant 0 : index
    %430 = vector.load %arg15[%c2_158, %c0_159, %c0_160] : memref<3x64x64xbf16, #tpu.memory_space<vmem>>, vector<1x64x64xbf16>
    %431 = vector.shape_cast %430 : vector<1x64x64xbf16> to vector<64x64xbf16>
    %432 = arith.truncf %429 : vector<48x64xf32> to vector<48x64xbf16>
    %cst_161 = arith.constant dense<0.000000e+00> : vector<48x64xf32>
    %433 = tpu.matmul %432, %431, %cst_161 {dimension_numbers = #tpu.dot_dimension_numbers<[1], [0], [0], [1], [0, 0, 1, 1], [], []>} : vector<48x64xbf16>, vector<64x64xbf16>, vector<48x64xf32> -> vector<48x64xf32>
    %434 = arith.addf %340, %433 : vector<48x64xf32>
    %c2_162 = arith.constant 2 : index
    %c0_163 = arith.constant 0 : index
    %c0_164 = arith.constant 0 : index
    %435 = vector.load %arg16[%c2_162, %c0_163, %c0_164] : memref<3x1x64xf32, #tpu.memory_space<vmem>>, vector<1x1x64xf32>
    %436 = vector.shape_cast %435 : vector<1x1x64xf32> to vector<1x64xf32>
    %437 = vector.broadcast %436 : vector<1x64xf32> to vector<48x64xf32>
    %438 = arith.addf %434, %437 : vector<48x64xf32>
    %439 = vector.extract_strided_slice %342 {offsets = [2, 0], sizes = [1, 64], strides = [1, 1]} : vector<4x64xf32> to vector<1x64xf32>
    %440 = vector.extract_strided_slice %342 {offsets = [3, 0], sizes = [1, 64], strides = [1, 1]} : vector<4x64xf32> to vector<1x64xf32>
    %cst_165 = arith.constant dense<0.000000e+00> : vector<48xf32>
    %441 = vector.multi_reduction <add>, %438, %cst_165 [1] : vector<48x64xf32> to vector<48xf32>
    %442 = vector.shape_cast %441 : vector<48xf32> to vector<48x1xf32>
    %cst_166 = arith.constant 6.400000e+01 : f32
    %443 = vector.broadcast %cst_166 : f32 to vector<48x1xf32>
    %444 = arith.divf %442, %443 : vector<48x1xf32>
    %445 = vector.broadcast %444 : vector<48x1xf32> to vector<48x64xf32>
    %446 = arith.subf %438, %445 : vector<48x64xf32>
    %447 = arith.mulf %446, %446 : vector<48x64xf32>
    %cst_167 = arith.constant dense<0.000000e+00> : vector<48xf32>
    %448 = vector.multi_reduction <add>, %447, %cst_167 [1] : vector<48x64xf32> to vector<48xf32>
    %449 = vector.shape_cast %448 : vector<48xf32> to vector<48x1xf32>
    %cst_168 = arith.constant 6.400000e+01 : f32
    %450 = vector.broadcast %cst_168 : f32 to vector<48x1xf32>
    %451 = arith.divf %449, %450 : vector<48x1xf32>
    %452 = vector.broadcast %444 : vector<48x1xf32> to vector<48x64xf32>
    %453 = arith.subf %438, %452 : vector<48x64xf32>
    %cst_169 = arith.constant 9.99999974E-6 : f32
    %454 = vector.broadcast %cst_169 : f32 to vector<48x1xf32>
    %455 = arith.addf %451, %454 : vector<48x1xf32>
    %456 = math.rsqrt %455 : vector<48x1xf32>
    %457 = vector.broadcast %456 : vector<48x1xf32> to vector<48x64xf32>
    %458 = arith.mulf %453, %457 : vector<48x64xf32>
    %459 = vector.broadcast %439 : vector<1x64xf32> to vector<48x64xf32>
    %460 = arith.mulf %458, %459 : vector<48x64xf32>
    %461 = vector.broadcast %440 : vector<1x64xf32> to vector<48x64xf32>
    %462 = arith.addf %460, %461 : vector<48x64xf32>
    %c2_170 = arith.constant 2 : index
    %c0_171 = arith.constant 0 : index
    %c0_172 = arith.constant 0 : index
    %463 = vector.load %arg17[%c2_170, %c0_171, %c0_172] : memref<3x64x256xbf16, #tpu.memory_space<vmem>>, vector<1x64x256xbf16>
    %464 = vector.shape_cast %463 : vector<1x64x256xbf16> to vector<64x256xbf16>
    %465 = arith.truncf %462 : vector<48x64xf32> to vector<48x64xbf16>
    %cst_173 = arith.constant dense<0.000000e+00> : vector<48x256xf32>
    %466 = tpu.matmul %465, %464, %cst_173 {dimension_numbers = #tpu.dot_dimension_numbers<[1], [0], [0], [1], [0, 0, 1, 1], [], []>} : vector<48x64xbf16>, vector<64x256xbf16>, vector<48x256xf32> -> vector<48x256xf32>
    %c2_174 = arith.constant 2 : index
    %c0_175 = arith.constant 0 : index
    %c0_176 = arith.constant 0 : index
    %467 = vector.load %arg18[%c2_174, %c0_175, %c0_176] : memref<3x1x256xf32, #tpu.memory_space<vmem>>, vector<1x1x256xf32>
    %468 = vector.shape_cast %467 : vector<1x1x256xf32> to vector<1x256xf32>
    %469 = vector.broadcast %468 : vector<1x256xf32> to vector<48x256xf32>
    %470 = arith.addf %466, %469 : vector<48x256xf32>
    %cst_177 = arith.constant 0.000000e+00 : f32
    %471 = vector.broadcast %cst_177 : f32 to vector<48x256xf32>
    %472 = arith.maximumf %470, %471 : vector<48x256xf32>
    %c2_178 = arith.constant 2 : index
    %c0_179 = arith.constant 0 : index
    %c0_180 = arith.constant 0 : index
    %473 = vector.load %arg19[%c2_178, %c0_179, %c0_180] : memref<3x256x64xbf16, #tpu.memory_space<vmem>>, vector<1x256x64xbf16>
    %474 = vector.shape_cast %473 : vector<1x256x64xbf16> to vector<256x64xbf16>
    %475 = arith.truncf %472 : vector<48x256xf32> to vector<48x256xbf16>
    %cst_181 = arith.constant dense<0.000000e+00> : vector<48x64xf32>
    %476 = tpu.matmul %475, %474, %cst_181 {dimension_numbers = #tpu.dot_dimension_numbers<[1], [0], [0], [1], [0, 0, 1, 1], [], []>} : vector<48x256xbf16>, vector<256x64xbf16>, vector<48x64xf32> -> vector<48x64xf32>
    %477 = arith.addf %438, %476 : vector<48x64xf32>
    %c2_182 = arith.constant 2 : index
    %c0_183 = arith.constant 0 : index
    %c0_184 = arith.constant 0 : index
    %478 = vector.load %arg20[%c2_182, %c0_183, %c0_184] : memref<3x1x64xf32, #tpu.memory_space<vmem>>, vector<1x1x64xf32>
    %479 = vector.shape_cast %478 : vector<1x1x64xf32> to vector<1x64xf32>
    %480 = vector.broadcast %479 : vector<1x64xf32> to vector<48x64xf32>
    %481 = arith.addf %477, %480 : vector<48x64xf32>
    %482 = vector.shape_cast %481 : vector<48x64xf32> to vector<2x24x64xf32>
    %cst_185 = arith.constant dense<0.000000e+00> : vector<2xf32>
    %483 = vector.multi_reduction <add>, %0, %cst_185 [1] : vector<2x24xf32> to vector<2xf32>
    %484 = vector.shape_cast %483 : vector<2xf32> to vector<2x1xf32>
    %cst_186 = arith.constant 1.000000e+00 : f32
    %485 = vector.broadcast %cst_186 : f32 to vector<2x1xf32>
    %486 = arith.maximumf %484, %485 : vector<2x1xf32>
    %cst_187 = arith.constant 1.000000e+00 : f32
    %487 = vector.broadcast %cst_187 : f32 to vector<2x1xf32>
    %488 = arith.divf %487, %486 : vector<2x1xf32>
    %489 = vector.broadcast %488 : vector<2x1xf32> to vector<2x24xf32>
    %490 = arith.mulf %0, %489 : vector<2x24xf32>
    %491 = vector.shape_cast %490 : vector<2x24xf32> to vector<2x24x1xf32>
    %492 = vector.broadcast %491 : vector<2x24x1xf32> to vector<2x24x64xf32>
    %493 = arith.mulf %482, %492 : vector<2x24x64xf32>
    %cst_188 = arith.constant dense<0.000000e+00> : vector<2x64xf32>
    %494 = vector.multi_reduction <add>, %493, %cst_188 [1] : vector<2x24x64xf32> to vector<2x64xf32>
    %495 = vector.extract_strided_slice %482 {offsets = [0, 16, 0], sizes = [2, 1, 64], strides = [1, 1, 1]} : vector<2x24x64xf32> to vector<2x1x64xf32>
    %496 = vector.shape_cast %495 : vector<2x1x64xf32> to vector<2x64xf32>
    %497 = tpu.concatenate %494, %496 in 1 : vector<2x64xf32>, vector<2x64xf32> -> vector<2x128xf32>
    %c0_189 = arith.constant 0 : index
    %c0_190 = arith.constant 0 : index
    %498 = vector.load %arg21[%c0_189, %c0_190] : memref<128x128xbf16, #tpu.memory_space<vmem>>, vector<128x128xbf16>
    %499 = arith.truncf %497 : vector<2x128xf32> to vector<2x128xbf16>
    %cst_191 = arith.constant dense<0.000000e+00> : vector<2x128xf32>
    %500 = tpu.matmul %499, %498, %cst_191 {dimension_numbers = #tpu.dot_dimension_numbers<[1], [0], [0], [1], [0, 0, 1, 1], [], []>} : vector<2x128xbf16>, vector<128x128xbf16>, vector<2x128xf32> -> vector<2x128xf32>
    %c0_192 = arith.constant 0 : index
    %c0_193 = arith.constant 0 : index
    %501 = vector.load %arg22[%c0_192, %c0_193] : memref<1x128xf32, #tpu.memory_space<vmem>>, vector<1x128xf32>
    %502 = vector.broadcast %501 : vector<1x128xf32> to vector<2x128xf32>
    %503 = arith.addf %500, %502 : vector<2x128xf32>
    %cst_194 = arith.constant 0.000000e+00 : f32
    %504 = vector.broadcast %cst_194 : f32 to vector<2x128xf32>
    %505 = arith.maximumf %503, %504 : vector<2x128xf32>
    %c0_195 = arith.constant 0 : index
    %c0_196 = arith.constant 0 : index
    %506 = vector.load %arg23[%c0_195, %c0_196] : memref<128x1xbf16, #tpu.memory_space<vmem>>, vector<128x1xbf16>
    %507 = arith.truncf %505 : vector<2x128xf32> to vector<2x128xbf16>
    %cst_197 = arith.constant dense<0.000000e+00> : vector<2x1xf32>
    %508 = tpu.matmul %507, %506, %cst_197 {dimension_numbers = #tpu.dot_dimension_numbers<[1], [0], [0], [1], [0, 0, 1, 1], [], []>} : vector<2x128xbf16>, vector<128x1xbf16>, vector<2x1xf32> -> vector<2x1xf32>
    %c0_198 = arith.constant 0 : index
    %c0_199 = arith.constant 0 : index
    %509 = vector.load %arg24[%c0_198, %c0_199] : memref<1x1xf32, #tpu.memory_space<vmem>>, vector<1x1xf32>
    %510 = vector.broadcast %509 : vector<1x1xf32> to vector<2x1xf32>
    %511 = arith.addf %508, %510 : vector<2x1xf32>
    %512 = vector.shape_cast %511 : vector<2x1xf32> to vector<2x1xf32>
    %513 = vector.broadcast %512 : vector<2x1xf32> to vector<2x128xf32>
    %514 = tpu.concatenate %497, %513 in 1 : vector<2x128xf32>, vector<2x128xf32> -> vector<2x256xf32>
    %c0_200 = arith.constant 0 : index
    %c0_201 = arith.constant 0 : index
    %515 = vector.load %arg25[%c0_200, %c0_201] : memref<2x256xf32, #tpu.memory_space<vmem>>, vector<2x256xf32>
    tpu.vector_store %arg25[%c0_200, %c0_201], %514 {strides = array<i32>} : memref<2x256xf32, #tpu.memory_space<vmem>>, vector<2x256xf32>,
    return
  }
  func.func @transform_0(%arg0: i32) -> (i32, i32, i32) {
    %c0_i32 = arith.constant 0 : i32
    %c0_i32_0 = arith.constant 0 : i32
    %c0_i32_1 = arith.constant 0 : i32
    return %arg0, %c0_i32, %c0_i32_0 : i32, i32, i32
  }
  func.func @transform_1(%arg0: i32) -> (i32, i32) {
    %c0_i32 = arith.constant 0 : i32
    %c0_i32_0 = arith.constant 0 : i32
    return %arg0, %c0_i32 : i32, i32
  }
  func.func @transform_2(%arg0: i32) -> (i32, i32) {
    %c0_i32 = arith.constant 0 : i32
    %c0_i32_0 = arith.constant 0 : i32
    return %arg0, %c0_i32 : i32, i32
  }
  func.func @transform_3(%arg0: i32) -> (i32, i32) {
    %c0_i32 = arith.constant 0 : i32
    %c0_i32_0 = arith.constant 0 : i32
    %c0_i32_1 = arith.constant 0 : i32
    return %c0_i32, %c0_i32_0 : i32, i32
  }
  func.func @transform_4(%arg0: i32) -> (i32, i32) {
    %c0_i32 = arith.constant 0 : i32
    %c0_i32_0 = arith.constant 0 : i32
    %c0_i32_1 = arith.constant 0 : i32
    return %c0_i32, %c0_i32_0 : i32, i32
  }
  func.func @transform_5(%arg0: i32) -> (i32, i32) {
    %c0_i32 = arith.constant 0 : i32
    %c0_i32_0 = arith.constant 0 : i32
    %c0_i32_1 = arith.constant 0 : i32
    return %c0_i32, %c0_i32_0 : i32, i32
  }
  func.func @transform_6(%arg0: i32) -> (i32, i32) {
    %c0_i32 = arith.constant 0 : i32
    %c0_i32_0 = arith.constant 0 : i32
    %c0_i32_1 = arith.constant 0 : i32
    return %c0_i32, %c0_i32_0 : i32, i32
  }
  func.func @transform_7(%arg0: i32) -> (i32, i32) {
    %c0_i32 = arith.constant 0 : i32
    %c0_i32_0 = arith.constant 0 : i32
    %c0_i32_1 = arith.constant 0 : i32
    return %c0_i32, %c0_i32_0 : i32, i32
  }
  func.func @transform_8(%arg0: i32) -> (i32, i32) {
    %c0_i32 = arith.constant 0 : i32
    %c0_i32_0 = arith.constant 0 : i32
    %c0_i32_1 = arith.constant 0 : i32
    return %c0_i32, %c0_i32_0 : i32, i32
  }
  func.func @transform_9(%arg0: i32) -> (i32, i32) {
    %c0_i32 = arith.constant 0 : i32
    %c0_i32_0 = arith.constant 0 : i32
    %c0_i32_1 = arith.constant 0 : i32
    return %c0_i32, %c0_i32_0 : i32, i32
  }
  func.func @transform_10(%arg0: i32) -> (i32, i32) {
    %c0_i32 = arith.constant 0 : i32
    %c0_i32_0 = arith.constant 0 : i32
    %c0_i32_1 = arith.constant 0 : i32
    return %c0_i32, %c0_i32_0 : i32, i32
  }
  func.func @transform_11(%arg0: i32) -> (i32, i32, i32) {
    %c0_i32 = arith.constant 0 : i32
    %c0_i32_0 = arith.constant 0 : i32
    %c0_i32_1 = arith.constant 0 : i32
    %c0_i32_2 = arith.constant 0 : i32
    return %c0_i32, %c0_i32_0, %c0_i32_1 : i32, i32, i32
  }
  func.func @transform_12(%arg0: i32) -> (i32, i32, i32) {
    %c0_i32 = arith.constant 0 : i32
    %c0_i32_0 = arith.constant 0 : i32
    %c0_i32_1 = arith.constant 0 : i32
    %c0_i32_2 = arith.constant 0 : i32
    return %c0_i32, %c0_i32_0, %c0_i32_1 : i32, i32, i32
  }
  func.func @transform_13(%arg0: i32) -> (i32, i32, i32) {
    %c0_i32 = arith.constant 0 : i32
    %c0_i32_0 = arith.constant 0 : i32
    %c0_i32_1 = arith.constant 0 : i32
    %c0_i32_2 = arith.constant 0 : i32
    return %c0_i32, %c0_i32_0, %c0_i32_1 : i32, i32, i32
  }
  func.func @transform_14(%arg0: i32) -> (i32, i32, i32) {
    %c0_i32 = arith.constant 0 : i32
    %c0_i32_0 = arith.constant 0 : i32
    %c0_i32_1 = arith.constant 0 : i32
    %c0_i32_2 = arith.constant 0 : i32
    return %c0_i32, %c0_i32_0, %c0_i32_1 : i32, i32, i32
  }
  func.func @transform_15(%arg0: i32) -> (i32, i32, i32) {
    %c0_i32 = arith.constant 0 : i32
    %c0_i32_0 = arith.constant 0 : i32
    %c0_i32_1 = arith.constant 0 : i32
    %c0_i32_2 = arith.constant 0 : i32
    return %c0_i32, %c0_i32_0, %c0_i32_1 : i32, i32, i32
  }
  func.func @transform_16(%arg0: i32) -> (i32, i32, i32) {
    %c0_i32 = arith.constant 0 : i32
    %c0_i32_0 = arith.constant 0 : i32
    %c0_i32_1 = arith.constant 0 : i32
    %c0_i32_2 = arith.constant 0 : i32
    return %c0_i32, %c0_i32_0, %c0_i32_1 : i32, i32, i32
  }
  func.func @transform_17(%arg0: i32) -> (i32, i32, i32) {
    %c0_i32 = arith.constant 0 : i32
    %c0_i32_0 = arith.constant 0 : i32
    %c0_i32_1 = arith.constant 0 : i32
    %c0_i32_2 = arith.constant 0 : i32
    return %c0_i32, %c0_i32_0, %c0_i32_1 : i32, i32, i32
  }
  func.func @transform_18(%arg0: i32) -> (i32, i32, i32) {
    %c0_i32 = arith.constant 0 : i32
    %c0_i32_0 = arith.constant 0 : i32
    %c0_i32_1 = arith.constant 0 : i32
    %c0_i32_2 = arith.constant 0 : i32
    return %c0_i32, %c0_i32_0, %c0_i32_1 : i32, i32, i32
  }
  func.func @transform_19(%arg0: i32) -> (i32, i32, i32) {
    %c0_i32 = arith.constant 0 : i32
    %c0_i32_0 = arith.constant 0 : i32
    %c0_i32_1 = arith.constant 0 : i32
    %c0_i32_2 = arith.constant 0 : i32
    return %c0_i32, %c0_i32_0, %c0_i32_1 : i32, i32, i32
  }
  func.func @transform_20(%arg0: i32) -> (i32, i32) {
    %c0_i32 = arith.constant 0 : i32
    %c0_i32_0 = arith.constant 0 : i32
    %c0_i32_1 = arith.constant 0 : i32
    return %c0_i32, %c0_i32_0 : i32, i32
  }
  func.func @transform_21(%arg0: i32) -> (i32, i32) {
    %c0_i32 = arith.constant 0 : i32
    %c0_i32_0 = arith.constant 0 : i32
    %c0_i32_1 = arith.constant 0 : i32
    return %c0_i32, %c0_i32_0 : i32, i32
  }
  func.func @transform_22(%arg0: i32) -> (i32, i32) {
    %c0_i32 = arith.constant 0 : i32
    %c0_i32_0 = arith.constant 0 : i32
    %c0_i32_1 = arith.constant 0 : i32
    return %c0_i32, %c0_i32_0 : i32, i32
  }
  func.func @transform_23(%arg0: i32) -> (i32, i32) {
    %c0_i32 = arith.constant 0 : i32
    %c0_i32_0 = arith.constant 0 : i32
    %c0_i32_1 = arith.constant 0 : i32
    return %c0_i32, %c0_i32_0 : i32, i32
  }
  func.func @transform_24(%arg0: i32) -> (i32, i32) {
    %c0_i32 = arith.constant 0 : i32
    %c0_i32_0 = arith.constant 0 : i32
    return %arg0, %c0_i32 : i32, i32
  }
}

</mosaic_0001>

<llo_original>
// kernel: tpu_custom_call.1
$region0: #{tpu_custom_call.1}
  #allocation0 [shape = 'u32[]', space=smem, size = 0x4, offset = 0x4, fixed_abs, tag = 'smem constant byte address 0x4 - core index']
  #allocation1 [shape = 'u32[144,128]{1,0:T(1,128)}', space=vmem, size = 0x12000, scoped, tag = 'internal scratch']
  #allocation2 [shape = 'f32[1,1]{1,0:T(1,128)S(1)}', space=vmem, size = 0x200, scoped, tag = 'scoped memory for tpu_custom_call.1']
  %s0 = inlined_call_operand.vmem [shape: f32[2,24,16], index: 0, kind: input, shape index: {}]
  %s1 = inlined_call_operand.vmem [shape: f32[2,24], index: 1, kind: input, shape index: {}]
  %s2 = inlined_call_operand.vmem [shape: f32[2,16], index: 2, kind: input, shape index: {}]
  %s3 = inlined_call_operand.vmem [shape: bf16[16,64], index: 3, kind: input, shape index: {}]
  %s4 = inlined_call_operand.vmem [shape: f32[1,64], index: 4, kind: input, shape index: {}]
  %s5 = inlined_call_operand.vmem [shape: bf16[64,64], index: 5, kind: input, shape index: {}]
  %s6 = inlined_call_operand.vmem [shape: f32[1,64], index: 6, kind: input, shape index: {}]
  %s7 = inlined_call_operand.vmem [shape: bf16[16,64], index: 7, kind: input, shape index: {}]
  %s8 = inlined_call_operand.vmem [shape: f32[1,64], index: 8, kind: input, shape index: {}]
  %s9 = inlined_call_operand.vmem [shape: bf16[64,64], index: 9, kind: input, shape index: {}]
  %s10 = inlined_call_operand.vmem [shape: f32[1,64], index: 10, kind: input, shape index: {}]
  %s11 = inlined_call_operand.vmem [shape: f32[3,4,64], index: 11, kind: input, shape index: {}]
  %s12 = inlined_call_operand.vmem [shape: bf16[3,64,192], index: 12, kind: input, shape index: {}]
  %s13 = inlined_call_operand.vmem [shape: f32[3,1,192], index: 13, kind: input, shape index: {}]
  %s14 = inlined_call_operand.vmem [shape: bf16[3,64,64], index: 14, kind: input, shape index: {}]
  %s15 = inlined_call_operand.vmem [shape: f32[3,1,64], index: 15, kind: input, shape index: {}]
  %s16 = inlined_call_operand.vmem [shape: bf16[3,64,256], index: 16, kind: input, shape index: {}]
  %s17 = inlined_call_operand.vmem [shape: f32[3,1,256], index: 17, kind: input, shape index: {}]
  %s18 = inlined_call_operand.vmem [shape: bf16[3,256,64], index: 18, kind: input, shape index: {}]
  %s19 = inlined_call_operand.vmem [shape: f32[3,1,64], index: 19, kind: input, shape index: {}]
  %s20 = inlined_call_operand.vmem [shape: bf16[128,128], index: 20, kind: input, shape index: {}]
  %s21 = inlined_call_operand.vmem [shape: f32[1,128], index: 21, kind: input, shape index: {}]
  %s22 = inlined_call_operand.vmem [shape: bf16[128,1], index: 22, kind: input, shape index: {}]
  %s23 = inlined_call_operand.<no memory space> [shape: f32[1,1], index: 23, kind: input, shape index: {}]
  %s24 = inlined_call_operand.hbm [shape: f32[2,256], index: 24, kind: output, shape index: {}]
  %s25 = sld [smem:[#allocation0]]
  $region106: #{tpu_custom_call.1} parent=0
    _
  %s27 = ssub.s32 1, %s25
  %s28 = scalar_select 0, %s27, %s25
  %v29 = vstv %s23
  %30 = vst [vmem:[#allocation2] sm:$0x1] %v29
  $region1: #{tpu_custom_call.1} parent=0
    #allocation3 [shape = 'u8[2048]{0}', space=vmem, size = 0x800, scoped, tag = 'output window, operand 0, single buffered']
    #allocation4 [shape = 's32[1]{0}', space=sflag, size = 0x4, scoped, tag = 'scoped memory for tpu_custom_call.1']
    %31 = vsyncpa [#allocation4], 0
    // Predicated region
    $region2: #{tpu_custom_call.1} parent=1 // pred_check
      _
    $region3: #{tpu_custom_call.1} parent=1 // pred_check_branch
      %33 = sbr.rel (0) target = $region5
    $region4: #{tpu_custom_call.1} parent=1 // pred_region
      _
    $region5: #{tpu_custom_call.1} parent=1 // pred_fallthru
      _
    // Predicated region
    $region6: #{tpu_custom_call.1} parent=1 // pred_check
      _
    $region7: #{tpu_custom_call.1} parent=1 // pred_check_branch
      %35 = sbr.rel (0) target = $region9
    $region8: #{tpu_custom_call.1} parent=1 // pred_region
      _
    $region9: #{tpu_custom_call.1} parent=1 // pred_fallthru
      _
    // Predicated region
    $region10: #{tpu_custom_call.1} parent=1 // pred_check
      _
    $region11: #{tpu_custom_call.1} parent=1 // pred_check_branch
      %37 = sbr.rel (0) target = $region13
    $region12: #{tpu_custom_call.1} parent=1 // pred_region
      _
    $region13: #{tpu_custom_call.1} parent=1 // pred_fallthru
      _
    // Predicated region
    $region14: #{tpu_custom_call.1} parent=1 // pred_check
      _
    $region15: #{tpu_custom_call.1} parent=1 // pred_check_branch
      %39 = sbr.rel (0) target = $region17
    $region16: #{tpu_custom_call.1} parent=1 // pred_region
      _
    $region17: #{tpu_custom_call.1} parent=1 // pred_fallthru
      _
    // Predicated region
    $region18: #{tpu_custom_call.1} parent=1 // pred_check
      _
    $region19: #{tpu_custom_call.1} parent=1 // pred_check_branch
      %41 = sbr.rel (0) target = $region21
    $region20: #{tpu_custom_call.1} parent=1 // pred_region
      _
    $region21: #{tpu_custom_call.1} parent=1 // pred_fallthru
      _
    // Predicated region
    $region22: #{tpu_custom_call.1} parent=1 // pred_check
      _
    $region23: #{tpu_custom_call.1} parent=1 // pred_check_branch
      %43 = sbr.rel (0) target = $region25
    $region24: #{tpu_custom_call.1} parent=1 // pred_region
      _
    $region25: #{tpu_custom_call.1} parent=1 // pred_fallthru
      _
    // Predicated region
    $region26: #{tpu_custom_call.1} parent=1 // pred_check
      _
    $region27: #{tpu_custom_call.1} parent=1 // pred_check_branch
      %45 = sbr.rel (0) target = $region29
    $region28: #{tpu_custom_call.1} parent=1 // pred_region
      _
    $region29: #{tpu_custom_call.1} parent=1 // pred_fallthru
      _
    // Predicated region
    $region30: #{tpu_custom_call.1} parent=1 // pred_check
      _
    $region31: #{tpu_custom_call.1} parent=1 // pred_check_branch
      %47 = sbr.rel (0) target = $region33
    $region32: #{tpu_custom_call.1} parent=1 // pred_region
      _
    $region33: #{tpu_custom_call.1} parent=1 // pred_fallthru
      _
    // Predicated region
    $region34: #{tpu_custom_call.1} parent=1 // pred_check
      _
    $region35: #{tpu_custom_call.1} parent=1 // pred_check_branch
      %49 = sbr.rel (0) target = $region37
    $region36: #{tpu_custom_call.1} parent=1 // pred_region
      _
    $region37: #{tpu_custom_call.1} parent=1 // pred_fallthru
      _
    // Predicated region
    $region38: #{tpu_custom_call.1} parent=1 // pred_check
      _
    $region39: #{tpu_custom_call.1} parent=1 // pred_check_branch
      %51 = sbr.rel (0) target = $region41
    $region40: #{tpu_custom_call.1} parent=1 // pred_region
      _
    $region41: #{tpu_custom_call.1} parent=1 // pred_fallthru
      _
    // Predicated region
    $region42: #{tpu_custom_call.1} parent=1 // pred_check
      _
    $region43: #{tpu_custom_call.1} parent=1 // pred_check_branch
      %53 = sbr.rel (0) target = $region45
    $region44: #{tpu_custom_call.1} parent=1 // pred_region
      _
    $region45: #{tpu_custom_call.1} parent=1 // pred_fallthru
      _
    // Predicated region
    $region46: #{tpu_custom_call.1} parent=1 // pred_check
      _
    $region47: #{tpu_custom_call.1} parent=1 // pred_check_branch
      %55 = sbr.rel (0) target = $region49
    $region48: #{tpu_custom_call.1} parent=1 // pred_region
      _
    $region49: #{tpu_custom_call.1} parent=1 // pred_fallthru
      _
    // Predicated region
    $region50: #{tpu_custom_call.1} parent=1 // pred_check
      _
    $region51: #{tpu_custom_call.1} parent=1 // pred_check_branch
      %57 = sbr.rel (0) target = $region53
    $region52: #{tpu_custom_call.1} parent=1 // pred_region
      _
    $region53: #{tpu_custom_call.1} parent=1 // pred_fallthru
      _
    // Predicated region
    $region54: #{tpu_custom_call.1} parent=1 // pred_check
      _
    $region55: #{tpu_custom_call.1} parent=1 // pred_check_branch
      %59 = sbr.rel (0) target = $region57
    $region56: #{tpu_custom_call.1} parent=1 // pred_region
      _
    $region57: #{tpu_custom_call.1} parent=1 // pred_fallthru
      _
    // Predicated region
    $region58: #{tpu_custom_call.1} parent=1 // pred_check
      _
    $region59: #{tpu_custom_call.1} parent=1 // pred_check_branch
      %61 = sbr.rel (0) target = $region61
    $region60: #{tpu_custom_call.1} parent=1 // pred_region
      _
    $region61: #{tpu_custom_call.1} parent=1 // pred_fallthru
      _
    // Predicated region
    $region62: #{tpu_custom_call.1} parent=1 // pred_check
      _
    $region63: #{tpu_custom_call.1} parent=1 // pred_check_branch
      %63 = sbr.rel (0) target = $region65
    $region64: #{tpu_custom_call.1} parent=1 // pred_region
      _
    $region65: #{tpu_custom_call.1} parent=1 // pred_fallthru
      _
    // Predicated region
    $region66: #{tpu_custom_call.1} parent=1 // pred_check
      _
    $region67: #{tpu_custom_call.1} parent=1 // pred_check_branch
      %65 = sbr.rel (0) target = $region69
    $region68: #{tpu_custom_call.1} parent=1 // pred_region
      _
    $region69: #{tpu_custom_call.1} parent=1 // pred_fallthru
      _
    // Predicated region
    $region70: #{tpu_custom_call.1} parent=1 // pred_check
      _
    $region71: #{tpu_custom_call.1} parent=1 // pred_check_branch
      %67 = sbr.rel (0) target = $region73
    $region72: #{tpu_custom_call.1} parent=1 // pred_region
      _
    $region73: #{tpu_custom_call.1} parent=1 // pred_fallthru
      _
    // Predicated region
    $region74: #{tpu_custom_call.1} parent=1 // pred_check
      _
    $region75: #{tpu_custom_call.1} parent=1 // pred_check_branch
      %69 = sbr.rel (0) target = $region77
    $region76: #{tpu_custom_call.1} parent=1 // pred_region
      _
    $region77: #{tpu_custom_call.1} parent=1 // pred_fallthru
      _
    // Predicated region
    $region78: #{tpu_custom_call.1} parent=1 // pred_check
      _
    $region79: #{tpu_custom_call.1} parent=1 // pred_check_branch
      %71 = sbr.rel (0) target = $region81
    $region80: #{tpu_custom_call.1} parent=1 // pred_region
      _
    $region81: #{tpu_custom_call.1} parent=1 // pred_fallthru
      _
    // Predicated region
    $region82: #{tpu_custom_call.1} parent=1 // pred_check
      _
    $region83: #{tpu_custom_call.1} parent=1 // pred_check_branch
      %73 = sbr.rel (0) target = $region85
    $region84: #{tpu_custom_call.1} parent=1 // pred_region
      _
    $region85: #{tpu_custom_call.1} parent=1 // pred_fallthru
      _
    // Predicated region
    $region86: #{tpu_custom_call.1} parent=1 // pred_check
      _
    $region87: #{tpu_custom_call.1} parent=1 // pred_check_branch
      %75 = sbr.rel (0) target = $region89
    $region88: #{tpu_custom_call.1} parent=1 // pred_region
      _
    $region89: #{tpu_custom_call.1} parent=1 // pred_fallthru
      _
    // Predicated region
    $region90: #{tpu_custom_call.1} parent=1 // pred_check
      _
    $region91: #{tpu_custom_call.1} parent=1 // pred_check_branch
      %77 = sbr.rel (0) target = $region93
    $region92: #{tpu_custom_call.1} parent=1 // pred_region
      _
    $region93: #{tpu_custom_call.1} parent=1 // pred_fallthru
      _
    // Predicated region
    $region94: #{tpu_custom_call.1} parent=1 // pred_check
      _
    $region95: #{tpu_custom_call.1} parent=1 // pred_check_branch
      %79 = sbr.rel (0) target = $region97
    $region96: #{tpu_custom_call.1} parent=1 // pred_region
      _
    $region97: #{tpu_custom_call.1} parent=1 // pred_fallthru
      _
    %v81 = vld [vmem:[%s1] sm:$0x3]
    %v82 = vlaneseq
    %v83 = vand.u32 %v82, 127
    %vm84 = vcmp.eq.s32.totalorder %v83, 16
    %v85 = vsel %vm84, 1, 0
    %v86 = vcvt.s32.f32 %v85
    %v87 = vmax.f32 %v81, %v86
    %v88 = vsub.f32 %v87, 1.0
    %v89 = vmul.f32 %v88, 1e+30
    %v92 = vunpack.c.l.s4 1966171168
    %v93 = vunpack.c.0.s8 %v92
    %v94 = vlaneseq
    %v95 = vshrl.u32 %v94, 7
    %v96 = vsub.s32 %v93, %v95
    %v97 = vrot.slane %v89, %v96
    %v98 = vcombine.high %v97, %v97
    %v100 = vunpack.c.l.s4 1966171168
    %v101 = vunpack.c.0.s8 %v100
    %v102 = vlaneseq
    %v103 = vshrl.u32 %v102, 7
    %v104 = vsub.s32 %v101, %v103
    %v105 = vrot.slane %v97, %v104
    %v107 = vunpack.c.l.s4 1966171168
    %v108 = vunpack.c.0.s8 %v107
    %v109 = vlaneseq
    %v110 = vshrl.u32 %v109, 7
    %v111 = vsub.s32 %v108, %v110
    %v112 = vrot.slane %v98, %v111
    %v113 = vld [vmem:[%s0] sm:$0xff]
    %v114 = vld [vmem:[%s0 + $0x8] sm:$0xff]
    %v115 = vld [vmem:[%s0 + $0x10] sm:$0xff]
    %v116 = vld [vmem:[%s0 + $0x18] sm:$0xff]
    %v117 = vld [vmem:[%s0 + $0x20] sm:$0xff]
    %v118 = vld [vmem:[%s0 + $0x28] sm:$0xff]
    %v119 = vld [vmem:[%s3] sm:$0xf]
    %v120 = vld [vmem:[%s3 + $0x4] sm:$0xf]
    %v121 = vpack.c.bf16 %v114, %v113
    %v122 = vpack.c.bf16 %v116, %v115
    %v123 = vpack.c.bf16 %v118, %v117
    %v124 = vld [vmem:[%s4] sm:$0x1]
    %v126 = vlaneseq
    %v127 = vshrl.u32 %v126, 7
    %v128 = vsub.s32 0, %v127
    %v129 = vrot.slane %v124, %v128
    %v133 = vunpack.c.l.b16 %v119
    %v134 = vunpack.c.l.b16 %v120
    %v135 = vpack.c.b16 %v134, %v133
    %vm137 = vcmask 130048
    %v139 = vsel %vm137, %v121, 0
    %v142 = vsel %vm137, %v122, 0
    %v145 = vsel %vm137, %v123, 0
    %147 = vmatprep.subr.bf16.mxu0 0
    %148 = vmatpush1.bf16.msra.mxu0 0
    %149 = vmatprep.subr.bf16.mxu0 0
    %150 = vmatpush1.bf16.msra.mxu0 0
    %151 = vmatprep.subr.bf16.mxu0 0
    %152 = vmatpush1.bf16.msra.mxu0 0
    %153 = vmatprep.subr.bf16.mxu0 0
    %154 = vmatpush1.bf16.msra.mxu0 0
    %155 = vmatprep.subr.bf16.mxu0 0
    %156 = vmatpush1.bf16.msra.mxu0 0
    %157 = vmatprep.subr.bf16.mxu0 0
    %158 = vmatpush1.bf16.msra.mxu0 0
    %159 = vmatprep.subr.bf16.mxu0 0
    %160 = vmatpush1.bf16.msra.mxu0 0
    %161 = vmatprep.subr.bf16.mxu0 0
    %162 = vmatpush1.bf16.msra.mxu0 %v135
    %163 = vmatprep.subr.bf16.mxu0 0
    %164 = vmatpush2.bf16.msra.mxu0 0
    %165 = vmatprep.subr.bf16.mxu0 0
    %166 = vmatpush2.bf16.msra.mxu0 0
    %167 = vmatprep.subr.bf16.mxu0 0
    %168 = vmatpush2.bf16.msra.mxu0 0
    %169 = vmatprep.subr.bf16.mxu0 0
    %170 = vmatpush2.bf16.msra.mxu0 0
    %171 = vmatprep.subr.bf16.mxu0 0
    %172 = vmatpush2.bf16.msra.mxu0 0
    %173 = vmatprep.subr.bf16.mxu0 0
    %174 = vmatpush2.bf16.msra.mxu0 0
    %175 = vmatprep.subr.bf16.mxu0 0
    %176 = vmatpush2.bf16.msra.mxu0 0
    %177 = vmatprep.subr.bf16.mxu0 0
    %178 = vmatpush2.bf16.msra.mxu0 0
    %179 = vmatprep.mubr.bf16.mxu0 0
    %180 = vmatmul.mubr.bf16.gmra.mxu0 %v139
    %v181 = vpop.f32.mrf.mxu0
    %v182 = vadd.f32 %v129, %v181
    %v183 = vpop.f32.mrf.mxu0
    %v184 = vpop.f32.mrf.mxu0
    %v185 = vadd.f32 %v129, %v184
    %v186 = vpop.f32.mrf.mxu0
    %187 = vmatprep.mubr.bf16.mxu0 0
    %188 = vmatmul.mubr.bf16.gmra.mxu0 %v142
    %v189 = vpop.f32.mrf.mxu0
    %v190 = vadd.f32 %v129, %v189
    %v191 = vpop.f32.mrf.mxu0
    %v192 = vpop.f32.mrf.mxu0
    %v193 = vadd.f32 %v129, %v192
    %v194 = vpop.f32.mrf.mxu0
    %195 = vmatprep.mubr.bf16.mxu0 0
    %196 = vmatmul.mubr.bf16.gmra.mxu0 %v145
    %v197 = vpop.f32.mrf.mxu0
    %v198 = vadd.f32 %v129, %v197
    %v199 = vpop.f32.mrf.mxu0
    %v200 = vpop.f32.mrf.mxu0
    %v201 = vadd.f32 %v129, %v200
    %v202 = vpop.f32.mrf.mxu0
    %203 = vdwg.mxu0
    %v204 = vmax.f32 %v182, 0.0
    %v205 = vmax.f32 %v185, 0.0
    %v206 = vmax.f32 %v190, 0.0
    %v207 = vmax.f32 %v193, 0.0
    %v208 = vmax.f32 %v198, 0.0
    %v209 = vmax.f32 %v201, 0.0
    %v210 = vld [vmem:[%s5] sm:$0xf]
    %v211 = vld [vmem:[%s5 + $0x4] sm:$0xf]
    %v212 = vld [vmem:[%s5 + $0x8] sm:$0xf]
    %v213 = vld [vmem:[%s5 + $0xc] sm:$0xf]
    %v214 = vld [vmem:[%s5 + $0x10] sm:$0xf]
    %v215 = vld [vmem:[%s5 + $0x14] sm:$0xf]
    %v216 = vld [vmem:[%s5 + $0x18] sm:$0xf]
    %v217 = vld [vmem:[%s5 + $0x1c] sm:$0xf]
    %v218 = vpack.c.bf16 %v205, %v204
    %v219 = vpack.c.bf16 %v207, %v206
    %v220 = vpack.c.bf16 %v209, %v208
    %v221 = vld [vmem:[%s6] sm:$0x1]
    %v223 = vlaneseq
    %v224 = vshrl.u32 %v223, 7
    %v225 = vsub.s32 0, %v224
    %v226 = vrot.slane %v221, %v225
    %v236 = vunpack.c.l.b16 %v210
    %v237 = vunpack.c.l.b16 %v211
    %v238 = vunpack.c.l.b16 %v212
    %v239 = vunpack.c.l.b16 %v213
    %v240 = vunpack.c.l.b16 %v214
    %v241 = vunpack.c.l.b16 %v215
    %v242 = vunpack.c.l.b16 %v216
    %v243 = vunpack.c.l.b16 %v217
    %v244 = vpack.c.b16 %v237, %v236
    %v245 = vpack.c.b16 %v239, %v238
    %v246 = vpack.c.b16 %v241, %v240
    %v247 = vpack.c.b16 %v243, %v242
    %vm252 = vcmask 523264
    %v254 = vsel %vm252, %v218, 0
    %v257 = vsel %vm252, %v219, 0
    %v260 = vsel %vm252, %v220, 0
    %262 = vmatprep.subr.bf16.mxu0 0
    %263 = vmatpush1.bf16.msra.mxu0 0
    %264 = vmatprep.subr.bf16.mxu0 0
    %265 = vmatpush1.bf16.msra.mxu0 0
    %266 = vmatprep.subr.bf16.mxu0 0
    %267 = vmatpush1.bf16.msra.mxu0 0
    %268 = vmatprep.subr.bf16.mxu0 0
    %269 = vmatpush1.bf16.msra.mxu0 0
    %270 = vmatprep.subr.bf16.mxu0 0
    %271 = vmatpush1.bf16.msra.mxu0 %v247
    %272 = vmatprep.subr.bf16.mxu0 0
    %273 = vmatpush1.bf16.msra.mxu0 %v246
    %274 = vmatprep.subr.bf16.mxu0 0
    %275 = vmatpush1.bf16.msra.mxu0 %v245
    %276 = vmatprep.subr.bf16.mxu0 0
    %277 = vmatpush1.bf16.msra.mxu0 %v244
    %278 = vmatprep.subr.bf16.mxu0 0
    %279 = vmatpush2.bf16.msra.mxu0 0
    %280 = vmatprep.subr.bf16.mxu0 0
    %281 = vmatpush2.bf16.msra.mxu0 0
    %282 = vmatprep.subr.bf16.mxu0 0
    %283 = vmatpush2.bf16.msra.mxu0 0
    %284 = vmatprep.subr.bf16.mxu0 0
    %285 = vmatpush2.bf16.msra.mxu0 0
    %286 = vmatprep.subr.bf16.mxu0 0
    %287 = vmatpush2.bf16.msra.mxu0 0
    %288 = vmatprep.subr.bf16.mxu0 0
    %289 = vmatpush2.bf16.msra.mxu0 0
    %290 = vmatprep.subr.bf16.mxu0 0
    %291 = vmatpush2.bf16.msra.mxu0 0
    %292 = vmatprep.subr.bf16.mxu0 0
    %293 = vmatpush2.bf16.msra.mxu0 0
    %294 = vmatprep.mubr.bf16.mxu0 0
    %295 = vmatmul.mubr.bf16.gmra.mxu0 %v254
    %v296 = vpop.f32.mrf.mxu0
    %v297 = vadd.f32 %v226, %v296
    %v298 = vpop.f32.mrf.mxu0
    %v299 = vpop.f32.mrf.mxu0
    %v300 = vadd.f32 %v226, %v299
    %v301 = vpop.f32.mrf.mxu0
    %302 = vmatprep.mubr.bf16.mxu0 0
    %303 = vmatmul.mubr.bf16.gmra.mxu0 %v257
    %v304 = vpop.f32.mrf.mxu0
    %v305 = vadd.f32 %v226, %v304
    %v306 = vpop.f32.mrf.mxu0
    %v307 = vpop.f32.mrf.mxu0
    %v308 = vadd.f32 %v226, %v307
    %v309 = vpop.f32.mrf.mxu0
    %310 = vmatprep.mubr.bf16.mxu0 0
    %311 = vmatmul.mubr.bf16.gmra.mxu0 %v260
    %v312 = vpop.f32.mrf.mxu0
    %v313 = vadd.f32 %v226, %v312
    %v314 = vpop.f32.mrf.mxu0
    %v315 = vpop.f32.mrf.mxu0
    %v316 = vadd.f32 %v226, %v315
    %v317 = vpop.f32.mrf.mxu0
    %318 = vdwg.mxu0
    %v319 = vld [vmem:[%s2] sm:$0x3]
    %v320 = vld [vmem:[%s7] sm:$0xf]
    %v321 = vld [vmem:[%s7 + $0x4] sm:$0xf]
    %v322 = vpack.c.bf16 %v319, %v319
    %v323 = vld [vmem:[%s8] sm:$0x1]
    %v325 = vlaneseq
    %v326 = vshrl.u32 %v325, 7
    %v327 = vsub.s32 0, %v326
    %v328 = vrot.slane %v323, %v327
    %v332 = vunpack.c.l.b16 %v320
    %v333 = vunpack.c.l.b16 %v321
    %v334 = vpack.c.b16 %v333, %v332
    %v337 = vsel %vm137, %v322, 0
    %339 = vmatprep.subr.bf16.mxu0 0
    %340 = vmatpush1.bf16.msra.mxu0 0
    %341 = vmatprep.subr.bf16.mxu0 0
    %342 = vmatpush1.bf16.msra.mxu0 0
    %343 = vmatprep.subr.bf16.mxu0 0
    %344 = vmatpush1.bf16.msra.mxu0 0
    %345 = vmatprep.subr.bf16.mxu0 0
    %346 = vmatpush1.bf16.msra.mxu0 0
    %347 = vmatprep.subr.bf16.mxu0 0
    %348 = vmatpush1.bf16.msra.mxu0 0
    %349 = vmatprep.subr.bf16.mxu0 0
    %350 = vmatpush1.bf16.msra.mxu0 0
    %351 = vmatprep.subr.bf16.mxu0 0
    %352 = vmatpush1.bf16.msra.mxu0 0
    %353 = vmatprep.subr.bf16.mxu0 0
    %354 = vmatpush1.bf16.msra.mxu0 %v334
    %355 = vmatprep.subr.bf16.mxu0 0
    %356 = vmatpush2.bf16.msra.mxu0 0
    %357 = vmatprep.subr.bf16.mxu0 0
    %358 = vmatpush2.bf16.msra.mxu0 0
    %359 = vmatprep.subr.bf16.mxu0 0
    %360 = vmatpush2.bf16.msra.mxu0 0
    %361 = vmatprep.subr.bf16.mxu0 0
    %362 = vmatpush2.bf16.msra.mxu0 0
    %363 = vmatprep.subr.bf16.mxu0 0
    %364 = vmatpush2.bf16.msra.mxu0 0
    %365 = vmatprep.subr.bf16.mxu0 0
    %366 = vmatpush2.bf16.msra.mxu0 0
    %367 = vmatprep.subr.bf16.mxu0 0
    %368 = vmatpush2.bf16.msra.mxu0 0
    %369 = vmatprep.subr.bf16.mxu0 0
    %370 = vmatpush2.bf16.msra.mxu0 0
    %371 = vmatprep.mubr.bf16.mxu0 0
    %372 = vmatmul.mubr.bf16.gmra.mxu0 %v337
    %v373 = vpop.f32.mrf.mxu0
    %v374 = vadd.f32 %v328, %v373
    %v375 = vpop.f32.mrf.mxu0
    %v376 = vpop.f32.mrf.mxu0
    %v377 = vpop.f32.mrf.mxu0
    %378 = vdwg.mxu0
    %v379 = vmax.f32 %v374, 0.0
    %v380 = vld [vmem:[%s9] sm:$0xf]
    %v381 = vld [vmem:[%s9 + $0x4] sm:$0xf]
    %v382 = vld [vmem:[%s9 + $0x8] sm:$0xf]
    %v383 = vld [vmem:[%s9 + $0xc] sm:$0xf]
    %v384 = vld [vmem:[%s9 + $0x10] sm:$0xf]
    %v385 = vld [vmem:[%s9 + $0x14] sm:$0xf]
    %v386 = vld [vmem:[%s9 + $0x18] sm:$0xf]
    %v387 = vld [vmem:[%s9 + $0x1c] sm:$0xf]
    %v388 = vpack.c.bf16 %v379, %v379
    %v389 = vld [vmem:[%s10] sm:$0x1]
    %v391 = vlaneseq
    %v392 = vshrl.u32 %v391, 7
    %v393 = vsub.s32 0, %v392
    %v394 = vrot.slane %v389, %v393
    %v404 = vunpack.c.l.b16 %v380
    %v405 = vunpack.c.l.b16 %v381
    %v406 = vunpack.c.l.b16 %v382
    %v407 = vunpack.c.l.b16 %v383
    %v408 = vunpack.c.l.b16 %v384
    %v409 = vunpack.c.l.b16 %v385
    %v410 = vunpack.c.l.b16 %v386
    %v411 = vunpack.c.l.b16 %v387
    %v412 = vpack.c.b16 %v405, %v404
    %v413 = vpack.c.b16 %v407, %v406
    %v414 = vpack.c.b16 %v409, %v408
    %v415 = vpack.c.b16 %v411, %v410
    %v421 = vsel %vm252, %v388, 0
    %423 = vmatprep.subr.bf16.mxu0 0
    %424 = vmatpush1.bf16.msra.mxu0 0
    %425 = vmatprep.subr.bf16.mxu0 0
    %426 = vmatpush1.bf16.msra.mxu0 0
    %427 = vmatprep.subr.bf16.mxu0 0
    %428 = vmatpush1.bf16.msra.mxu0 0
    %429 = vmatprep.subr.bf16.mxu0 0
    %430 = vmatpush1.bf16.msra.mxu0 0
    %431 = vmatprep.subr.bf16.mxu0 0
    %432 = vmatpush1.bf16.msra.mxu0 %v415
    %433 = vmatprep.subr.bf16.mxu0 0
    %434 = vmatpush1.bf16.msra.mxu0 %v414
    %435 = vmatprep.subr.bf16.mxu0 0
    %436 = vmatpush1.bf16.msra.mxu0 %v413
    %437 = vmatprep.subr.bf16.mxu0 0
    %438 = vmatpush1.bf16.msra.mxu0 %v412
    %439 = vmatprep.subr.bf16.mxu0 0
    %440 = vmatpush2.bf16.msra.mxu0 0
    %441 = vmatprep.subr.bf16.mxu0 0
    %442 = vmatpush2.bf16.msra.mxu0 0
    %443 = vmatprep.subr.bf16.mxu0 0
    %444 = vmatpush2.bf16.msra.mxu0 0
    %445 = vmatprep.subr.bf16.mxu0 0
    %446 = vmatpush2.bf16.msra.mxu0 0
    %447 = vmatprep.subr.bf16.mxu0 0
    %448 = vmatpush2.bf16.msra.mxu0 0
    %449 = vmatprep.subr.bf16.mxu0 0
    %450 = vmatpush2.bf16.msra.mxu0 0
    %451 = vmatprep.subr.bf16.mxu0 0
    %452 = vmatpush2.bf16.msra.mxu0 0
    %453 = vmatprep.subr.bf16.mxu0 0
    %454 = vmatpush2.bf16.msra.mxu0 0
    %455 = vmatprep.mubr.bf16.mxu0 0
    %456 = vmatmul.mubr.bf16.gmra.mxu0 %v421
    %v457 = vpop.f32.mrf.mxu0
    %v458 = vadd.f32 %v394, %v457
    %v459 = vpop.f32.mrf.mxu0
    %v460 = vpop.f32.mrf.mxu0
    %v461 = vpop.f32.mrf.mxu0
    %462 = vdwg.mxu0
    %v463 = vlaneseq
    %v464 = vshrl.u32 %v463, 7
    %v465 = vadd.s32 %v464, 8
    %v466 = vadd.s32 %v464, 16
    %vm467 = vcmp.eq.s32.totalorder %v464, 16
    %vm468 = vcmp.eq.s32.totalorder %v465, 16
    %vm469 = vcmp.eq.s32.totalorder %v466, 16
    %v470 = vsel %vm467, 1, 0
    %v471 = vsel %vm468, 1, 0
    %v472 = vsel %vm469, 1, 0
    %v473 = vcvt.s32.f32 %v470
    %v474 = vcvt.s32.f32 %v471
    %v475 = vcvt.s32.f32 %v472
    %v476 = vsub.f32 1.0, %v473
    %v477 = vsub.f32 1.0, %v474
    %v478 = vsub.f32 1.0, %v475
    %v479 = vmul.f32 %v297, %v476
    %v480 = vmul.f32 %v300, %v477
    %v481 = vmul.f32 %v305, %v478
    %v482 = vmul.f32 %v308, %v476
    %v483 = vmul.f32 %v313, %v477
    %v484 = vmul.f32 %v316, %v478
    %v487 = vunpack.c.l.s4 1966171168
    %v488 = vunpack.c.0.s8 %v487
    %v489 = vlaneseq
    %v490 = vshrl.u32 %v489, 7
    %v491 = vsub.s32 %v488, %v490
    %v492 = vrot.slane %v458, %v491
    %v493 = vcombine.high %v492, %v492
    %v495 = vunpack.c.l.s4 1966171168
    %v496 = vunpack.c.0.s8 %v495
    %v497 = vlaneseq
    %v498 = vshrl.u32 %v497, 7
    %v499 = vsub.s32 %v496, %v498
    %v500 = vrot.slane %v492, %v499
    %v502 = vunpack.c.l.s4 1966171168
    %v503 = vunpack.c.0.s8 %v502
    %v504 = vlaneseq
    %v505 = vshrl.u32 %v504, 7
    %v506 = vsub.s32 %v503, %v505
    %v507 = vrot.slane %v493, %v506
    %v508 = vlaneseq
    %v509 = vshrl.u32 %v508, 7
    %v510 = vsub.s32 0, %v509
    %v511 = vrot.slane %v500, %v510
    %v512 = vlaneseq
    %v513 = vshrl.u32 %v512, 7
    %v514 = vsub.s32 0, %v513
    %v515 = vrot.slane %v507, %v514
    %v518 = vmul.f32 %v511, %v473
    %v519 = vmul.f32 %v511, %v474
    %v520 = vmul.f32 %v511, %v475
    %v521 = vmul.f32 %v515, %v473
    %v522 = vmul.f32 %v515, %v474
    %v523 = vmul.f32 %v515, %v475
    %v524 = vadd.f32 %v479, %v518
    %v525 = vadd.f32 %v480, %v519
    %v526 = vadd.f32 %v481, %v520
    %v527 = vadd.f32 %v482, %v521
    %v528 = vadd.f32 %v483, %v522
    %v529 = vadd.f32 %v484, %v523
    %v530 = vld [vmem:[%s11] sm:$0xf]
    %v531 = vsel %vm252, %v524, 0.0
    %532 = vadd.xlane.f32.xlu0 %v531
    %v533 = vpop.xlane.xlu0 %532
    %v534 = vsel %vm252, %v525, 0.0
    %535 = vadd.xlane.f32.xlu0 %v534
    %v536 = vpop.xlane.xlu0 %535
    %v537 = vsel %vm252, %v526, 0.0
    %538 = vadd.xlane.f32.xlu0 %v537
    %v539 = vpop.xlane.xlu0 %538
    %v540 = vsel %vm252, %v527, 0.0
    %541 = vadd.xlane.f32.xlu0 %v540
    %v542 = vpop.xlane.xlu0 %541
    %v543 = vsel %vm252, %v528, 0.0
    %544 = vadd.xlane.f32.xlu0 %v543
    %v545 = vpop.xlane.xlu0 %544
    %v546 = vsel %vm252, %v529, 0.0
    %547 = vadd.xlane.f32.xlu0 %v546
    %v548 = vpop.xlane.xlu0 %547
    %v549 = vrcp.pop 64.0
    %v550 = vmul.f32 %v533, %v549
    %v551 = vmul.f32 %v536, %v549
    %v552 = vmul.f32 %v539, %v549
    %v553 = vmul.f32 %v542, %v549
    %v554 = vmul.f32 %v545, %v549
    %v555 = vmul.f32 %v548, %v549
    %v556 = vsub.f32 %v524, %v550
    %v557 = vsub.f32 %v525, %v551
    %v558 = vsub.f32 %v526, %v552
    %v559 = vsub.f32 %v527, %v553
    %v560 = vsub.f32 %v528, %v554
    %v561 = vsub.f32 %v529, %v555
    %v562 = vmul.f32 %v556, %v556
    %v563 = vmul.f32 %v557, %v557
    %v564 = vmul.f32 %v558, %v558
    %v565 = vmul.f32 %v559, %v559
    %v566 = vmul.f32 %v560, %v560
    %v567 = vmul.f32 %v561, %v561
    %v568 = vsel %vm252, %v562, 0.0
    %569 = vadd.xlane.f32.xlu0 %v568
    %v570 = vpop.xlane.xlu0 %569
    %v571 = vsel %vm252, %v563, 0.0
    %572 = vadd.xlane.f32.xlu0 %v571
    %v573 = vpop.xlane.xlu0 %572
    %v574 = vsel %vm252, %v564, 0.0
    %575 = vadd.xlane.f32.xlu0 %v574
    %v576 = vpop.xlane.xlu0 %575
    %v577 = vsel %vm252, %v565, 0.0
    %578 = vadd.xlane.f32.xlu0 %v577
    %v579 = vpop.xlane.xlu0 %578
    %v580 = vsel %vm252, %v566, 0.0
    %581 = vadd.xlane.f32.xlu0 %v580
    %v582 = vpop.xlane.xlu0 %581
    %v583 = vsel %vm252, %v567, 0.0
    %584 = vadd.xlane.f32.xlu0 %v583
    %v585 = vpop.xlane.xlu0 %584
    %v586 = vmul.f32 %v570, %v549
    %v587 = vmul.f32 %v573, %v549
    %v588 = vmul.f32 %v576, %v549
    %v589 = vmul.f32 %v579, %v549
    %v590 = vmul.f32 %v582, %v549
    %v591 = vmul.f32 %v585, %v549
    %v592 = vadd.f32 %v586, 1e-05
    %v593 = vadd.f32 %v587, 1e-05
    %v594 = vadd.f32 %v588, 1e-05
    %v595 = vadd.f32 %v589, 1e-05
    %v596 = vadd.f32 %v590, 1e-05
    %v597 = vadd.f32 %v591, 1e-05
    %v598 = vrsqrt.pop %v592
    %v599 = vrsqrt.pop %v593
    %v600 = vrsqrt.pop %v594
    %v601 = vrsqrt.pop %v595
    %v602 = vrsqrt.pop %v596
    %v603 = vrsqrt.pop %v597
    %v604 = vmul.f32 %v556, %v598
    %v605 = vmul.f32 %v557, %v599
    %v606 = vmul.f32 %v558, %v600
    %v607 = vmul.f32 %v559, %v601
    %v608 = vmul.f32 %v560, %v602
    %v609 = vmul.f32 %v561, %v603
    %v610 = vlaneseq
    %v611 = vshrl.u32 %v610, 7
    %v612 = vsub.s32 0, %v611
    %v613 = vrot.slane %v530, %v612
    %v614 = vmul.f32 %v604, %v613
    %v615 = vmul.f32 %v605, %v613
    %v616 = vmul.f32 %v606, %v613
    %v617 = vmul.f32 %v607, %v613
    %v618 = vmul.f32 %v608, %v613
    %v619 = vmul.f32 %v609, %v613
    %v620 = vlaneseq
    %v621 = vshrl.u32 %v620, 7
    %v622 = vsub.s32 1, %v621
    %v623 = vrot.slane %v530, %v622
    %v624 = vadd.f32 %v614, %v623
    %v625 = vadd.f32 %v615, %v623
    %v626 = vadd.f32 %v616, %v623
    %v627 = vadd.f32 %v617, %v623
    %v628 = vadd.f32 %v618, %v623
    %v629 = vadd.f32 %v619, %v623
    %v630 = vld [vmem:[%s12] sm:$0xff]
    %v631 = vld [vmem:[%s12 + $0x8] sm:$0xff]
    %v632 = vld [vmem:[%s12 + $0x10] sm:$0xff]
    %v633 = vld [vmem:[%s12 + $0x18] sm:$0xff]
    %v634 = vld [vmem:[%s12 + $0x20] sm:$0xff]
    %v635 = vld [vmem:[%s12 + $0x28] sm:$0xff]
    %v636 = vld [vmem:[%s12 + $0x30] sm:$0xff]
    %v637 = vld [vmem:[%s12 + $0x38] sm:$0xff]
    %v638 = vpack.c.bf16 %v625, %v624
    %v639 = vpack.c.bf16 %v627, %v626
    %v640 = vpack.c.bf16 %v629, %v628
    %v641 = vld [vmem:[%s13] sm:$0x3]
    %v643 = vlaneseq
    %v644 = vshrl.u32 %v643, 7
    %v645 = vsub.s32 0, %v644
    %v646 = vrot.slane %v641, %v645
    %v647 = vlaneseq
    %v648 = vshrl.u32 %v647, 7
    %v649 = vsub.s32 1, %v648
    %v650 = vrot.slane %v641, %v649
    %v661 = vunpack.c.l.b16 %v630
    %v662 = vunpack.c.h.b16 %v630
    %v663 = vunpack.c.l.b16 %v631
    %v664 = vunpack.c.h.b16 %v631
    %v665 = vunpack.c.l.b16 %v632
    %v666 = vunpack.c.h.b16 %v632
    %v667 = vunpack.c.l.b16 %v633
    %v668 = vunpack.c.h.b16 %v633
    %v669 = vunpack.c.l.b16 %v634
    %v670 = vunpack.c.h.b16 %v634
    %v671 = vunpack.c.l.b16 %v635
    %v672 = vunpack.c.h.b16 %v635
    %v673 = vunpack.c.l.b16 %v636
    %v674 = vunpack.c.h.b16 %v636
    %v675 = vunpack.c.l.b16 %v637
    %v676 = vunpack.c.h.b16 %v637
    %v677 = vpack.c.b16 %v663, %v661
    %v678 = vpack.c.b16 %v664, %v662
    %v679 = vpack.c.b16 %v667, %v665
    %v680 = vpack.c.b16 %v668, %v666
    %v681 = vpack.c.b16 %v671, %v669
    %v682 = vpack.c.b16 %v672, %v670
    %v683 = vpack.c.b16 %v675, %v673
    %v684 = vpack.c.b16 %v676, %v674
    %v694 = vsel %vm252, %v638, 0
    %v697 = vsel %vm252, %v639, 0
    %v700 = vsel %vm252, %v640, 0
    %702 = vmatprep.subr.bf16.mxu0 0
    %703 = vmatpush1.bf16.msra.mxu0 0
    %704 = vmatprep.subr.bf16.mxu0 0
    %705 = vmatpush1.bf16.msra.mxu0 0
    %706 = vmatprep.subr.bf16.mxu0 0
    %707 = vmatpush1.bf16.msra.mxu0 0
    %708 = vmatprep.subr.bf16.mxu0 0
    %709 = vmatpush1.bf16.msra.mxu0 0
    %710 = vmatprep.subr.bf16.mxu0 %v684
    %711 = vmatpush1.bf16.msra.mxu0 %v683
    %712 = vmatprep.subr.bf16.mxu0 %v682
    %713 = vmatpush1.bf16.msra.mxu0 %v681
    %714 = vmatprep.subr.bf16.mxu0 %v680
    %715 = vmatpush1.bf16.msra.mxu0 %v679
    %716 = vmatprep.subr.bf16.mxu0 %v678
    %717 = vmatpush1.bf16.msra.mxu0 %v677
    %718 = vmatprep.subr.bf16.mxu0 0
    %719 = vmatpush2.bf16.msra.mxu0 0
    %720 = vmatprep.subr.bf16.mxu0 0
    %721 = vmatpush2.bf16.msra.mxu0 0
    %722 = vmatprep.subr.bf16.mxu0 0
    %723 = vmatpush2.bf16.msra.mxu0 0
    %724 = vmatprep.subr.bf16.mxu0 0
    %725 = vmatpush2.bf16.msra.mxu0 0
    %726 = vmatprep.subr.bf16.mxu0 0
    %727 = vmatpush2.bf16.msra.mxu0 0
    %728 = vmatprep.subr.bf16.mxu0 0
    %729 = vmatpush2.bf16.msra.mxu0 0
    %730 = vmatprep.subr.bf16.mxu0 0
    %731 = vmatpush2.bf16.msra.mxu0 0
    %732 = vmatprep.subr.bf16.mxu0 0
    %733 = vmatpush2.bf16.msra.mxu0 0
    %734 = vmatprep.mubr.bf16.mxu0 0
    %735 = vmatmul.mubr.bf16.gmra.mxu0 %v694
    %v736 = vpop.f32.mrf.mxu0
    %v737 = vadd.f32 %v646, %v736
    %v738 = vpop.f32.mrf.mxu0
    %v739 = vadd.f32 %v650, %v738
    %v740 = vpop.f32.mrf.mxu0
    %v741 = vadd.f32 %v646, %v740
    %v742 = vpop.f32.mrf.mxu0
    %v743 = vadd.f32 %v650, %v742
    %744 = vmatprep.mubr.bf16.mxu0 0
    %745 = vmatmul.mubr.bf16.gmra.mxu0 %v697
    %v746 = vpop.f32.mrf.mxu0
    %v747 = vadd.f32 %v646, %v746
    %v748 = vpop.f32.mrf.mxu0
    %v749 = vadd.f32 %v650, %v748
    %v750 = vpop.f32.mrf.mxu0
    %v751 = vadd.f32 %v646, %v750
    %v752 = vpop.f32.mrf.mxu0
    %v753 = vadd.f32 %v650, %v752
    %754 = vmatprep.mubr.bf16.mxu0 0
    %755 = vmatmul.mubr.bf16.gmra.mxu0 %v700
    %v756 = vpop.f32.mrf.mxu0
    %v757 = vadd.f32 %v646, %v756
    %v758 = vpop.f32.mrf.mxu0
    %v759 = vadd.f32 %v650, %v758
    %v760 = vpop.f32.mrf.mxu0
    %v761 = vadd.f32 %v646, %v760
    %v762 = vpop.f32.mrf.mxu0
    %v763 = vadd.f32 %v650, %v762
    %764 = vdwg.mxu0
    %v765 = vpack.c.bf16 %v741, %v737
    %v766 = vpack.c.bf16 %v747, %v747
    %v767 = vpack.c.bf16 %v757, %v751
    %v768 = vpack.c.bf16 %v761, %v761
    %v769 = vpack.c.bf16 %v743, %v739
    %v770 = vpack.c.bf16 %v749, %v749
    %v771 = vpack.c.bf16 %v759, %v753
    %v772 = vpack.c.bf16 %v763, %v763
    %775 = vrot.lane.b32.xlu0 %v765, 64
    %v776 = vpop.permute.xlu0 %775
    %777 = vrot.lane.b32.xlu0 %v766, 64
    %v778 = vpop.permute.xlu0 %777
    %vm779 = vcmask 261120
    %v781 = vsel %vm779, %v765, 0
    %v784 = vsel %vm779, %v766, 0
    %v787 = vsel %vm779, %v776, 0
    %v790 = vsel %vm779, %v778, 0
    %792 = vmatprep.subr.bf16.mxu0 0
    %793 = vmatpush1.bf16.xpose.msra.mxu0 0
    %794 = vmatprep.subr.bf16.mxu0 0
    %795 = vmatpush1.bf16.xpose.msra.mxu0 0
    %796 = vmatprep.subr.bf16.mxu0 0
    %797 = vmatpush1.bf16.xpose.msra.mxu0 0
    %798 = vmatprep.subr.bf16.mxu0 0
    %799 = vmatpush1.bf16.xpose.msra.mxu0 0
    %800 = vmatprep.subr.bf16.mxu0 0
    %801 = vmatpush1.bf16.xpose.msra.mxu0 0
    %802 = vmatprep.subr.bf16.mxu0 0
    %803 = vmatpush1.bf16.xpose.msra.mxu0 0
    %804 = vmatprep.subr.bf16.mxu0 0
    %805 = vmatpush1.bf16.xpose.msra.mxu0 %v790
    %806 = vmatprep.subr.bf16.mxu0 0
    %807 = vmatpush1.bf16.xpose.msra.mxu0 %v787
    %808 = vmatprep.subr.bf16.mxu0 0
    %809 = vmatpush2.bf16.xpose.msra.mxu0 0
    %810 = vmatprep.subr.bf16.mxu0 0
    %811 = vmatpush2.bf16.xpose.msra.mxu0 0
    %812 = vmatprep.subr.bf16.mxu0 0
    %813 = vmatpush2.bf16.xpose.msra.mxu0 0
    %814 = vmatprep.subr.bf16.mxu0 0
    %815 = vmatpush2.bf16.xpose.msra.mxu0 0
    %816 = vmatprep.subr.bf16.mxu0 0
    %817 = vmatpush2.bf16.xpose.msra.mxu0 0
    %818 = vmatprep.subr.bf16.mxu0 0
    %819 = vmatpush2.bf16.xpose.msra.mxu0 0
    %820 = vmatprep.subr.bf16.mxu0 0
    %821 = vmatpush2.bf16.xpose.msra.mxu0 0
    %822 = vmatprep.subr.bf16.mxu0 0
    %823 = vmatpush2.bf16.xpose.msra.mxu0 0
    %824 = vmatprep.mubr.bf16.mxu0 0
    %825 = vmatmul.mubr.bf16.gmra.mxu0 %v781
    %v826 = vpop.f32.mrf.mxu0
    %v827 = vadd.f32 0.0, %v826
    %v828 = vpop.f32.mrf.mxu0
    %v829 = vpop.f32.mrf.mxu0
    %v830 = vadd.f32 0.0, %v829
    %v831 = vpop.f32.mrf.mxu0
    %832 = vmatprep.mubr.bf16.mxu0 0
    %833 = vmatmul.mubr.bf16.gmra.mxu0 %v784
    %v834 = vpop.f32.mrf.mxu0
    %v835 = vadd.f32 0.0, %v834
    %v836 = vpop.f32.mrf.mxu0
    %v837 = vpop.f32.mrf.mxu0
    %v838 = vpop.f32.mrf.mxu0
    %839 = vdwg.mxu0
    %842 = vrot.lane.b32.xlu0 %v767, 64
    %v843 = vpop.permute.xlu0 %842
    %844 = vrot.lane.b32.xlu0 %v768, 64
    %v845 = vpop.permute.xlu0 %844
    %v847 = vsel %vm779, %v767, 0
    %v850 = vsel %vm779, %v768, 0
    %v853 = vsel %vm779, %v843, 0
    %v856 = vsel %vm779, %v845, 0
    %858 = vmatprep.subr.bf16.mxu0 0
    %859 = vmatpush1.bf16.xpose.msra.mxu0 0
    %860 = vmatprep.subr.bf16.mxu0 0
    %861 = vmatpush1.bf16.xpose.msra.mxu0 0
    %862 = vmatprep.subr.bf16.mxu0 0
    %863 = vmatpush1.bf16.xpose.msra.mxu0 0
    %864 = vmatprep.subr.bf16.mxu0 0
    %865 = vmatpush1.bf16.xpose.msra.mxu0 0
    %866 = vmatprep.subr.bf16.mxu0 0
    %867 = vmatpush1.bf16.xpose.msra.mxu0 0
    %868 = vmatprep.subr.bf16.mxu0 0
    %869 = vmatpush1.bf16.xpose.msra.mxu0 0
    %870 = vmatprep.subr.bf16.mxu0 0
    %871 = vmatpush1.bf16.xpose.msra.mxu0 %v856
    %872 = vmatprep.subr.bf16.mxu0 0
    %873 = vmatpush1.bf16.xpose.msra.mxu0 %v853
    %874 = vmatprep.subr.bf16.mxu0 0
    %875 = vmatpush2.bf16.xpose.msra.mxu0 0
    %876 = vmatprep.subr.bf16.mxu0 0
    %877 = vmatpush2.bf16.xpose.msra.mxu0 0
    %878 = vmatprep.subr.bf16.mxu0 0
    %879 = vmatpush2.bf16.xpose.msra.mxu0 0
    %880 = vmatprep.subr.bf16.mxu0 0
    %881 = vmatpush2.bf16.xpose.msra.mxu0 0
    %882 = vmatprep.subr.bf16.mxu0 0
    %883 = vmatpush2.bf16.xpose.msra.mxu0 0
    %884 = vmatprep.subr.bf16.mxu0 0
    %885 = vmatpush2.bf16.xpose.msra.mxu0 0
    %886 = vmatprep.subr.bf16.mxu0 0
    %887 = vmatpush2.bf16.xpose.msra.mxu0 0
    %888 = vmatprep.subr.bf16.mxu0 0
    %889 = vmatpush2.bf16.xpose.msra.mxu0 0
    %890 = vmatprep.mubr.bf16.mxu0 0
    %891 = vmatmul.mubr.bf16.gmra.mxu0 %v847
    %v892 = vpop.f32.mrf.mxu0
    %v893 = vadd.f32 0.0, %v892
    %v894 = vpop.f32.mrf.mxu0
    %v895 = vpop.f32.mrf.mxu0
    %v896 = vadd.f32 0.0, %v895
    %v897 = vpop.f32.mrf.mxu0
    %898 = vmatprep.mubr.bf16.mxu0 0
    %899 = vmatmul.mubr.bf16.gmra.mxu0 %v850
    %v900 = vpop.f32.mrf.mxu0
    %v901 = vadd.f32 0.0, %v900
    %v902 = vpop.f32.mrf.mxu0
    %v903 = vpop.f32.mrf.mxu0
    %v904 = vpop.f32.mrf.mxu0
    %905 = vdwg.mxu0
    %v906 = vmul.f32 %v827, 0.17677669
    %v907 = vmul.f32 %v830, 0.17677669
    %v908 = vmul.f32 %v835, 0.17677669
    %v909 = vmul.f32 %v893, 0.17677669
    %v910 = vmul.f32 %v896, 0.17677669
    %v911 = vmul.f32 %v901, 0.17677669
    %v912 = vlaneseq
    %v913 = vshrl.u32 %v912, 7
    %v914 = vsub.s32 0, %v913
    %v915 = vrot.slane %v105, %v914
    %v916 = vlaneseq
    %v917 = vshrl.u32 %v916, 7
    %v918 = vsub.s32 0, %v917
    %v919 = vrot.slane %v112, %v918
    %v922 = vadd.f32 %v906, %v915
    %v923 = vadd.f32 %v907, %v915
    %v924 = vadd.f32 %v908, %v915
    %v925 = vadd.f32 %v909, %v919
    %v926 = vadd.f32 %v910, %v919
    %v927 = vadd.f32 %v911, %v919
    %vm928 = vcmask 195584
    %v929 = vsel %vm928, %v922, -inf
    %930 = vmax.xlane.f32.xlu0 %v929
    %v931 = vpop.xlane.xlu0 %930
    %v932 = vsel %vm928, %v923, -inf
    %933 = vmax.xlane.f32.xlu0 %v932
    %v934 = vpop.xlane.xlu0 %933
    %v935 = vsel %vm928, %v924, -inf
    %936 = vmax.xlane.f32.xlu0 %v935
    %v937 = vpop.xlane.xlu0 %936
    %v938 = vsel %vm928, %v925, -inf
    %939 = vmax.xlane.f32.xlu0 %v938
    %v940 = vpop.xlane.xlu0 %939
    %v941 = vsel %vm928, %v926, -inf
    %942 = vmax.xlane.f32.xlu0 %v941
    %v943 = vpop.xlane.xlu0 %942
    %v944 = vsel %vm928, %v927, -inf
    %945 = vmax.xlane.f32.xlu0 %v944
    %v946 = vpop.xlane.xlu0 %945
    %v947 = vsub.f32 %v922, %v931
    %v948 = vsub.f32 %v923, %v934
    %v949 = vsub.f32 %v924, %v937
    %v950 = vsub.f32 %v925, %v940
    %v951 = vsub.f32 %v926, %v943
    %v952 = vsub.f32 %v927, %v946
    %v953 = vmul.f32 %v947, 1.442695
    %v954 = vpow.pop %v953
    %v955 = vmul.f32 %v948, 1.442695
    %v956 = vpow.pop %v955
    %v957 = vmul.f32 %v949, 1.442695
    %v958 = vpow.pop %v957
    %v959 = vmul.f32 %v950, 1.442695
    %v960 = vpow.pop %v959
    %v961 = vmul.f32 %v951, 1.442695
    %v962 = vpow.pop %v961
    %v963 = vmul.f32 %v952, 1.442695
    %v964 = vpow.pop %v963
    %v965 = vsel %vm928, %v954, 0.0
    %966 = vadd.xlane.f32.xlu0 %v965
    %v967 = vpop.xlane.xlu0 %966
    %v968 = vsel %vm928, %v956, 0.0
    %969 = vadd.xlane.f32.xlu0 %v968
    %v970 = vpop.xlane.xlu0 %969
    %v971 = vsel %vm928, %v958, 0.0
    %972 = vadd.xlane.f32.xlu0 %v971
    %v973 = vpop.xlane.xlu0 %972
    %v974 = vsel %vm928, %v960, 0.0
    %975 = vadd.xlane.f32.xlu0 %v974
    %v976 = vpop.xlane.xlu0 %975
    %v977 = vsel %vm928, %v962, 0.0
    %978 = vadd.xlane.f32.xlu0 %v977
    %v979 = vpop.xlane.xlu0 %978
    %v980 = vsel %vm928, %v964, 0.0
    %981 = vadd.xlane.f32.xlu0 %v980
    %v982 = vpop.xlane.xlu0 %981
    %v983 = vrcp.pop %v967
    %v984 = vrcp.pop %v970
    %v985 = vrcp.pop %v973
    %v986 = vrcp.pop %v976
    %v987 = vrcp.pop %v979
    %v988 = vrcp.pop %v982
    %v989 = vmul.f32 %v954, %v983
    %v990 = vmul.f32 %v956, %v984
    %v991 = vmul.f32 %v958, %v985
    %v992 = vmul.f32 %v960, %v986
    %v993 = vmul.f32 %v962, %v987
    %v994 = vmul.f32 %v964, %v988
    %v995 = vpack.c.bf16 %v990, %v989
    %v996 = vpack.c.bf16 %v991, %v991
    %v997 = vpack.c.bf16 %v993, %v992
    %v998 = vpack.c.bf16 %v994, %v994
    %v1000 = vsel %vm928, %v995, 0
    %v1003 = vsel %vm928, %v996, 0
    %vm1005 = vcmask 1043456
    %v1007 = vsel %vm1005, %v770, 0
    %1009 = vmatprep.subr.bf16.mxu0 0
    %1010 = vmatpush1.bf16.msra.mxu0 0
    %1011 = vmatprep.subr.bf16.mxu0 0
    %1012 = vmatpush1.bf16.msra.mxu0 0
    %1013 = vmatprep.subr.bf16.mxu0 0
    %1014 = vmatpush1.bf16.msra.mxu0 0
    %1015 = vmatprep.subr.bf16.mxu0 0
    %1016 = vmatpush1.bf16.msra.mxu0 0
    %1017 = vmatprep.subr.bf16.mxu0 0
    %1018 = vmatpush1.bf16.msra.mxu0 0
    %1019 = vmatprep.subr.bf16.mxu0 0
    %1020 = vmatpush1.bf16.msra.mxu0 0
    %1021 = vmatprep.subr.bf16.mxu0 0
    %1022 = vmatpush1.bf16.msra.mxu0 %v1007
    %1023 = vmatprep.subr.bf16.mxu0 0
    %1024 = vmatpush1.bf16.msra.mxu0 %v769
    %1025 = vmatprep.subr.bf16.mxu0 0
    %1026 = vmatpush2.bf16.msra.mxu0 0
    %1027 = vmatprep.subr.bf16.mxu0 0
    %1028 = vmatpush2.bf16.msra.mxu0 0
    %1029 = vmatprep.subr.bf16.mxu0 0
    %1030 = vmatpush2.bf16.msra.mxu0 0
    %1031 = vmatprep.subr.bf16.mxu0 0
    %1032 = vmatpush2.bf16.msra.mxu0 0
    %1033 = vmatprep.subr.bf16.mxu0 0
    %1034 = vmatpush2.bf16.msra.mxu0 0
    %1035 = vmatprep.subr.bf16.mxu0 0
    %1036 = vmatpush2.bf16.msra.mxu0 0
    %1037 = vmatprep.subr.bf16.mxu0 0
    %1038 = vmatpush2.bf16.msra.mxu0 0
    %1039 = vmatprep.subr.bf16.mxu0 0
    %1040 = vmatpush2.bf16.msra.mxu0 0
    %1041 = vmatprep.mubr.bf16.mxu0 0
    %1042 = vmatmul.mubr.bf16.gmra.mxu0 %v1000
    %v1043 = vpop.f32.mrf.mxu0
    %v1044 = vadd.f32 0.0, %v1043
    %v1045 = vpop.f32.mrf.mxu0
    %v1046 = vpop.f32.mrf.mxu0
    %v1047 = vadd.f32 0.0, %v1046
    %v1048 = vpop.f32.mrf.mxu0
    %1049 = vmatprep.mubr.bf16.mxu0 0
    %1050 = vmatmul.mubr.bf16.gmra.mxu0 %v1003
    %v1051 = vpop.f32.mrf.mxu0
    %v1052 = vadd.f32 0.0, %v1051
    %v1053 = vpop.f32.mrf.mxu0
    %v1054 = vpop.f32.mrf.mxu0
    %v1055 = vpop.f32.mrf.mxu0
    %1056 = vdwg.mxu0
    %v1058 = vsel %vm928, %v997, 0
    %v1061 = vsel %vm928, %v998, 0
    %v1064 = vsel %vm1005, %v772, 0
    %1066 = vmatprep.subr.bf16.mxu0 0
    %1067 = vmatpush1.bf16.msra.mxu0 0
    %1068 = vmatprep.subr.bf16.mxu0 0
    %1069 = vmatpush1.bf16.msra.mxu0 0
    %1070 = vmatprep.subr.bf16.mxu0 0
    %1071 = vmatpush1.bf16.msra.mxu0 0
    %1072 = vmatprep.subr.bf16.mxu0 0
    %1073 = vmatpush1.bf16.msra.mxu0 0
    %1074 = vmatprep.subr.bf16.mxu0 0
    %1075 = vmatpush1.bf16.msra.mxu0 0
    %1076 = vmatprep.subr.bf16.mxu0 0
    %1077 = vmatpush1.bf16.msra.mxu0 0
    %1078 = vmatprep.subr.bf16.mxu0 0
    %1079 = vmatpush1.bf16.msra.mxu0 %v1064
    %1080 = vmatprep.subr.bf16.mxu0 0
    %1081 = vmatpush1.bf16.msra.mxu0 %v771
    %1082 = vmatprep.subr.bf16.mxu0 0
    %1083 = vmatpush2.bf16.msra.mxu0 0
    %1084 = vmatprep.subr.bf16.mxu0 0
    %1085 = vmatpush2.bf16.msra.mxu0 0
    %1086 = vmatprep.subr.bf16.mxu0 0
    %1087 = vmatpush2.bf16.msra.mxu0 0
    %1088 = vmatprep.subr.bf16.mxu0 0
    %1089 = vmatpush2.bf16.msra.mxu0 0
    %1090 = vmatprep.subr.bf16.mxu0 0
    %1091 = vmatpush2.bf16.msra.mxu0 0
    %1092 = vmatprep.subr.bf16.mxu0 0
    %1093 = vmatpush2.bf16.msra.mxu0 0
    %1094 = vmatprep.subr.bf16.mxu0 0
    %1095 = vmatpush2.bf16.msra.mxu0 0
    %1096 = vmatprep.subr.bf16.mxu0 0
    %1097 = vmatpush2.bf16.msra.mxu0 0
    %1098 = vmatprep.mubr.bf16.mxu0 0
    %1099 = vmatmul.mubr.bf16.gmra.mxu0 %v1058
    %v1100 = vpop.f32.mrf.mxu0
    %v1101 = vadd.f32 0.0, %v1100
    %v1102 = vpop.f32.mrf.mxu0
    %v1103 = vpop.f32.mrf.mxu0
    %v1104 = vadd.f32 0.0, %v1103
    %v1105 = vpop.f32.mrf.mxu0
    %1106 = vmatprep.mubr.bf16.mxu0 0
    %1107 = vmatmul.mubr.bf16.gmra.mxu0 %v1061
    %v1108 = vpop.f32.mrf.mxu0
    %v1109 = vadd.f32 0.0, %v1108
    %v1110 = vpop.f32.mrf.mxu0
    %v1111 = vpop.f32.mrf.mxu0
    %v1112 = vpop.f32.mrf.mxu0
    %1113 = vdwg.mxu0
    %1114 = vrot.lane.b32.xlu0 %v765, 96
    %v1115 = vpop.permute.xlu0 %1114
    %1116 = vrot.lane.b32.xlu0 %v766, 96
    %v1117 = vpop.permute.xlu0 %1116
    %1118 = vrot.lane.b32.xlu0 %v765, 32
    %v1119 = vpop.permute.xlu0 %1118
    %1120 = vrot.lane.b32.xlu0 %v766, 32
    %v1121 = vpop.permute.xlu0 %1120
    %v1123 = vsel %vm779, %v1115, 0
    %v1126 = vsel %vm779, %v1117, 0
    %v1129 = vsel %vm779, %v1119, 0
    %v1132 = vsel %vm779, %v1121, 0
    %1134 = vmatprep.subr.bf16.mxu0 0
    %1135 = vmatpush1.bf16.xpose.msra.mxu0 0
    %1136 = vmatprep.subr.bf16.mxu0 0
    %1137 = vmatpush1.bf16.xpose.msra.mxu0 0
    %1138 = vmatprep.subr.bf16.mxu0 0
    %1139 = vmatpush1.bf16.xpose.msra.mxu0 0
    %1140 = vmatprep.subr.bf16.mxu0 0
    %1141 = vmatpush1.bf16.xpose.msra.mxu0 0
    %1142 = vmatprep.subr.bf16.mxu0 0
    %1143 = vmatpush1.bf16.xpose.msra.mxu0 0
    %1144 = vmatprep.subr.bf16.mxu0 0
    %1145 = vmatpush1.bf16.xpose.msra.mxu0 0
    %1146 = vmatprep.subr.bf16.mxu0 0
    %1147 = vmatpush1.bf16.xpose.msra.mxu0 %v1132
    %1148 = vmatprep.subr.bf16.mxu0 0
    %1149 = vmatpush1.bf16.xpose.msra.mxu0 %v1129
    %1150 = vmatprep.subr.bf16.mxu0 0
    %1151 = vmatpush2.bf16.xpose.msra.mxu0 0
    %1152 = vmatprep.subr.bf16.mxu0 0
    %1153 = vmatpush2.bf16.xpose.msra.mxu0 0
    %1154 = vmatprep.subr.bf16.mxu0 0
    %1155 = vmatpush2.bf16.xpose.msra.mxu0 0
    %1156 = vmatprep.subr.bf16.mxu0 0
    %1157 = vmatpush2.bf16.xpose.msra.mxu0 0
    %1158 = vmatprep.subr.bf16.mxu0 0
    %1159 = vmatpush2.bf16.xpose.msra.mxu0 0
    %1160 = vmatprep.subr.bf16.mxu0 0
    %1161 = vmatpush2.bf16.xpose.msra.mxu0 0
    %1162 = vmatprep.subr.bf16.mxu0 0
    %1163 = vmatpush2.bf16.xpose.msra.mxu0 0
    %1164 = vmatprep.subr.bf16.mxu0 0
    %1165 = vmatpush2.bf16.xpose.msra.mxu0 0
    %1166 = vmatprep.mubr.bf16.mxu0 0
    %1167 = vmatmul.mubr.bf16.gmra.mxu0 %v1123
    %v1168 = vpop.f32.mrf.mxu0
    %v1169 = vadd.f32 0.0, %v1168
    %v1170 = vpop.f32.mrf.mxu0
    %v1171 = vpop.f32.mrf.mxu0
    %v1172 = vadd.f32 0.0, %v1171
    %v1173 = vpop.f32.mrf.mxu0
    %1174 = vmatprep.mubr.bf16.mxu0 0
    %1175 = vmatmul.mubr.bf16.gmra.mxu0 %v1126
    %v1176 = vpop.f32.mrf.mxu0
    %v1177 = vadd.f32 0.0, %v1176
    %v1178 = vpop.f32.mrf.mxu0
    %v1179 = vpop.f32.mrf.mxu0
    %v1180 = vpop.f32.mrf.mxu0
    %1181 = vdwg.mxu0
    %1182 = vrot.lane.b32.xlu0 %v767, 96
    %v1183 = vpop.permute.xlu0 %1182
    %1184 = vrot.lane.b32.xlu0 %v768, 96
    %v1185 = vpop.permute.xlu0 %1184
    %1186 = vrot.lane.b32.xlu0 %v767, 32
    %v1187 = vpop.permute.xlu0 %1186
    %1188 = vrot.lane.b32.xlu0 %v768, 32
    %v1189 = vpop.permute.xlu0 %1188
    %v1191 = vsel %vm779, %v1183, 0
    %v1194 = vsel %vm779, %v1185, 0
    %v1197 = vsel %vm779, %v1187, 0
    %v1200 = vsel %vm779, %v1189, 0
    %1202 = vmatprep.subr.bf16.mxu0 0
    %1203 = vmatpush1.bf16.xpose.msra.mxu0 0
    %1204 = vmatprep.subr.bf16.mxu0 0
    %1205 = vmatpush1.bf16.xpose.msra.mxu0 0
    %1206 = vmatprep.subr.bf16.mxu0 0
    %1207 = vmatpush1.bf16.xpose.msra.mxu0 0
    %1208 = vmatprep.subr.bf16.mxu0 0
    %1209 = vmatpush1.bf16.xpose.msra.mxu0 0
    %1210 = vmatprep.subr.bf16.mxu0 0
    %1211 = vmatpush1.bf16.xpose.msra.mxu0 0
    %1212 = vmatprep.subr.bf16.mxu0 0
    %1213 = vmatpush1.bf16.xpose.msra.mxu0 0
    %1214 = vmatprep.subr.bf16.mxu0 0
    %1215 = vmatpush1.bf16.xpose.msra.mxu0 %v1200
    %1216 = vmatprep.subr.bf16.mxu0 0
    %1217 = vmatpush1.bf16.xpose.msra.mxu0 %v1197
    %1218 = vmatprep.subr.bf16.mxu0 0
    %1219 = vmatpush2.bf16.xpose.msra.mxu0 0
    %1220 = vmatprep.subr.bf16.mxu0 0
    %1221 = vmatpush2.bf16.xpose.msra.mxu0 0
    %1222 = vmatprep.subr.bf16.mxu0 0
    %1223 = vmatpush2.bf16.xpose.msra.mxu0 0
    %1224 = vmatprep.subr.bf16.mxu0 0
    %1225 = vmatpush2.bf16.xpose.msra.mxu0 0
    %1226 = vmatprep.subr.bf16.mxu0 0
    %1227 = vmatpush2.bf16.xpose.msra.mxu0 0
    %1228 = vmatprep.subr.bf16.mxu0 0
    %1229 = vmatpush2.bf16.xpose.msra.mxu0 0
    %1230 = vmatprep.subr.bf16.mxu0 0
    %1231 = vmatpush2.bf16.xpose.msra.mxu0 0
    %1232 = vmatprep.subr.bf16.mxu0 0
    %1233 = vmatpush2.bf16.xpose.msra.mxu0 0
    %1234 = vmatprep.mubr.bf16.mxu0 0
    %1235 = vmatmul.mubr.bf16.gmra.mxu0 %v1191
    %v1236 = vpop.f32.mrf.mxu0
    %v1237 = vadd.f32 0.0, %v1236
    %v1238 = vpop.f32.mrf.mxu0
    %v1239 = vpop.f32.mrf.mxu0
    %v1240 = vadd.f32 0.0, %v1239
    %v1241 = vpop.f32.mrf.mxu0
    %1242 = vmatprep.mubr.bf16.mxu0 0
    %1243 = vmatmul.mubr.bf16.gmra.mxu0 %v1194
    %v1244 = vpop.f32.mrf.mxu0
    %v1245 = vadd.f32 0.0, %v1244
    %v1246 = vpop.f32.mrf.mxu0
    %v1247 = vpop.f32.mrf.mxu0
    %v1248 = vpop.f32.mrf.mxu0
    %1249 = vdwg.mxu0
    %v1250 = vmul.f32 %v1169, 0.17677669
    %v1251 = vmul.f32 %v1172, 0.17677669
    %v1252 = vmul.f32 %v1177, 0.17677669
    %v1253 = vmul.f32 %v1237, 0.17677669
    %v1254 = vmul.f32 %v1240, 0.17677669
    %v1255 = vmul.f32 %v1245, 0.17677669
    %v1256 = vadd.f32 %v1250, %v915
    %v1257 = vadd.f32 %v1251, %v915
    %v1258 = vadd.f32 %v1252, %v915
    %v1259 = vadd.f32 %v1253, %v919
    %v1260 = vadd.f32 %v1254, %v919
    %v1261 = vadd.f32 %v1255, %v919
    %v1262 = vsel %vm928, %v1256, -inf
    %1263 = vmax.xlane.f32.xlu0 %v1262
    %v1264 = vpop.xlane.xlu0 %1263
    %v1265 = vsel %vm928, %v1257, -inf
    %1266 = vmax.xlane.f32.xlu0 %v1265
    %v1267 = vpop.xlane.xlu0 %1266
    %v1268 = vsel %vm928, %v1258, -inf
    %1269 = vmax.xlane.f32.xlu0 %v1268
    %v1270 = vpop.xlane.xlu0 %1269
    %v1271 = vsel %vm928, %v1259, -inf
    %1272 = vmax.xlane.f32.xlu0 %v1271
    %v1273 = vpop.xlane.xlu0 %1272
    %v1274 = vsel %vm928, %v1260, -inf
    %1275 = vmax.xlane.f32.xlu0 %v1274
    %v1276 = vpop.xlane.xlu0 %1275
    %v1277 = vsel %vm928, %v1261, -inf
    %1278 = vmax.xlane.f32.xlu0 %v1277
    %v1279 = vpop.xlane.xlu0 %1278
    %v1280 = vsub.f32 %v1256, %v1264
    %v1281 = vsub.f32 %v1257, %v1267
    %v1282 = vsub.f32 %v1258, %v1270
    %v1283 = vsub.f32 %v1259, %v1273
    %v1284 = vsub.f32 %v1260, %v1276
    %v1285 = vsub.f32 %v1261, %v1279
    %v1286 = vmul.f32 %v1280, 1.442695
    %v1287 = vpow.pop %v1286
    %v1288 = vmul.f32 %v1281, 1.442695
    %v1289 = vpow.pop %v1288
    %v1290 = vmul.f32 %v1282, 1.442695
    %v1291 = vpow.pop %v1290
    %v1292 = vmul.f32 %v1283, 1.442695
    %v1293 = vpow.pop %v1292
    %v1294 = vmul.f32 %v1284, 1.442695
    %v1295 = vpow.pop %v1294
    %v1296 = vmul.f32 %v1285, 1.442695
    %v1297 = vpow.pop %v1296
    %v1298 = vsel %vm928, %v1287, 0.0
    %1299 = vadd.xlane.f32.xlu0 %v1298
    %v1300 = vpop.xlane.xlu0 %1299
    %v1301 = vsel %vm928, %v1289, 0.0
    %1302 = vadd.xlane.f32.xlu0 %v1301
    %v1303 = vpop.xlane.xlu0 %1302
    %v1304 = vsel %vm928, %v1291, 0.0
    %1305 = vadd.xlane.f32.xlu0 %v1304
    %v1306 = vpop.xlane.xlu0 %1305
    %v1307 = vsel %vm928, %v1293, 0.0
    %1308 = vadd.xlane.f32.xlu0 %v1307
    %v1309 = vpop.xlane.xlu0 %1308
    %v1310 = vsel %vm928, %v1295, 0.0
    %1311 = vadd.xlane.f32.xlu0 %v1310
    %v1312 = vpop.xlane.xlu0 %1311
    %v1313 = vsel %vm928, %v1297, 0.0
    %1314 = vadd.xlane.f32.xlu0 %v1313
    %v1315 = vpop.xlane.xlu0 %1314
    %v1316 = vrcp.pop %v1300
    %v1317 = vrcp.pop %v1303
    %v1318 = vrcp.pop %v1306
    %v1319 = vrcp.pop %v1309
    %v1320 = vrcp.pop %v1312
    %v1321 = vrcp.pop %v1315
    %v1322 = vmul.f32 %v1287, %v1316
    %v1323 = vmul.f32 %v1289, %v1317
    %v1324 = vmul.f32 %v1291, %v1318
    %v1325 = vmul.f32 %v1293, %v1319
    %v1326 = vmul.f32 %v1295, %v1320
    %v1327 = vmul.f32 %v1297, %v1321
    %v1328 = vpack.c.bf16 %v1323, %v1322
    %v1329 = vpack.c.bf16 %v1324, %v1324
    %v1330 = vpack.c.bf16 %v1326, %v1325
    %v1331 = vpack.c.bf16 %v1327, %v1327
    %1334 = vrot.lane.b32.xlu0 %v769, 96
    %v1335 = vpop.permute.xlu0 %1334
    %1336 = vrot.lane.b32.xlu0 %v770, 96
    %v1337 = vpop.permute.xlu0 %1336
    %v1340 = vsel %vm928, %v1328, 0
    %v1343 = vsel %vm928, %v1329, 0
    %v1346 = vsel %vm1005, %v1337, 0
    %1348 = vmatprep.subr.bf16.mxu0 0
    %1349 = vmatpush1.bf16.msra.mxu0 0
    %1350 = vmatprep.subr.bf16.mxu0 0
    %1351 = vmatpush1.bf16.msra.mxu0 0
    %1352 = vmatprep.subr.bf16.mxu0 0
    %1353 = vmatpush1.bf16.msra.mxu0 0
    %1354 = vmatprep.subr.bf16.mxu0 0
    %1355 = vmatpush1.bf16.msra.mxu0 0
    %1356 = vmatprep.subr.bf16.mxu0 0
    %1357 = vmatpush1.bf16.msra.mxu0 0
    %1358 = vmatprep.subr.bf16.mxu0 0
    %1359 = vmatpush1.bf16.msra.mxu0 0
    %1360 = vmatprep.subr.bf16.mxu0 0
    %1361 = vmatpush1.bf16.msra.mxu0 %v1346
    %1362 = vmatprep.subr.bf16.mxu0 0
    %1363 = vmatpush1.bf16.msra.mxu0 %v1335
    %1364 = vmatprep.subr.bf16.mxu0 0
    %1365 = vmatpush2.bf16.msra.mxu0 0
    %1366 = vmatprep.subr.bf16.mxu0 0
    %1367 = vmatpush2.bf16.msra.mxu0 0
    %1368 = vmatprep.subr.bf16.mxu0 0
    %1369 = vmatpush2.bf16.msra.mxu0 0
    %1370 = vmatprep.subr.bf16.mxu0 0
    %1371 = vmatpush2.bf16.msra.mxu0 0
    %1372 = vmatprep.subr.bf16.mxu0 0
    %1373 = vmatpush2.bf16.msra.mxu0 0
    %1374 = vmatprep.subr.bf16.mxu0 0
    %1375 = vmatpush2.bf16.msra.mxu0 0
    %1376 = vmatprep.subr.bf16.mxu0 0
    %1377 = vmatpush2.bf16.msra.mxu0 0
    %1378 = vmatprep.subr.bf16.mxu0 0
    %1379 = vmatpush2.bf16.msra.mxu0 0
    %1380 = vmatprep.mubr.bf16.mxu0 0
    %1381 = vmatmul.mubr.bf16.gmra.mxu0 %v1340
    %v1382 = vpop.f32.mrf.mxu0
    %v1383 = vadd.f32 0.0, %v1382
    %v1384 = vpop.f32.mrf.mxu0
    %v1385 = vpop.f32.mrf.mxu0
    %v1386 = vadd.f32 0.0, %v1385
    %v1387 = vpop.f32.mrf.mxu0
    %1388 = vmatprep.mubr.bf16.mxu0 0
    %1389 = vmatmul.mubr.bf16.gmra.mxu0 %v1343
    %v1390 = vpop.f32.mrf.mxu0
    %v1391 = vadd.f32 0.0, %v1390
    %v1392 = vpop.f32.mrf.mxu0
    %v1393 = vpop.f32.mrf.mxu0
    %v1394 = vpop.f32.mrf.mxu0
    %1395 = vdwg.mxu0
    %1398 = vrot.lane.b32.xlu0 %v771, 96
    %v1399 = vpop.permute.xlu0 %1398
    %1400 = vrot.lane.b32.xlu0 %v772, 96
    %v1401 = vpop.permute.xlu0 %1400
    %v1404 = vsel %vm928, %v1330, 0
    %v1407 = vsel %vm928, %v1331, 0
    %v1410 = vsel %vm1005, %v1401, 0
    %1412 = vmatprep.subr.bf16.mxu0 0
    %1413 = vmatpush1.bf16.msra.mxu0 0
    %1414 = vmatprep.subr.bf16.mxu0 0
    %1415 = vmatpush1.bf16.msra.mxu0 0
    %1416 = vmatprep.subr.bf16.mxu0 0
    %1417 = vmatpush1.bf16.msra.mxu0 0
    %1418 = vmatprep.subr.bf16.mxu0 0
    %1419 = vmatpush1.bf16.msra.mxu0 0
    %1420 = vmatprep.subr.bf16.mxu0 0
    %1421 = vmatpush1.bf16.msra.mxu0 0
    %1422 = vmatprep.subr.bf16.mxu0 0
    %1423 = vmatpush1.bf16.msra.mxu0 0
    %1424 = vmatprep.subr.bf16.mxu0 0
    %1425 = vmatpush1.bf16.msra.mxu0 %v1410
    %1426 = vmatprep.subr.bf16.mxu0 0
    %1427 = vmatpush1.bf16.msra.mxu0 %v1399
    %1428 = vmatprep.subr.bf16.mxu0 0
    %1429 = vmatpush2.bf16.msra.mxu0 0
    %1430 = vmatprep.subr.bf16.mxu0 0
    %1431 = vmatpush2.bf16.msra.mxu0 0
    %1432 = vmatprep.subr.bf16.mxu0 0
    %1433 = vmatpush2.bf16.msra.mxu0 0
    %1434 = vmatprep.subr.bf16.mxu0 0
    %1435 = vmatpush2.bf16.msra.mxu0 0
    %1436 = vmatprep.subr.bf16.mxu0 0
    %1437 = vmatpush2.bf16.msra.mxu0 0
    %1438 = vmatprep.subr.bf16.mxu0 0
    %1439 = vmatpush2.bf16.msra.mxu0 0
    %1440 = vmatprep.subr.bf16.mxu0 0
    %1441 = vmatpush2.bf16.msra.mxu0 0
    %1442 = vmatprep.subr.bf16.mxu0 0
    %1443 = vmatpush2.bf16.msra.mxu0 0
    %1444 = vmatprep.mubr.bf16.mxu0 0
    %1445 = vmatmul.mubr.bf16.gmra.mxu0 %v1404
    %v1446 = vpop.f32.mrf.mxu0
    %v1447 = vadd.f32 0.0, %v1446
    %v1448 = vpop.f32.mrf.mxu0
    %v1449 = vpop.f32.mrf.mxu0
    %v1450 = vadd.f32 0.0, %v1449
    %v1451 = vpop.f32.mrf.mxu0
    %1452 = vmatprep.mubr.bf16.mxu0 0
    %1453 = vmatmul.mubr.bf16.gmra.mxu0 %v1407
    %v1454 = vpop.f32.mrf.mxu0
    %v1455 = vadd.f32 0.0, %v1454
    %v1456 = vpop.f32.mrf.mxu0
    %v1457 = vpop.f32.mrf.mxu0
    %v1458 = vpop.f32.mrf.mxu0
    %1459 = vdwg.mxu0
    %1466 = vrot.lane.b32.xlu0 %v1383, 32
    %v1467 = vpop.permute.xlu0 %1466
    %1468 = vrot.lane.b32.xlu0 %v1386, 32
    %v1469 = vpop.permute.xlu0 %1468
    %1470 = vrot.lane.b32.xlu0 %v1391, 32
    %v1471 = vpop.permute.xlu0 %1470
    %1472 = vrot.lane.b32.xlu0 %v1447, 32
    %v1473 = vpop.permute.xlu0 %1472
    %1474 = vrot.lane.b32.xlu0 %v1450, 32
    %v1475 = vpop.permute.xlu0 %1474
    %1476 = vrot.lane.b32.xlu0 %v1455, 32
    %v1477 = vpop.permute.xlu0 %1476
    %v1484 = vsel %vm779, %v1044, %v1467
    %v1485 = vsel %vm779, %v1047, %v1469
    %v1486 = vsel %vm779, %v1052, %v1471
    %v1487 = vsel %vm779, %v1101, %v1473
    %v1488 = vsel %vm779, %v1104, %v1475
    %v1489 = vsel %vm779, %v1109, %v1477
    %v1490 = vld [vmem:[%s14] sm:$0xf]
    %v1491 = vld [vmem:[%s14 + $0x4] sm:$0xf]
    %v1492 = vld [vmem:[%s14 + $0x8] sm:$0xf]
    %v1493 = vld [vmem:[%s14 + $0xc] sm:$0xf]
    %v1494 = vld [vmem:[%s14 + $0x10] sm:$0xf]
    %v1495 = vld [vmem:[%s14 + $0x14] sm:$0xf]
    %v1496 = vld [vmem:[%s14 + $0x18] sm:$0xf]
    %v1497 = vld [vmem:[%s14 + $0x1c] sm:$0xf]
    %v1498 = vpack.c.bf16 %v1485, %v1484
    %v1499 = vpack.c.bf16 %v1487, %v1486
    %v1500 = vpack.c.bf16 %v1489, %v1488
    %v1509 = vunpack.c.l.b16 %v1490
    %v1510 = vunpack.c.l.b16 %v1491
    %v1511 = vunpack.c.l.b16 %v1492
    %v1512 = vunpack.c.l.b16 %v1493
    %v1513 = vunpack.c.l.b16 %v1494
    %v1514 = vunpack.c.l.b16 %v1495
    %v1515 = vunpack.c.l.b16 %v1496
    %v1516 = vunpack.c.l.b16 %v1497
    %v1517 = vpack.c.b16 %v1510, %v1509
    %v1518 = vpack.c.b16 %v1512, %v1511
    %v1519 = vpack.c.b16 %v1514, %v1513
    %v1520 = vpack.c.b16 %v1516, %v1515
    %v1526 = vsel %vm252, %v1498, 0
    %v1529 = vsel %vm252, %v1499, 0
    %v1532 = vsel %vm252, %v1500, 0
    %1534 = vmatprep.subr.bf16.mxu0 0
    %1535 = vmatpush1.bf16.msra.mxu0 0
    %1536 = vmatprep.subr.bf16.mxu0 0
    %1537 = vmatpush1.bf16.msra.mxu0 0
    %1538 = vmatprep.subr.bf16.mxu0 0
    %1539 = vmatpush1.bf16.msra.mxu0 0
    %1540 = vmatprep.subr.bf16.mxu0 0
    %1541 = vmatpush1.bf16.msra.mxu0 0
    %1542 = vmatprep.subr.bf16.mxu0 0
    %1543 = vmatpush1.bf16.msra.mxu0 %v1520
    %1544 = vmatprep.subr.bf16.mxu0 0
    %1545 = vmatpush1.bf16.msra.mxu0 %v1519
    %1546 = vmatprep.subr.bf16.mxu0 0
    %1547 = vmatpush1.bf16.msra.mxu0 %v1518
    %1548 = vmatprep.subr.bf16.mxu0 0
    %1549 = vmatpush1.bf16.msra.mxu0 %v1517
    %1550 = vmatprep.subr.bf16.mxu0 0
    %1551 = vmatpush2.bf16.msra.mxu0 0
    %1552 = vmatprep.subr.bf16.mxu0 0
    %1553 = vmatpush2.bf16.msra.mxu0 0
    %1554 = vmatprep.subr.bf16.mxu0 0
    %1555 = vmatpush2.bf16.msra.mxu0 0
    %1556 = vmatprep.subr.bf16.mxu0 0
    %1557 = vmatpush2.bf16.msra.mxu0 0
    %1558 = vmatprep.subr.bf16.mxu0 0
    %1559 = vmatpush2.bf16.msra.mxu0 0
    %1560 = vmatprep.subr.bf16.mxu0 0
    %1561 = vmatpush2.bf16.msra.mxu0 0
    %1562 = vmatprep.subr.bf16.mxu0 0
    %1563 = vmatpush2.bf16.msra.mxu0 0
    %1564 = vmatprep.subr.bf16.mxu0 0
    %1565 = vmatpush2.bf16.msra.mxu0 0
    %1566 = vmatprep.mubr.bf16.mxu0 0
    %1567 = vmatmul.mubr.bf16.gmra.mxu0 %v1526
    %v1568 = vpop.f32.mrf.mxu0
    %v1569 = vadd.f32 0.0, %v1568
    %v1570 = vpop.f32.mrf.mxu0
    %v1571 = vpop.f32.mrf.mxu0
    %v1572 = vadd.f32 0.0, %v1571
    %v1573 = vpop.f32.mrf.mxu0
    %1574 = vmatprep.mubr.bf16.mxu0 0
    %1575 = vmatmul.mubr.bf16.gmra.mxu0 %v1529
    %v1576 = vpop.f32.mrf.mxu0
    %v1577 = vadd.f32 0.0, %v1576
    %v1578 = vpop.f32.mrf.mxu0
    %v1579 = vpop.f32.mrf.mxu0
    %v1580 = vadd.f32 0.0, %v1579
    %v1581 = vpop.f32.mrf.mxu0
    %1582 = vmatprep.mubr.bf16.mxu0 0
    %1583 = vmatmul.mubr.bf16.gmra.mxu0 %v1532
    %v1584 = vpop.f32.mrf.mxu0
    %v1585 = vadd.f32 0.0, %v1584
    %v1586 = vpop.f32.mrf.mxu0
    %v1587 = vpop.f32.mrf.mxu0
    %v1588 = vadd.f32 0.0, %v1587
    %v1589 = vpop.f32.mrf.mxu0
    %1590 = vdwg.mxu0
    %v1591 = vadd.f32 %v524, %v1569
    %v1592 = vadd.f32 %v525, %v1572
    %v1593 = vadd.f32 %v526, %v1577
    %v1594 = vadd.f32 %v527, %v1580
    %v1595 = vadd.f32 %v528, %v1585
    %v1596 = vadd.f32 %v529, %v1588
    %v1597 = vld [vmem:[%s15] sm:$0x1]
    %v1599 = vlaneseq
    %v1600 = vshrl.u32 %v1599, 7
    %v1601 = vsub.s32 0, %v1600
    %v1602 = vrot.slane %v1597, %v1601
    %v1604 = vadd.f32 %v1591, %v1602
    %v1605 = vadd.f32 %v1592, %v1602
    %v1606 = vadd.f32 %v1593, %v1602
    %v1607 = vadd.f32 %v1594, %v1602
    %v1608 = vadd.f32 %v1595, %v1602
    %v1609 = vadd.f32 %v1596, %v1602
    %v1610 = vsel %vm252, %v1604, 0.0
    %1611 = vadd.xlane.f32.xlu0 %v1610
    %v1612 = vpop.xlane.xlu0 %1611
    %v1613 = vsel %vm252, %v1605, 0.0
    %1614 = vadd.xlane.f32.xlu0 %v1613
    %v1615 = vpop.xlane.xlu0 %1614
    %v1616 = vsel %vm252, %v1606, 0.0
    %1617 = vadd.xlane.f32.xlu0 %v1616
    %v1618 = vpop.xlane.xlu0 %1617
    %v1619 = vsel %vm252, %v1607, 0.0
    %1620 = vadd.xlane.f32.xlu0 %v1619
    %v1621 = vpop.xlane.xlu0 %1620
    %v1622 = vsel %vm252, %v1608, 0.0
    %1623 = vadd.xlane.f32.xlu0 %v1622
    %v1624 = vpop.xlane.xlu0 %1623
    %v1625 = vsel %vm252, %v1609, 0.0
    %1626 = vadd.xlane.f32.xlu0 %v1625
    %v1627 = vpop.xlane.xlu0 %1626
    %v1628 = vmul.f32 %v1612, %v549
    %v1629 = vmul.f32 %v1615, %v549
    %v1630 = vmul.f32 %v1618, %v549
    %v1631 = vmul.f32 %v1621, %v549
    %v1632 = vmul.f32 %v1624, %v549
    %v1633 = vmul.f32 %v1627, %v549
    %v1634 = vsub.f32 %v1604, %v1628
    %v1635 = vsub.f32 %v1605, %v1629
    %v1636 = vsub.f32 %v1606, %v1630
    %v1637 = vsub.f32 %v1607, %v1631
    %v1638 = vsub.f32 %v1608, %v1632
    %v1639 = vsub.f32 %v1609, %v1633
    %v1640 = vmul.f32 %v1634, %v1634
    %v1641 = vmul.f32 %v1635, %v1635
    %v1642 = vmul.f32 %v1636, %v1636
    %v1643 = vmul.f32 %v1637, %v1637
    %v1644 = vmul.f32 %v1638, %v1638
    %v1645 = vmul.f32 %v1639, %v1639
    %v1646 = vsel %vm252, %v1640, 0.0
    %1647 = vadd.xlane.f32.xlu0 %v1646
    %v1648 = vpop.xlane.xlu0 %1647
    %v1649 = vsel %vm252, %v1641, 0.0
    %1650 = vadd.xlane.f32.xlu0 %v1649
    %v1651 = vpop.xlane.xlu0 %1650
    %v1652 = vsel %vm252, %v1642, 0.0
    %1653 = vadd.xlane.f32.xlu0 %v1652
    %v1654 = vpop.xlane.xlu0 %1653
    %v1655 = vsel %vm252, %v1643, 0.0
    %1656 = vadd.xlane.f32.xlu0 %v1655
    %v1657 = vpop.xlane.xlu0 %1656
    %v1658 = vsel %vm252, %v1644, 0.0
    %1659 = vadd.xlane.f32.xlu0 %v1658
    %v1660 = vpop.xlane.xlu0 %1659
    %v1661 = vsel %vm252, %v1645, 0.0
    %1662 = vadd.xlane.f32.xlu0 %v1661
    %v1663 = vpop.xlane.xlu0 %1662
    %v1664 = vmul.f32 %v1648, %v549
    %v1665 = vmul.f32 %v1651, %v549
    %v1666 = vmul.f32 %v1654, %v549
    %v1667 = vmul.f32 %v1657, %v549
    %v1668 = vmul.f32 %v1660, %v549
    %v1669 = vmul.f32 %v1663, %v549
    %v1670 = vadd.f32 %v1664, 1e-05
    %v1671 = vadd.f32 %v1665, 1e-05
    %v1672 = vadd.f32 %v1666, 1e-05
    %v1673 = vadd.f32 %v1667, 1e-05
    %v1674 = vadd.f32 %v1668, 1e-05
    %v1675 = vadd.f32 %v1669, 1e-05
    %v1676 = vrsqrt.pop %v1670
    %v1677 = vrsqrt.pop %v1671
    %v1678 = vrsqrt.pop %v1672
    %v1679 = vrsqrt.pop %v1673
    %v1680 = vrsqrt.pop %v1674
    %v1681 = vrsqrt.pop %v1675
    %v1682 = vmul.f32 %v1634, %v1676
    %v1683 = vmul.f32 %v1635, %v1677
    %v1684 = vmul.f32 %v1636, %v1678
    %v1685 = vmul.f32 %v1637, %v1679
    %v1686 = vmul.f32 %v1638, %v1680
    %v1687 = vmul.f32 %v1639, %v1681
    %v1688 = vlaneseq
    %v1689 = vshrl.u32 %v1688, 7
    %v1690 = vsub.s32 2, %v1689
    %v1691 = vrot.slane %v530, %v1690
    %v1692 = vmul.f32 %v1682, %v1691
    %v1693 = vmul.f32 %v1683, %v1691
    %v1694 = vmul.f32 %v1684, %v1691
    %v1695 = vmul.f32 %v1685, %v1691
    %v1696 = vmul.f32 %v1686, %v1691
    %v1697 = vmul.f32 %v1687, %v1691
    %v1698 = vlaneseq
    %v1699 = vshrl.u32 %v1698, 7
    %v1700 = vsub.s32 3, %v1699
    %v1701 = vrot.slane %v530, %v1700
    %v1702 = vadd.f32 %v1692, %v1701
    %v1703 = vadd.f32 %v1693, %v1701
    %v1704 = vadd.f32 %v1694, %v1701
    %v1705 = vadd.f32 %v1695, %v1701
    %v1706 = vadd.f32 %v1696, %v1701
    %v1707 = vadd.f32 %v1697, %v1701
    %v1708 = vld [vmem:[%s16] sm:$0xff]
    %v1709 = vld [vmem:[%s16 + $0x8] sm:$0xff]
    %v1710 = vld [vmem:[%s16 + $0x10] sm:$0xff]
    %v1711 = vld [vmem:[%s16 + $0x18] sm:$0xff]
    %v1712 = vld [vmem:[%s16 + $0x20] sm:$0xff]
    %v1713 = vld [vmem:[%s16 + $0x28] sm:$0xff]
    %v1714 = vld [vmem:[%s16 + $0x30] sm:$0xff]
    %v1715 = vld [vmem:[%s16 + $0x38] sm:$0xff]
    %v1716 = vpack.c.bf16 %v1703, %v1702
    %v1717 = vpack.c.bf16 %v1705, %v1704
    %v1718 = vpack.c.bf16 %v1707, %v1706
    %v1719 = vld [vmem:[%s17] sm:$0x3]
    %v1721 = vlaneseq
    %v1722 = vshrl.u32 %v1721, 7
    %v1723 = vsub.s32 0, %v1722
    %v1724 = vrot.slane %v1719, %v1723
    %v1725 = vlaneseq
    %v1726 = vshrl.u32 %v1725, 7
    %v1727 = vsub.s32 1, %v1726
    %v1728 = vrot.slane %v1719, %v1727
    %v1739 = vunpack.c.l.b16 %v1708
    %v1740 = vunpack.c.h.b16 %v1708
    %v1741 = vunpack.c.l.b16 %v1709
    %v1742 = vunpack.c.h.b16 %v1709
    %v1743 = vunpack.c.l.b16 %v1710
    %v1744 = vunpack.c.h.b16 %v1710
    %v1745 = vunpack.c.l.b16 %v1711
    %v1746 = vunpack.c.h.b16 %v1711
    %v1747 = vunpack.c.l.b16 %v1712
    %v1748 = vunpack.c.h.b16 %v1712
    %v1749 = vunpack.c.l.b16 %v1713
    %v1750 = vunpack.c.h.b16 %v1713
    %v1751 = vunpack.c.l.b16 %v1714
    %v1752 = vunpack.c.h.b16 %v1714
    %v1753 = vunpack.c.l.b16 %v1715
    %v1754 = vunpack.c.h.b16 %v1715
    %v1755 = vpack.c.b16 %v1741, %v1739
    %v1756 = vpack.c.b16 %v1742, %v1740
    %v1757 = vpack.c.b16 %v1745, %v1743
    %v1758 = vpack.c.b16 %v1746, %v1744
    %v1759 = vpack.c.b16 %v1749, %v1747
    %v1760 = vpack.c.b16 %v1750, %v1748
    %v1761 = vpack.c.b16 %v1753, %v1751
    %v1762 = vpack.c.b16 %v1754, %v1752
    %v1772 = vsel %vm252, %v1716, 0
    %v1775 = vsel %vm252, %v1717, 0
    %v1778 = vsel %vm252, %v1718, 0
    %1780 = vmatprep.subr.bf16.mxu0 0
    %1781 = vmatpush1.bf16.msra.mxu0 0
    %1782 = vmatprep.subr.bf16.mxu0 0
    %1783 = vmatpush1.bf16.msra.mxu0 0
    %1784 = vmatprep.subr.bf16.mxu0 0
    %1785 = vmatpush1.bf16.msra.mxu0 0
    %1786 = vmatprep.subr.bf16.mxu0 0
    %1787 = vmatpush1.bf16.msra.mxu0 0
    %1788 = vmatprep.subr.bf16.mxu0 %v1762
    %1789 = vmatpush1.bf16.msra.mxu0 %v1761
    %1790 = vmatprep.subr.bf16.mxu0 %v1760
    %1791 = vmatpush1.bf16.msra.mxu0 %v1759
    %1792 = vmatprep.subr.bf16.mxu0 %v1758
    %1793 = vmatpush1.bf16.msra.mxu0 %v1757
    %1794 = vmatprep.subr.bf16.mxu0 %v1756
    %1795 = vmatpush1.bf16.msra.mxu0 %v1755
    %1796 = vmatprep.subr.bf16.mxu0 0
    %1797 = vmatpush2.bf16.msra.mxu0 0
    %1798 = vmatprep.subr.bf16.mxu0 0
    %1799 = vmatpush2.bf16.msra.mxu0 0
    %1800 = vmatprep.subr.bf16.mxu0 0
    %1801 = vmatpush2.bf16.msra.mxu0 0
    %1802 = vmatprep.subr.bf16.mxu0 0
    %1803 = vmatpush2.bf16.msra.mxu0 0
    %1804 = vmatprep.subr.bf16.mxu0 0
    %1805 = vmatpush2.bf16.msra.mxu0 0
    %1806 = vmatprep.subr.bf16.mxu0 0
    %1807 = vmatpush2.bf16.msra.mxu0 0
    %1808 = vmatprep.subr.bf16.mxu0 0
    %1809 = vmatpush2.bf16.msra.mxu0 0
    %1810 = vmatprep.subr.bf16.mxu0 0
    %1811 = vmatpush2.bf16.msra.mxu0 0
    %1812 = vmatprep.mubr.bf16.mxu0 0
    %1813 = vmatmul.mubr.bf16.gmra.mxu0 %v1772
    %v1814 = vpop.f32.mrf.mxu0
    %v1815 = vadd.f32 %v1724, %v1814
    %v1816 = vpop.f32.mrf.mxu0
    %v1817 = vadd.f32 %v1728, %v1816
    %v1818 = vpop.f32.mrf.mxu0
    %v1819 = vadd.f32 %v1724, %v1818
    %v1820 = vpop.f32.mrf.mxu0
    %v1821 = vadd.f32 %v1728, %v1820
    %1822 = vmatprep.mubr.bf16.mxu0 0
    %1823 = vmatmul.mubr.bf16.gmra.mxu0 %v1775
    %v1824 = vpop.f32.mrf.mxu0
    %v1825 = vadd.f32 %v1724, %v1824
    %v1826 = vpop.f32.mrf.mxu0
    %v1827 = vadd.f32 %v1728, %v1826
    %v1828 = vpop.f32.mrf.mxu0
    %v1829 = vadd.f32 %v1724, %v1828
    %v1830 = vpop.f32.mrf.mxu0
    %v1831 = vadd.f32 %v1728, %v1830
    %1832 = vmatprep.mubr.bf16.mxu0 0
    %1833 = vmatmul.mubr.bf16.gmra.mxu0 %v1778
    %v1834 = vpop.f32.mrf.mxu0
    %v1835 = vadd.f32 %v1724, %v1834
    %v1836 = vpop.f32.mrf.mxu0
    %v1837 = vadd.f32 %v1728, %v1836
    %v1838 = vpop.f32.mrf.mxu0
    %v1839 = vadd.f32 %v1724, %v1838
    %v1840 = vpop.f32.mrf.mxu0
    %v1841 = vadd.f32 %v1728, %v1840
    %1842 = vdwg.mxu0
    %v1843 = vmax.f32 %v1815, 0.0
    %v1844 = vmax.f32 %v1817, 0.0
    %v1845 = vmax.f32 %v1819, 0.0
    %v1846 = vmax.f32 %v1821, 0.0
    %v1847 = vmax.f32 %v1825, 0.0
    %v1848 = vmax.f32 %v1827, 0.0
    %v1849 = vmax.f32 %v1829, 0.0
    %v1850 = vmax.f32 %v1831, 0.0
    %v1851 = vmax.f32 %v1835, 0.0
    %v1852 = vmax.f32 %v1837, 0.0
    %v1853 = vmax.f32 %v1839, 0.0
    %v1854 = vmax.f32 %v1841, 0.0
    %v1855 = vld [vmem:[%s18] sm:$0xf]
    %v1856 = vld [vmem:[%s18 + $0x4] sm:$0xf]
    %v1857 = vld [vmem:[%s18 + $0x8] sm:$0xf]
    %v1858 = vld [vmem:[%s18 + $0xc] sm:$0xf]
    %v1859 = vld [vmem:[%s18 + $0x10] sm:$0xf]
    %v1860 = vld [vmem:[%s18 + $0x14] sm:$0xf]
    %v1861 = vld [vmem:[%s18 + $0x18] sm:$0xf]
    %v1862 = vld [vmem:[%s18 + $0x1c] sm:$0xf]
    %v1863 = vld [vmem:[%s18 + $0x20] sm:$0xf]
    %v1864 = vld [vmem:[%s18 + $0x24] sm:$0xf]
    %v1865 = vld [vmem:[%s18 + $0x28] sm:$0xf]
    %v1866 = vld [vmem:[%s18 + $0x2c] sm:$0xf]
    %v1867 = vld [vmem:[%s18 + $0x30] sm:$0xf]
    %v1868 = vld [vmem:[%s18 + $0x34] sm:$0xf]
    %v1869 = vld [vmem:[%s18 + $0x38] sm:$0xf]
    %v1870 = vld [vmem:[%s18 + $0x3c] sm:$0xf]
    %v1871 = vld [vmem:[%s18 + $0x40] sm:$0xf]
    %v1872 = vld [vmem:[%s18 + $0x44] sm:$0xf]
    %v1873 = vld [vmem:[%s18 + $0x48] sm:$0xf]
    %v1874 = vld [vmem:[%s18 + $0x4c] sm:$0xf]
    %v1875 = vld [vmem:[%s18 + $0x50] sm:$0xf]
    %v1876 = vld [vmem:[%s18 + $0x54] sm:$0xf]
    %v1877 = vld [vmem:[%s18 + $0x58] sm:$0xf]
    %v1878 = vld [vmem:[%s18 + $0x5c] sm:$0xf]
    %v1879 = vld [vmem:[%s18 + $0x60] sm:$0xf]
    %v1880 = vld [vmem:[%s18 + $0x64] sm:$0xf]
    %v1881 = vld [vmem:[%s18 + $0x68] sm:$0xf]
    %v1882 = vld [vmem:[%s18 + $0x6c] sm:$0xf]
    %v1883 = vld [vmem:[%s18 + $0x70] sm:$0xf]
    %v1884 = vld [vmem:[%s18 + $0x74] sm:$0xf]
    %v1885 = vld [vmem:[%s18 + $0x78] sm:$0xf]
    %v1886 = vld [vmem:[%s18 + $0x7c] sm:$0xf]
    %v1887 = vpack.c.bf16 %v1845, %v1843
    %v1888 = vpack.c.bf16 %v1846, %v1844
    %v1889 = vpack.c.bf16 %v1849, %v1847
    %v1890 = vpack.c.bf16 %v1850, %v1848
    %v1891 = vpack.c.bf16 %v1853, %v1851
    %v1892 = vpack.c.bf16 %v1854, %v1852
    %v1925 = vunpack.c.l.b16 %v1855
    %v1926 = vunpack.c.l.b16 %v1856
    %v1927 = vunpack.c.l.b16 %v1857
    %v1928 = vunpack.c.l.b16 %v1858
    %v1929 = vunpack.c.l.b16 %v1859
    %v1930 = vunpack.c.l.b16 %v1860
    %v1931 = vunpack.c.l.b16 %v1861
    %v1932 = vunpack.c.l.b16 %v1862
    %v1933 = vunpack.c.l.b16 %v1863
    %v1934 = vunpack.c.l.b16 %v1864
    %v1935 = vunpack.c.l.b16 %v1865
    %v1936 = vunpack.c.l.b16 %v1866
    %v1937 = vunpack.c.l.b16 %v1867
    %v1938 = vunpack.c.l.b16 %v1868
    %v1939 = vunpack.c.l.b16 %v1869
    %v1940 = vunpack.c.l.b16 %v1870
    %v1941 = vunpack.c.l.b16 %v1871
    %v1942 = vunpack.c.l.b16 %v1872
    %v1943 = vunpack.c.l.b16 %v1873
    %v1944 = vunpack.c.l.b16 %v1874
    %v1945 = vunpack.c.l.b16 %v1875
    %v1946 = vunpack.c.l.b16 %v1876
    %v1947 = vunpack.c.l.b16 %v1877
    %v1948 = vunpack.c.l.b16 %v1878
    %v1949 = vunpack.c.l.b16 %v1879
    %v1950 = vunpack.c.l.b16 %v1880
    %v1951 = vunpack.c.l.b16 %v1881
    %v1952 = vunpack.c.l.b16 %v1882
    %v1953 = vunpack.c.l.b16 %v1883
    %v1954 = vunpack.c.l.b16 %v1884
    %v1955 = vunpack.c.l.b16 %v1885
    %v1956 = vunpack.c.l.b16 %v1886
    %v1957 = vpack.c.b16 %v1926, %v1925
    %v1958 = vpack.c.b16 %v1928, %v1927
    %v1959 = vpack.c.b16 %v1930, %v1929
    %v1960 = vpack.c.b16 %v1932, %v1931
    %v1961 = vpack.c.b16 %v1934, %v1933
    %v1962 = vpack.c.b16 %v1936, %v1935
    %v1963 = vpack.c.b16 %v1938, %v1937
    %v1964 = vpack.c.b16 %v1940, %v1939
    %v1965 = vpack.c.b16 %v1942, %v1941
    %v1966 = vpack.c.b16 %v1944, %v1943
    %v1967 = vpack.c.b16 %v1946, %v1945
    %v1968 = vpack.c.b16 %v1948, %v1947
    %v1969 = vpack.c.b16 %v1950, %v1949
    %v1970 = vpack.c.b16 %v1952, %v1951
    %v1971 = vpack.c.b16 %v1954, %v1953
    %v1972 = vpack.c.b16 %v1956, %v1955
    %1989 = vmatprep.subr.bf16.mxu0 0
    %1990 = vmatpush1.bf16.msra.mxu0 %v1964
    %1991 = vmatprep.subr.bf16.mxu0 0
    %1992 = vmatpush1.bf16.msra.mxu0 %v1963
    %1993 = vmatprep.subr.bf16.mxu0 0
    %1994 = vmatpush1.bf16.msra.mxu0 %v1962
    %1995 = vmatprep.subr.bf16.mxu0 0
    %1996 = vmatpush1.bf16.msra.mxu0 %v1961
    %1997 = vmatprep.subr.bf16.mxu0 0
    %1998 = vmatpush1.bf16.msra.mxu0 %v1960
    %1999 = vmatprep.subr.bf16.mxu0 0
    %2000 = vmatpush1.bf16.msra.mxu0 %v1959
    %2001 = vmatprep.subr.bf16.mxu0 0
    %2002 = vmatpush1.bf16.msra.mxu0 %v1958
    %2003 = vmatprep.subr.bf16.mxu0 0
    %2004 = vmatpush1.bf16.msra.mxu0 %v1957
    %2005 = vmatprep.subr.bf16.mxu0 0
    %2006 = vmatpush2.bf16.msra.mxu0 %v1972
    %2007 = vmatprep.subr.bf16.mxu0 0
    %2008 = vmatpush2.bf16.msra.mxu0 %v1971
    %2009 = vmatprep.subr.bf16.mxu0 0
    %2010 = vmatpush2.bf16.msra.mxu0 %v1970
    %2011 = vmatprep.subr.bf16.mxu0 0
    %2012 = vmatpush2.bf16.msra.mxu0 %v1969
    %2013 = vmatprep.subr.bf16.mxu0 0
    %2014 = vmatpush2.bf16.msra.mxu0 %v1968
    %2015 = vmatprep.subr.bf16.mxu0 0
    %2016 = vmatpush2.bf16.msra.mxu0 %v1967
    %2017 = vmatprep.subr.bf16.mxu0 0
    %2018 = vmatpush2.bf16.msra.mxu0 %v1966
    %2019 = vmatprep.subr.bf16.mxu0 0
    %2020 = vmatpush2.bf16.msra.mxu0 %v1965
    %2021 = vmatprep.mubr.bf16.mxu0 %v1888
    %2022 = vmatmul.mubr.bf16.gmra.mxu0 %v1887
    %v2023 = vpop.f32.mrf.mxu0
    %v2024 = vadd.f32 0.0, %v2023
    %v2025 = vpop.f32.mrf.mxu0
    %v2026 = vpop.f32.mrf.mxu0
    %v2027 = vadd.f32 0.0, %v2026
    %v2028 = vpop.f32.mrf.mxu0
    %2029 = vmatprep.mubr.bf16.mxu0 %v1890
    %2030 = vmatmul.mubr.bf16.gmra.mxu0 %v1889
    %v2031 = vpop.f32.mrf.mxu0
    %v2032 = vadd.f32 0.0, %v2031
    %v2033 = vpop.f32.mrf.mxu0
    %v2034 = vpop.f32.mrf.mxu0
    %v2035 = vadd.f32 0.0, %v2034
    %v2036 = vpop.f32.mrf.mxu0
    %2037 = vmatprep.mubr.bf16.mxu0 %v1892
    %2038 = vmatmul.mubr.bf16.gmra.mxu0 %v1891
    %v2039 = vpop.f32.mrf.mxu0
    %v2040 = vadd.f32 0.0, %v2039
    %v2041 = vpop.f32.mrf.mxu0
    %v2042 = vpop.f32.mrf.mxu0
    %v2043 = vadd.f32 0.0, %v2042
    %v2044 = vpop.f32.mrf.mxu0
    %2045 = vdwg.mxu0
    %v2046 = vadd.f32 %v1604, %v2024
    %v2047 = vadd.f32 %v1605, %v2027
    %v2048 = vadd.f32 %v1606, %v2032
    %v2049 = vadd.f32 %v1607, %v2035
    %v2050 = vadd.f32 %v1608, %v2040
    %v2051 = vadd.f32 %v1609, %v2043
    %v2052 = vld [vmem:[%s19] sm:$0x1]
    %v2054 = vlaneseq
    %v2055 = vshrl.u32 %v2054, 7
    %v2056 = vsub.s32 0, %v2055
    %v2057 = vrot.slane %v2052, %v2056
    %v2059 = vadd.f32 %v2046, %v2057
    %v2060 = vadd.f32 %v2047, %v2057
    %v2061 = vadd.f32 %v2048, %v2057
    %v2062 = vadd.f32 %v2049, %v2057
    %v2063 = vadd.f32 %v2050, %v2057
    %v2064 = vadd.f32 %v2051, %v2057
    %s2065 = scalar_lea.vmem %s11, 4
    %v2066 = vld [vmem:[%s2065] sm:$0xf]
    %v2067 = vsel %vm252, %v2059, 0.0
    %2068 = vadd.xlane.f32.xlu0 %v2067
    %v2069 = vpop.xlane.xlu0 %2068
    %v2070 = vsel %vm252, %v2060, 0.0
    %2071 = vadd.xlane.f32.xlu0 %v2070
    %v2072 = vpop.xlane.xlu0 %2071
    %v2073 = vsel %vm252, %v2061, 0.0
    %2074 = vadd.xlane.f32.xlu0 %v2073
    %v2075 = vpop.xlane.xlu0 %2074
    %v2076 = vsel %vm252, %v2062, 0.0
    %2077 = vadd.xlane.f32.xlu0 %v2076
    %v2078 = vpop.xlane.xlu0 %2077
    %v2079 = vsel %vm252, %v2063, 0.0
    %2080 = vadd.xlane.f32.xlu0 %v2079
    %v2081 = vpop.xlane.xlu0 %2080
    %v2082 = vsel %vm252, %v2064, 0.0
    %2083 = vadd.xlane.f32.xlu0 %v2082
    %v2084 = vpop.xlane.xlu0 %2083
    %v2085 = vmul.f32 %v2069, %v549
    %v2086 = vmul.f32 %v2072, %v549
    %v2087 = vmul.f32 %v2075, %v549
    %v2088 = vmul.f32 %v2078, %v549
    %v2089 = vmul.f32 %v2081, %v549
    %v2090 = vmul.f32 %v2084, %v549
    %v2091 = vsub.f32 %v2059, %v2085
    %v2092 = vsub.f32 %v2060, %v2086
    %v2093 = vsub.f32 %v2061, %v2087
    %v2094 = vsub.f32 %v2062, %v2088
    %v2095 = vsub.f32 %v2063, %v2089
    %v2096 = vsub.f32 %v2064, %v2090
    %v2097 = vmul.f32 %v2091, %v2091
    %v2098 = vmul.f32 %v2092, %v2092
    %v2099 = vmul.f32 %v2093, %v2093
    %v2100 = vmul.f32 %v2094, %v2094
    %v2101 = vmul.f32 %v2095, %v2095
    %v2102 = vmul.f32 %v2096, %v2096
    %v2103 = vsel %vm252, %v2097, 0.0
    %2104 = vadd.xlane.f32.xlu0 %v2103
    %v2105 = vpop.xlane.xlu0 %2104
    %v2106 = vsel %vm252, %v2098, 0.0
    %2107 = vadd.xlane.f32.xlu0 %v2106
    %v2108 = vpop.xlane.xlu0 %2107
    %v2109 = vsel %vm252, %v2099, 0.0
    %2110 = vadd.xlane.f32.xlu0 %v2109
    %v2111 = vpop.xlane.xlu0 %2110
    %v2112 = vsel %vm252, %v2100, 0.0
    %2113 = vadd.xlane.f32.xlu0 %v2112
    %v2114 = vpop.xlane.xlu0 %2113
    %v2115 = vsel %vm252, %v2101, 0.0
    %2116 = vadd.xlane.f32.xlu0 %v2115
    %v2117 = vpop.xlane.xlu0 %2116
    %v2118 = vsel %vm252, %v2102, 0.0
    %2119 = vadd.xlane.f32.xlu0 %v2118
    %v2120 = vpop.xlane.xlu0 %2119
    %v2121 = vmul.f32 %v2105, %v549
    %v2122 = vmul.f32 %v2108, %v549
    %v2123 = vmul.f32 %v2111, %v549
    %v2124 = vmul.f32 %v2114, %v549
    %v2125 = vmul.f32 %v2117, %v549
    %v2126 = vmul.f32 %v2120, %v549
    %v2127 = vadd.f32 %v2121, 1e-05
    %v2128 = vadd.f32 %v2122, 1e-05
    %v2129 = vadd.f32 %v2123, 1e-05
    %v2130 = vadd.f32 %v2124, 1e-05
    %v2131 = vadd.f32 %v2125, 1e-05
    %v2132 = vadd.f32 %v2126, 1e-05
    %v2133 = vrsqrt.pop %v2127
    %v2134 = vrsqrt.pop %v2128
    %v2135 = vrsqrt.pop %v2129
    %v2136 = vrsqrt.pop %v2130
    %v2137 = vrsqrt.pop %v2131
    %v2138 = vrsqrt.pop %v2132
    %v2139 = vmul.f32 %v2091, %v2133
    %v2140 = vmul.f32 %v2092, %v2134
    %v2141 = vmul.f32 %v2093, %v2135
    %v2142 = vmul.f32 %v2094, %v2136
    %v2143 = vmul.f32 %v2095, %v2137
    %v2144 = vmul.f32 %v2096, %v2138
    %v2145 = vlaneseq
    %v2146 = vshrl.u32 %v2145, 7
    %v2147 = vsub.s32 0, %v2146
    %v2148 = vrot.slane %v2066, %v2147
    %v2149 = vmul.f32 %v2139, %v2148
    %v2150 = vmul.f32 %v2140, %v2148
    %v2151 = vmul.f32 %v2141, %v2148
    %v2152 = vmul.f32 %v2142, %v2148
    %v2153 = vmul.f32 %v2143, %v2148
    %v2154 = vmul.f32 %v2144, %v2148
    %v2155 = vlaneseq
    %v2156 = vshrl.u32 %v2155, 7
    %v2157 = vsub.s32 1, %v2156
    %v2158 = vrot.slane %v2066, %v2157
    %v2159 = vadd.f32 %v2149, %v2158
    %v2160 = vadd.f32 %v2150, %v2158
    %v2161 = vadd.f32 %v2151, %v2158
    %v2162 = vadd.f32 %v2152, %v2158
    %v2163 = vadd.f32 %v2153, %v2158
    %v2164 = vadd.f32 %v2154, %v2158
    %s2165 = scalar_lea.vmem %s12, 64
    %v2166 = vld [vmem:[%s2165] sm:$0xff]
    %v2167 = vld [vmem:[%s2165 + $0x8] sm:$0xff]
    %v2168 = vld [vmem:[%s2165 + $0x10] sm:$0xff]
    %v2169 = vld [vmem:[%s2165 + $0x18] sm:$0xff]
    %v2170 = vld [vmem:[%s2165 + $0x20] sm:$0xff]
    %v2171 = vld [vmem:[%s2165 + $0x28] sm:$0xff]
    %v2172 = vld [vmem:[%s2165 + $0x30] sm:$0xff]
    %v2173 = vld [vmem:[%s2165 + $0x38] sm:$0xff]
    %v2174 = vpack.c.bf16 %v2160, %v2159
    %v2175 = vpack.c.bf16 %v2162, %v2161
    %v2176 = vpack.c.bf16 %v2164, %v2163
    %s2177 = scalar_lea.vmem %s13, 2
    %v2178 = vld [vmem:[%s2177] sm:$0x3]
    %v2180 = vlaneseq
    %v2181 = vshrl.u32 %v2180, 7
    %v2182 = vsub.s32 0, %v2181
    %v2183 = vrot.slane %v2178, %v2182
    %v2184 = vlaneseq
    %v2185 = vshrl.u32 %v2184, 7
    %v2186 = vsub.s32 1, %v2185
    %v2187 = vrot.slane %v2178, %v2186
    %v2198 = vunpack.c.l.b16 %v2166
    %v2199 = vunpack.c.h.b16 %v2166
    %v2200 = vunpack.c.l.b16 %v2167
    %v2201 = vunpack.c.h.b16 %v2167
    %v2202 = vunpack.c.l.b16 %v2168
    %v2203 = vunpack.c.h.b16 %v2168
    %v2204 = vunpack.c.l.b16 %v2169
    %v2205 = vunpack.c.h.b16 %v2169
    %v2206 = vunpack.c.l.b16 %v2170
    %v2207 = vunpack.c.h.b16 %v2170
    %v2208 = vunpack.c.l.b16 %v2171
    %v2209 = vunpack.c.h.b16 %v2171
    %v2210 = vunpack.c.l.b16 %v2172
    %v2211 = vunpack.c.h.b16 %v2172
    %v2212 = vunpack.c.l.b16 %v2173
    %v2213 = vunpack.c.h.b16 %v2173
    %v2214 = vpack.c.b16 %v2200, %v2198
    %v2215 = vpack.c.b16 %v2201, %v2199
    %v2216 = vpack.c.b16 %v2204, %v2202
    %v2217 = vpack.c.b16 %v2205, %v2203
    %v2218 = vpack.c.b16 %v2208, %v2206
    %v2219 = vpack.c.b16 %v2209, %v2207
    %v2220 = vpack.c.b16 %v2212, %v2210
    %v2221 = vpack.c.b16 %v2213, %v2211
    %v2231 = vsel %vm252, %v2174, 0
    %v2234 = vsel %vm252, %v2175, 0
    %v2237 = vsel %vm252, %v2176, 0
    %2239 = vmatprep.subr.bf16.mxu0 0
    %2240 = vmatpush1.bf16.msra.mxu0 0
    %2241 = vmatprep.subr.bf16.mxu0 0
    %2242 = vmatpush1.bf16.msra.mxu0 0
    %2243 = vmatprep.subr.bf16.mxu0 0
    %2244 = vmatpush1.bf16.msra.mxu0 0
    %2245 = vmatprep.subr.bf16.mxu0 0
    %2246 = vmatpush1.bf16.msra.mxu0 0
    %2247 = vmatprep.subr.bf16.mxu0 %v2221
    %2248 = vmatpush1.bf16.msra.mxu0 %v2220
    %2249 = vmatprep.subr.bf16.mxu0 %v2219
    %2250 = vmatpush1.bf16.msra.mxu0 %v2218
    %2251 = vmatprep.subr.bf16.mxu0 %v2217
    %2252 = vmatpush1.bf16.msra.mxu0 %v2216
    %2253 = vmatprep.subr.bf16.mxu0 %v2215
    %2254 = vmatpush1.bf16.msra.mxu0 %v2214
    %2255 = vmatprep.subr.bf16.mxu0 0
    %2256 = vmatpush2.bf16.msra.mxu0 0
    %2257 = vmatprep.subr.bf16.mxu0 0
    %2258 = vmatpush2.bf16.msra.mxu0 0
    %2259 = vmatprep.subr.bf16.mxu0 0
    %2260 = vmatpush2.bf16.msra.mxu0 0
    %2261 = vmatprep.subr.bf16.mxu0 0
    %2262 = vmatpush2.bf16.msra.mxu0 0
    %2263 = vmatprep.subr.bf16.mxu0 0
    %2264 = vmatpush2.bf16.msra.mxu0 0
    %2265 = vmatprep.subr.bf16.mxu0 0
    %2266 = vmatpush2.bf16.msra.mxu0 0
    %2267 = vmatprep.subr.bf16.mxu0 0
    %2268 = vmatpush2.bf16.msra.mxu0 0
    %2269 = vmatprep.subr.bf16.mxu0 0
    %2270 = vmatpush2.bf16.msra.mxu0 0
    %2271 = vmatprep.mubr.bf16.mxu0 0
    %2272 = vmatmul.mubr.bf16.gmra.mxu0 %v2231
    %v2273 = vpop.f32.mrf.mxu0
    %v2274 = vadd.f32 %v2183, %v2273
    %v2275 = vpop.f32.mrf.mxu0
    %v2276 = vadd.f32 %v2187, %v2275
    %v2277 = vpop.f32.mrf.mxu0
    %v2278 = vadd.f32 %v2183, %v2277
    %v2279 = vpop.f32.mrf.mxu0
    %v2280 = vadd.f32 %v2187, %v2279
    %2281 = vmatprep.mubr.bf16.mxu0 0
    %2282 = vmatmul.mubr.bf16.gmra.mxu0 %v2234
    %v2283 = vpop.f32.mrf.mxu0
    %v2284 = vadd.f32 %v2183, %v2283
    %v2285 = vpop.f32.mrf.mxu0
    %v2286 = vadd.f32 %v2187, %v2285
    %v2287 = vpop.f32.mrf.mxu0
    %v2288 = vadd.f32 %v2183, %v2287
    %v2289 = vpop.f32.mrf.mxu0
    %v2290 = vadd.f32 %v2187, %v2289
    %2291 = vmatprep.mubr.bf16.mxu0 0
    %2292 = vmatmul.mubr.bf16.gmra.mxu0 %v2237
    %v2293 = vpop.f32.mrf.mxu0
    %v2294 = vadd.f32 %v2183, %v2293
    %v2295 = vpop.f32.mrf.mxu0
    %v2296 = vadd.f32 %v2187, %v2295
    %v2297 = vpop.f32.mrf.mxu0
    %v2298 = vadd.f32 %v2183, %v2297
    %v2299 = vpop.f32.mrf.mxu0
    %v2300 = vadd.f32 %v2187, %v2299
    %2301 = vdwg.mxu0
    %v2302 = vpack.c.bf16 %v2278, %v2274
    %v2303 = vpack.c.bf16 %v2284, %v2284
    %v2304 = vpack.c.bf16 %v2294, %v2288
    %v2305 = vpack.c.bf16 %v2298, %v2298
    %v2306 = vpack.c.bf16 %v2280, %v2276
    %v2307 = vpack.c.bf16 %v2286, %v2286
    %v2308 = vpack.c.bf16 %v2296, %v2290
    %v2309 = vpack.c.bf16 %v2300, %v2300
    %2312 = vrot.lane.b32.xlu0 %v2302, 64
    %v2313 = vpop.permute.xlu0 %2312
    %2314 = vrot.lane.b32.xlu0 %v2303, 64
    %v2315 = vpop.permute.xlu0 %2314
    %v2317 = vsel %vm779, %v2302, 0
    %v2320 = vsel %vm779, %v2303, 0
    %v2323 = vsel %vm779, %v2313, 0
    %v2326 = vsel %vm779, %v2315, 0
    %2328 = vmatprep.subr.bf16.mxu0 0
    %2329 = vmatpush1.bf16.xpose.msra.mxu0 0
    %2330 = vmatprep.subr.bf16.mxu0 0
    %2331 = vmatpush1.bf16.xpose.msra.mxu0 0
    %2332 = vmatprep.subr.bf16.mxu0 0
    %2333 = vmatpush1.bf16.xpose.msra.mxu0 0
    %2334 = vmatprep.subr.bf16.mxu0 0
    %2335 = vmatpush1.bf16.xpose.msra.mxu0 0
    %2336 = vmatprep.subr.bf16.mxu0 0
    %2337 = vmatpush1.bf16.xpose.msra.mxu0 0
    %2338 = vmatprep.subr.bf16.mxu0 0
    %2339 = vmatpush1.bf16.xpose.msra.mxu0 0
    %2340 = vmatprep.subr.bf16.mxu0 0
    %2341 = vmatpush1.bf16.xpose.msra.mxu0 %v2326
    %2342 = vmatprep.subr.bf16.mxu0 0
    %2343 = vmatpush1.bf16.xpose.msra.mxu0 %v2323
    %2344 = vmatprep.subr.bf16.mxu0 0
    %2345 = vmatpush2.bf16.xpose.msra.mxu0 0
    %2346 = vmatprep.subr.bf16.mxu0 0
    %2347 = vmatpush2.bf16.xpose.msra.mxu0 0
    %2348 = vmatprep.subr.bf16.mxu0 0
    %2349 = vmatpush2.bf16.xpose.msra.mxu0 0
    %2350 = vmatprep.subr.bf16.mxu0 0
    %2351 = vmatpush2.bf16.xpose.msra.mxu0 0
    %2352 = vmatprep.subr.bf16.mxu0 0
    %2353 = vmatpush2.bf16.xpose.msra.mxu0 0
    %2354 = vmatprep.subr.bf16.mxu0 0
    %2355 = vmatpush2.bf16.xpose.msra.mxu0 0
    %2356 = vmatprep.subr.bf16.mxu0 0
    %2357 = vmatpush2.bf16.xpose.msra.mxu0 0
    %2358 = vmatprep.subr.bf16.mxu0 0
    %2359 = vmatpush2.bf16.xpose.msra.mxu0 0
    %2360 = vmatprep.mubr.bf16.mxu0 0
    %2361 = vmatmul.mubr.bf16.gmra.mxu0 %v2317
    %v2362 = vpop.f32.mrf.mxu0
    %v2363 = vadd.f32 0.0, %v2362
    %v2364 = vpop.f32.mrf.mxu0
    %v2365 = vpop.f32.mrf.mxu0
    %v2366 = vadd.f32 0.0, %v2365
    %v2367 = vpop.f32.mrf.mxu0
    %2368 = vmatprep.mubr.bf16.mxu0 0
    %2369 = vmatmul.mubr.bf16.gmra.mxu0 %v2320
    %v2370 = vpop.f32.mrf.mxu0
    %v2371 = vadd.f32 0.0, %v2370
    %v2372 = vpop.f32.mrf.mxu0
    %v2373 = vpop.f32.mrf.mxu0
    %v2374 = vpop.f32.mrf.mxu0
    %2375 = vdwg.mxu0
    %2378 = vrot.lane.b32.xlu0 %v2304, 64
    %v2379 = vpop.permute.xlu0 %2378
    %2380 = vrot.lane.b32.xlu0 %v2305, 64
    %v2381 = vpop.permute.xlu0 %2380
    %v2383 = vsel %vm779, %v2304, 0
    %v2386 = vsel %vm779, %v2305, 0
    %v2389 = vsel %vm779, %v2379, 0
    %v2392 = vsel %vm779, %v2381, 0
    %2394 = vmatprep.subr.bf16.mxu0 0
    %2395 = vmatpush1.bf16.xpose.msra.mxu0 0
    %2396 = vmatprep.subr.bf16.mxu0 0
    %2397 = vmatpush1.bf16.xpose.msra.mxu0 0
    %2398 = vmatprep.subr.bf16.mxu0 0
    %2399 = vmatpush1.bf16.xpose.msra.mxu0 0
    %2400 = vmatprep.subr.bf16.mxu0 0
    %2401 = vmatpush1.bf16.xpose.msra.mxu0 0
    %2402 = vmatprep.subr.bf16.mxu0 0
    %2403 = vmatpush1.bf16.xpose.msra.mxu0 0
    %2404 = vmatprep.subr.bf16.mxu0 0
    %2405 = vmatpush1.bf16.xpose.msra.mxu0 0
    %2406 = vmatprep.subr.bf16.mxu0 0
    %2407 = vmatpush1.bf16.xpose.msra.mxu0 %v2392
    %2408 = vmatprep.subr.bf16.mxu0 0
    %2409 = vmatpush1.bf16.xpose.msra.mxu0 %v2389
    %2410 = vmatprep.subr.bf16.mxu0 0
    %2411 = vmatpush2.bf16.xpose.msra.mxu0 0
    %2412 = vmatprep.subr.bf16.mxu0 0
    %2413 = vmatpush2.bf16.xpose.msra.mxu0 0
    %2414 = vmatprep.subr.bf16.mxu0 0
    %2415 = vmatpush2.bf16.xpose.msra.mxu0 0
    %2416 = vmatprep.subr.bf16.mxu0 0
    %2417 = vmatpush2.bf16.xpose.msra.mxu0 0
    %2418 = vmatprep.subr.bf16.mxu0 0
    %2419 = vmatpush2.bf16.xpose.msra.mxu0 0
    %2420 = vmatprep.subr.bf16.mxu0 0
    %2421 = vmatpush2.bf16.xpose.msra.mxu0 0
    %2422 = vmatprep.subr.bf16.mxu0 0
    %2423 = vmatpush2.bf16.xpose.msra.mxu0 0
    %2424 = vmatprep.subr.bf16.mxu0 0
    %2425 = vmatpush2.bf16.xpose.msra.mxu0 0
    %2426 = vmatprep.mubr.bf16.mxu0 0
    %2427 = vmatmul.mubr.bf16.gmra.mxu0 %v2383
    %v2428 = vpop.f32.mrf.mxu0
    %v2429 = vadd.f32 0.0, %v2428
    %v2430 = vpop.f32.mrf.mxu0
    %v2431 = vpop.f32.mrf.mxu0
    %v2432 = vadd.f32 0.0, %v2431
    %v2433 = vpop.f32.mrf.mxu0
    %2434 = vmatprep.mubr.bf16.mxu0 0
    %2435 = vmatmul.mubr.bf16.gmra.mxu0 %v2386
    %v2436 = vpop.f32.mrf.mxu0
    %v2437 = vadd.f32 0.0, %v2436
    %v2438 = vpop.f32.mrf.mxu0
    %v2439 = vpop.f32.mrf.mxu0
    %v2440 = vpop.f32.mrf.mxu0
    %2441 = vdwg.mxu0
    %v2442 = vmul.f32 %v2363, 0.17677669
    %v2443 = vmul.f32 %v2366, 0.17677669
    %v2444 = vmul.f32 %v2371, 0.17677669
    %v2445 = vmul.f32 %v2429, 0.17677669
    %v2446 = vmul.f32 %v2432, 0.17677669
    %v2447 = vmul.f32 %v2437, 0.17677669
    %v2448 = vadd.f32 %v2442, %v915
    %v2449 = vadd.f32 %v2443, %v915
    %v2450 = vadd.f32 %v2444, %v915
    %v2451 = vadd.f32 %v2445, %v919
    %v2452 = vadd.f32 %v2446, %v919
    %v2453 = vadd.f32 %v2447, %v919
    %v2454 = vsel %vm928, %v2448, -inf
    %2455 = vmax.xlane.f32.xlu0 %v2454
    %v2456 = vpop.xlane.xlu0 %2455
    %v2457 = vsel %vm928, %v2449, -inf
    %2458 = vmax.xlane.f32.xlu0 %v2457
    %v2459 = vpop.xlane.xlu0 %2458
    %v2460 = vsel %vm928, %v2450, -inf
    %2461 = vmax.xlane.f32.xlu0 %v2460
    %v2462 = vpop.xlane.xlu0 %2461
    %v2463 = vsel %vm928, %v2451, -inf
    %2464 = vmax.xlane.f32.xlu0 %v2463
    %v2465 = vpop.xlane.xlu0 %2464
    %v2466 = vsel %vm928, %v2452, -inf
    %2467 = vmax.xlane.f32.xlu0 %v2466
    %v2468 = vpop.xlane.xlu0 %2467
    %v2469 = vsel %vm928, %v2453, -inf
    %2470 = vmax.xlane.f32.xlu0 %v2469
    %v2471 = vpop.xlane.xlu0 %2470
    %v2472 = vsub.f32 %v2448, %v2456
    %v2473 = vsub.f32 %v2449, %v2459
    %v2474 = vsub.f32 %v2450, %v2462
    %v2475 = vsub.f32 %v2451, %v2465
    %v2476 = vsub.f32 %v2452, %v2468
    %v2477 = vsub.f32 %v2453, %v2471
    %v2478 = vmul.f32 %v2472, 1.442695
    %v2479 = vpow.pop %v2478
    %v2480 = vmul.f32 %v2473, 1.442695
    %v2481 = vpow.pop %v2480
    %v2482 = vmul.f32 %v2474, 1.442695
    %v2483 = vpow.pop %v2482
    %v2484 = vmul.f32 %v2475, 1.442695
    %v2485 = vpow.pop %v2484
    %v2486 = vmul.f32 %v2476, 1.442695
    %v2487 = vpow.pop %v2486
    %v2488 = vmul.f32 %v2477, 1.442695
    %v2489 = vpow.pop %v2488
    %v2490 = vsel %vm928, %v2479, 0.0
    %2491 = vadd.xlane.f32.xlu0 %v2490
    %v2492 = vpop.xlane.xlu0 %2491
    %v2493 = vsel %vm928, %v2481, 0.0
    %2494 = vadd.xlane.f32.xlu0 %v2493
    %v2495 = vpop.xlane.xlu0 %2494
    %v2496 = vsel %vm928, %v2483, 0.0
    %2497 = vadd.xlane.f32.xlu0 %v2496
    %v2498 = vpop.xlane.xlu0 %2497
    %v2499 = vsel %vm928, %v2485, 0.0
    %2500 = vadd.xlane.f32.xlu0 %v2499
    %v2501 = vpop.xlane.xlu0 %2500
    %v2502 = vsel %vm928, %v2487, 0.0
    %2503 = vadd.xlane.f32.xlu0 %v2502
    %v2504 = vpop.xlane.xlu0 %2503
    %v2505 = vsel %vm928, %v2489, 0.0
    %2506 = vadd.xlane.f32.xlu0 %v2505
    %v2507 = vpop.xlane.xlu0 %2506
    %v2508 = vrcp.pop %v2492
    %v2509 = vrcp.pop %v2495
    %v2510 = vrcp.pop %v2498
    %v2511 = vrcp.pop %v2501
    %v2512 = vrcp.pop %v2504
    %v2513 = vrcp.pop %v2507
    %v2514 = vmul.f32 %v2479, %v2508
    %v2515 = vmul.f32 %v2481, %v2509
    %v2516 = vmul.f32 %v2483, %v2510
    %v2517 = vmul.f32 %v2485, %v2511
    %v2518 = vmul.f32 %v2487, %v2512
    %v2519 = vmul.f32 %v2489, %v2513
    %v2520 = vpack.c.bf16 %v2515, %v2514
    %v2521 = vpack.c.bf16 %v2516, %v2516
    %v2522 = vpack.c.bf16 %v2518, %v2517
    %v2523 = vpack.c.bf16 %v2519, %v2519
    %v2525 = vsel %vm928, %v2520, 0
    %v2528 = vsel %vm928, %v2521, 0
    %v2531 = vsel %vm1005, %v2307, 0
    %2533 = vmatprep.subr.bf16.mxu0 0
    %2534 = vmatpush1.bf16.msra.mxu0 0
    %2535 = vmatprep.subr.bf16.mxu0 0
    %2536 = vmatpush1.bf16.msra.mxu0 0
    %2537 = vmatprep.subr.bf16.mxu0 0
    %2538 = vmatpush1.bf16.msra.mxu0 0
    %2539 = vmatprep.subr.bf16.mxu0 0
    %2540 = vmatpush1.bf16.msra.mxu0 0
    %2541 = vmatprep.subr.bf16.mxu0 0
    %2542 = vmatpush1.bf16.msra.mxu0 0
    %2543 = vmatprep.subr.bf16.mxu0 0
    %2544 = vmatpush1.bf16.msra.mxu0 0
    %2545 = vmatprep.subr.bf16.mxu0 0
    %2546 = vmatpush1.bf16.msra.mxu0 %v2531
    %2547 = vmatprep.subr.bf16.mxu0 0
    %2548 = vmatpush1.bf16.msra.mxu0 %v2306
    %2549 = vmatprep.subr.bf16.mxu0 0
    %2550 = vmatpush2.bf16.msra.mxu0 0
    %2551 = vmatprep.subr.bf16.mxu0 0
    %2552 = vmatpush2.bf16.msra.mxu0 0
    %2553 = vmatprep.subr.bf16.mxu0 0
    %2554 = vmatpush2.bf16.msra.mxu0 0
    %2555 = vmatprep.subr.bf16.mxu0 0
    %2556 = vmatpush2.bf16.msra.mxu0 0
    %2557 = vmatprep.subr.bf16.mxu0 0
    %2558 = vmatpush2.bf16.msra.mxu0 0
    %2559 = vmatprep.subr.bf16.mxu0 0
    %2560 = vmatpush2.bf16.msra.mxu0 0
    %2561 = vmatprep.subr.bf16.mxu0 0
    %2562 = vmatpush2.bf16.msra.mxu0 0
    %2563 = vmatprep.subr.bf16.mxu0 0
    %2564 = vmatpush2.bf16.msra.mxu0 0
    %2565 = vmatprep.mubr.bf16.mxu0 0
    %2566 = vmatmul.mubr.bf16.gmra.mxu0 %v2525
    %v2567 = vpop.f32.mrf.mxu0
    %v2568 = vadd.f32 0.0, %v2567
    %v2569 = vpop.f32.mrf.mxu0
    %v2570 = vpop.f32.mrf.mxu0
    %v2571 = vadd.f32 0.0, %v2570
    %v2572 = vpop.f32.mrf.mxu0
    %2573 = vmatprep.mubr.bf16.mxu0 0
    %2574 = vmatmul.mubr.bf16.gmra.mxu0 %v2528
    %v2575 = vpop.f32.mrf.mxu0
    %v2576 = vadd.f32 0.0, %v2575
    %v2577 = vpop.f32.mrf.mxu0
    %v2578 = vpop.f32.mrf.mxu0
    %v2579 = vpop.f32.mrf.mxu0
    %2580 = vdwg.mxu0
    %v2582 = vsel %vm928, %v2522, 0
    %v2585 = vsel %vm928, %v2523, 0
    %v2588 = vsel %vm1005, %v2309, 0
    %2590 = vmatprep.subr.bf16.mxu0 0
    %2591 = vmatpush1.bf16.msra.mxu0 0
    %2592 = vmatprep.subr.bf16.mxu0 0
    %2593 = vmatpush1.bf16.msra.mxu0 0
    %2594 = vmatprep.subr.bf16.mxu0 0
    %2595 = vmatpush1.bf16.msra.mxu0 0
    %2596 = vmatprep.subr.bf16.mxu0 0
    %2597 = vmatpush1.bf16.msra.mxu0 0
    %2598 = vmatprep.subr.bf16.mxu0 0
    %2599 = vmatpush1.bf16.msra.mxu0 0
    %2600 = vmatprep.subr.bf16.mxu0 0
    %2601 = vmatpush1.bf16.msra.mxu0 0
    %2602 = vmatprep.subr.bf16.mxu0 0
    %2603 = vmatpush1.bf16.msra.mxu0 %v2588
    %2604 = vmatprep.subr.bf16.mxu0 0
    %2605 = vmatpush1.bf16.msra.mxu0 %v2308
    %2606 = vmatprep.subr.bf16.mxu0 0
    %2607 = vmatpush2.bf16.msra.mxu0 0
    %2608 = vmatprep.subr.bf16.mxu0 0
    %2609 = vmatpush2.bf16.msra.mxu0 0
    %2610 = vmatprep.subr.bf16.mxu0 0
    %2611 = vmatpush2.bf16.msra.mxu0 0
    %2612 = vmatprep.subr.bf16.mxu0 0
    %2613 = vmatpush2.bf16.msra.mxu0 0
    %2614 = vmatprep.subr.bf16.mxu0 0
    %2615 = vmatpush2.bf16.msra.mxu0 0
    %2616 = vmatprep.subr.bf16.mxu0 0
    %2617 = vmatpush2.bf16.msra.mxu0 0
    %2618 = vmatprep.subr.bf16.mxu0 0
    %2619 = vmatpush2.bf16.msra.mxu0 0
    %2620 = vmatprep.subr.bf16.mxu0 0
    %2621 = vmatpush2.bf16.msra.mxu0 0
    %2622 = vmatprep.mubr.bf16.mxu0 0
    %2623 = vmatmul.mubr.bf16.gmra.mxu0 %v2582
    %v2624 = vpop.f32.mrf.mxu0
    %v2625 = vadd.f32 0.0, %v2624
    %v2626 = vpop.f32.mrf.mxu0
    %v2627 = vpop.f32.mrf.mxu0
    %v2628 = vadd.f32 0.0, %v2627
    %v2629 = vpop.f32.mrf.mxu0
    %2630 = vmatprep.mubr.bf16.mxu0 0
    %2631 = vmatmul.mubr.bf16.gmra.mxu0 %v2585
    %v2632 = vpop.f32.mrf.mxu0
    %v2633 = vadd.f32 0.0, %v2632
    %v2634 = vpop.f32.mrf.mxu0
    %v2635 = vpop.f32.mrf.mxu0
    %v2636 = vpop.f32.mrf.mxu0
    %2637 = vdwg.mxu0
    %2638 = vrot.lane.b32.xlu0 %v2302, 96
    %v2639 = vpop.permute.xlu0 %2638
    %2640 = vrot.lane.b32.xlu0 %v2303, 96
    %v2641 = vpop.permute.xlu0 %2640
    %2642 = vrot.lane.b32.xlu0 %v2302, 32
    %v2643 = vpop.permute.xlu0 %2642
    %2644 = vrot.lane.b32.xlu0 %v2303, 32
    %v2645 = vpop.permute.xlu0 %2644
    %v2647 = vsel %vm779, %v2639, 0
    %v2650 = vsel %vm779, %v2641, 0
    %v2653 = vsel %vm779, %v2643, 0
    %v2656 = vsel %vm779, %v2645, 0
    %2658 = vmatprep.subr.bf16.mxu0 0
    %2659 = vmatpush1.bf16.xpose.msra.mxu0 0
    %2660 = vmatprep.subr.bf16.mxu0 0
    %2661 = vmatpush1.bf16.xpose.msra.mxu0 0
    %2662 = vmatprep.subr.bf16.mxu0 0
    %2663 = vmatpush1.bf16.xpose.msra.mxu0 0
    %2664 = vmatprep.subr.bf16.mxu0 0
    %2665 = vmatpush1.bf16.xpose.msra.mxu0 0
    %2666 = vmatprep.subr.bf16.mxu0 0
    %2667 = vmatpush1.bf16.xpose.msra.mxu0 0
    %2668 = vmatprep.subr.bf16.mxu0 0
    %2669 = vmatpush1.bf16.xpose.msra.mxu0 0
    %2670 = vmatprep.subr.bf16.mxu0 0
    %2671 = vmatpush1.bf16.xpose.msra.mxu0 %v2656
    %2672 = vmatprep.subr.bf16.mxu0 0
    %2673 = vmatpush1.bf16.xpose.msra.mxu0 %v2653
    %2674 = vmatprep.subr.bf16.mxu0 0
    %2675 = vmatpush2.bf16.xpose.msra.mxu0 0
    %2676 = vmatprep.subr.bf16.mxu0 0
    %2677 = vmatpush2.bf16.xpose.msra.mxu0 0
    %2678 = vmatprep.subr.bf16.mxu0 0
    %2679 = vmatpush2.bf16.xpose.msra.mxu0 0
    %2680 = vmatprep.subr.bf16.mxu0 0
    %2681 = vmatpush2.bf16.xpose.msra.mxu0 0
    %2682 = vmatprep.subr.bf16.mxu0 0
    %2683 = vmatpush2.bf16.xpose.msra.mxu0 0
    %2684 = vmatprep.subr.bf16.mxu0 0
    %2685 = vmatpush2.bf16.xpose.msra.mxu0 0
    %2686 = vmatprep.subr.bf16.mxu0 0
    %2687 = vmatpush2.bf16.xpose.msra.mxu0 0
    %2688 = vmatprep.subr.bf16.mxu0 0
    %2689 = vmatpush2.bf16.xpose.msra.mxu0 0
    %2690 = vmatprep.mubr.bf16.mxu0 0
    %2691 = vmatmul.mubr.bf16.gmra.mxu0 %v2647
    %v2692 = vpop.f32.mrf.mxu0
    %v2693 = vadd.f32 0.0, %v2692
    %v2694 = vpop.f32.mrf.mxu0
    %v2695 = vpop.f32.mrf.mxu0
    %v2696 = vadd.f32 0.0, %v2695
    %v2697 = vpop.f32.mrf.mxu0
    %2698 = vmatprep.mubr.bf16.mxu0 0
    %2699 = vmatmul.mubr.bf16.gmra.mxu0 %v2650
    %v2700 = vpop.f32.mrf.mxu0
    %v2701 = vadd.f32 0.0, %v2700
    %v2702 = vpop.f32.mrf.mxu0
    %v2703 = vpop.f32.mrf.mxu0
    %v2704 = vpop.f32.mrf.mxu0
    %2705 = vdwg.mxu0
    %2706 = vrot.lane.b32.xlu0 %v2304, 96
    %v2707 = vpop.permute.xlu0 %2706
    %2708 = vrot.lane.b32.xlu0 %v2305, 96
    %v2709 = vpop.permute.xlu0 %2708
    %2710 = vrot.lane.b32.xlu0 %v2304, 32
    %v2711 = vpop.permute.xlu0 %2710
    %2712 = vrot.lane.b32.xlu0 %v2305, 32
    %v2713 = vpop.permute.xlu0 %2712
    %v2715 = vsel %vm779, %v2707, 0
    %v2718 = vsel %vm779, %v2709, 0
    %v2721 = vsel %vm779, %v2711, 0
    %v2724 = vsel %vm779, %v2713, 0
    %2726 = vmatprep.subr.bf16.mxu0 0
    %2727 = vmatpush1.bf16.xpose.msra.mxu0 0
    %2728 = vmatprep.subr.bf16.mxu0 0
    %2729 = vmatpush1.bf16.xpose.msra.mxu0 0
    %2730 = vmatprep.subr.bf16.mxu0 0
    %2731 = vmatpush1.bf16.xpose.msra.mxu0 0
    %2732 = vmatprep.subr.bf16.mxu0 0
    %2733 = vmatpush1.bf16.xpose.msra.mxu0 0
    %2734 = vmatprep.subr.bf16.mxu0 0
    %2735 = vmatpush1.bf16.xpose.msra.mxu0 0
    %2736 = vmatprep.subr.bf16.mxu0 0
    %2737 = vmatpush1.bf16.xpose.msra.mxu0 0
    %2738 = vmatprep.subr.bf16.mxu0 0
    %2739 = vmatpush1.bf16.xpose.msra.mxu0 %v2724
    %2740 = vmatprep.subr.bf16.mxu0 0
    %2741 = vmatpush1.bf16.xpose.msra.mxu0 %v2721
    %2742 = vmatprep.subr.bf16.mxu0 0
    %2743 = vmatpush2.bf16.xpose.msra.mxu0 0
    %2744 = vmatprep.subr.bf16.mxu0 0
    %2745 = vmatpush2.bf16.xpose.msra.mxu0 0
    %2746 = vmatprep.subr.bf16.mxu0 0
    %2747 = vmatpush2.bf16.xpose.msra.mxu0 0
    %2748 = vmatprep.subr.bf16.mxu0 0
    %2749 = vmatpush2.bf16.xpose.msra.mxu0 0
    %2750 = vmatprep.subr.bf16.mxu0 0
    %2751 = vmatpush2.bf16.xpose.msra.mxu0 0
    %2752 = vmatprep.subr.bf16.mxu0 0
    %2753 = vmatpush2.bf16.xpose.msra.mxu0 0
    %2754 = vmatprep.subr.bf16.mxu0 0
    %2755 = vmatpush2.bf16.xpose.msra.mxu0 0
    %2756 = vmatprep.subr.bf16.mxu0 0
    %2757 = vmatpush2.bf16.xpose.msra.mxu0 0
    %2758 = vmatprep.mubr.bf16.mxu0 0
    %2759 = vmatmul.mubr.bf16.gmra.mxu0 %v2715
    %v2760 = vpop.f32.mrf.mxu0
    %v2761 = vadd.f32 0.0, %v2760
    %v2762 = vpop.f32.mrf.mxu0
    %v2763 = vpop.f32.mrf.mxu0
    %v2764 = vadd.f32 0.0, %v2763
    %v2765 = vpop.f32.mrf.mxu0
    %2766 = vmatprep.mubr.bf16.mxu0 0
    %2767 = vmatmul.mubr.bf16.gmra.mxu0 %v2718
    %v2768 = vpop.f32.mrf.mxu0
    %v2769 = vadd.f32 0.0, %v2768
    %v2770 = vpop.f32.mrf.mxu0
    %v2771 = vpop.f32.mrf.mxu0
    %v2772 = vpop.f32.mrf.mxu0
    %2773 = vdwg.mxu0
    %v2774 = vmul.f32 %v2693, 0.17677669
    %v2775 = vmul.f32 %v2696, 0.17677669
    %v2776 = vmul.f32 %v2701, 0.17677669
    %v2777 = vmul.f32 %v2761, 0.17677669
    %v2778 = vmul.f32 %v2764, 0.17677669
    %v2779 = vmul.f32 %v2769, 0.17677669
    %v2780 = vadd.f32 %v2774, %v915
    %v2781 = vadd.f32 %v2775, %v915
    %v2782 = vadd.f32 %v2776, %v915
    %v2783 = vadd.f32 %v2777, %v919
    %v2784 = vadd.f32 %v2778, %v919
    %v2785 = vadd.f32 %v2779, %v919
    %v2786 = vsel %vm928, %v2780, -inf
    %2787 = vmax.xlane.f32.xlu0 %v2786
    %v2788 = vpop.xlane.xlu0 %2787
    %v2789 = vsel %vm928, %v2781, -inf
    %2790 = vmax.xlane.f32.xlu0 %v2789
    %v2791 = vpop.xlane.xlu0 %2790
    %v2792 = vsel %vm928, %v2782, -inf
    %2793 = vmax.xlane.f32.xlu0 %v2792
    %v2794 = vpop.xlane.xlu0 %2793
    %v2795 = vsel %vm928, %v2783, -inf
    %2796 = vmax.xlane.f32.xlu0 %v2795
    %v2797 = vpop.xlane.xlu0 %2796
    %v2798 = vsel %vm928, %v2784, -inf
    %2799 = vmax.xlane.f32.xlu0 %v2798
    %v2800 = vpop.xlane.xlu0 %2799
    %v2801 = vsel %vm928, %v2785, -inf
    %2802 = vmax.xlane.f32.xlu0 %v2801
    %v2803 = vpop.xlane.xlu0 %2802
    %v2804 = vsub.f32 %v2780, %v2788
    %v2805 = vsub.f32 %v2781, %v2791
    %v2806 = vsub.f32 %v2782, %v2794
    %v2807 = vsub.f32 %v2783, %v2797
    %v2808 = vsub.f32 %v2784, %v2800
    %v2809 = vsub.f32 %v2785, %v2803
    %v2810 = vmul.f32 %v2804, 1.442695
    %v2811 = vpow.pop %v2810
    %v2812 = vmul.f32 %v2805, 1.442695
    %v2813 = vpow.pop %v2812
    %v2814 = vmul.f32 %v2806, 1.442695
    %v2815 = vpow.pop %v2814
    %v2816 = vmul.f32 %v2807, 1.442695
    %v2817 = vpow.pop %v2816
    %v2818 = vmul.f32 %v2808, 1.442695
    %v2819 = vpow.pop %v2818
    %v2820 = vmul.f32 %v2809, 1.442695
    %v2821 = vpow.pop %v2820
    %v2822 = vsel %vm928, %v2811, 0.0
    %2823 = vadd.xlane.f32.xlu0 %v2822
    %v2824 = vpop.xlane.xlu0 %2823
    %v2825 = vsel %vm928, %v2813, 0.0
    %2826 = vadd.xlane.f32.xlu0 %v2825
    %v2827 = vpop.xlane.xlu0 %2826
    %v2828 = vsel %vm928, %v2815, 0.0
    %2829 = vadd.xlane.f32.xlu0 %v2828
    %v2830 = vpop.xlane.xlu0 %2829
    %v2831 = vsel %vm928, %v2817, 0.0
    %2832 = vadd.xlane.f32.xlu0 %v2831
    %v2833 = vpop.xlane.xlu0 %2832
    %v2834 = vsel %vm928, %v2819, 0.0
    %2835 = vadd.xlane.f32.xlu0 %v2834
    %v2836 = vpop.xlane.xlu0 %2835
    %v2837 = vsel %vm928, %v2821, 0.0
    %2838 = vadd.xlane.f32.xlu0 %v2837
    %v2839 = vpop.xlane.xlu0 %2838
    %v2840 = vrcp.pop %v2824
    %v2841 = vrcp.pop %v2827
    %v2842 = vrcp.pop %v2830
    %v2843 = vrcp.pop %v2833
    %v2844 = vrcp.pop %v2836
    %v2845 = vrcp.pop %v2839
    %v2846 = vmul.f32 %v2811, %v2840
    %v2847 = vmul.f32 %v2813, %v2841
    %v2848 = vmul.f32 %v2815, %v2842
    %v2849 = vmul.f32 %v2817, %v2843
    %v2850 = vmul.f32 %v2819, %v2844
    %v2851 = vmul.f32 %v2821, %v2845
    %v2852 = vpack.c.bf16 %v2847, %v2846
    %v2853 = vpack.c.bf16 %v2848, %v2848
    %v2854 = vpack.c.bf16 %v2850, %v2849
    %v2855 = vpack.c.bf16 %v2851, %v2851
    %2858 = vrot.lane.b32.xlu0 %v2306, 96
    %v2859 = vpop.permute.xlu0 %2858
    %2860 = vrot.lane.b32.xlu0 %v2307, 96
    %v2861 = vpop.permute.xlu0 %2860
    %v2864 = vsel %vm928, %v2852, 0
    %v2867 = vsel %vm928, %v2853, 0
    %v2870 = vsel %vm1005, %v2861, 0
    %2872 = vmatprep.subr.bf16.mxu0 0
    %2873 = vmatpush1.bf16.msra.mxu0 0
    %2874 = vmatprep.subr.bf16.mxu0 0
    %2875 = vmatpush1.bf16.msra.mxu0 0
    %2876 = vmatprep.subr.bf16.mxu0 0
    %2877 = vmatpush1.bf16.msra.mxu0 0
    %2878 = vmatprep.subr.bf16.mxu0 0
    %2879 = vmatpush1.bf16.msra.mxu0 0
    %2880 = vmatprep.subr.bf16.mxu0 0
    %2881 = vmatpush1.bf16.msra.mxu0 0
    %2882 = vmatprep.subr.bf16.mxu0 0
    %2883 = vmatpush1.bf16.msra.mxu0 0
    %2884 = vmatprep.subr.bf16.mxu0 0
    %2885 = vmatpush1.bf16.msra.mxu0 %v2870
    %2886 = vmatprep.subr.bf16.mxu0 0
    %2887 = vmatpush1.bf16.msra.mxu0 %v2859
    %2888 = vmatprep.subr.bf16.mxu0 0
    %2889 = vmatpush2.bf16.msra.mxu0 0
    %2890 = vmatprep.subr.bf16.mxu0 0
    %2891 = vmatpush2.bf16.msra.mxu0 0
    %2892 = vmatprep.subr.bf16.mxu0 0
    %2893 = vmatpush2.bf16.msra.mxu0 0
    %2894 = vmatprep.subr.bf16.mxu0 0
    %2895 = vmatpush2.bf16.msra.mxu0 0
    %2896 = vmatprep.subr.bf16.mxu0 0
    %2897 = vmatpush2.bf16.msra.mxu0 0
    %2898 = vmatprep.subr.bf16.mxu0 0
    %2899 = vmatpush2.bf16.msra.mxu0 0
    %2900 = vmatprep.subr.bf16.mxu0 0
    %2901 = vmatpush2.bf16.msra.mxu0 0
    %2902 = vmatprep.subr.bf16.mxu0 0
    %2903 = vmatpush2.bf16.msra.mxu0 0
    %2904 = vmatprep.mubr.bf16.mxu0 0
    %2905 = vmatmul.mubr.bf16.gmra.mxu0 %v2864
    %v2906 = vpop.f32.mrf.mxu0
    %v2907 = vadd.f32 0.0, %v2906
    %v2908 = vpop.f32.mrf.mxu0
    %v2909 = vpop.f32.mrf.mxu0
    %v2910 = vadd.f32 0.0, %v2909
    %v2911 = vpop.f32.mrf.mxu0
    %2912 = vmatprep.mubr.bf16.mxu0 0
    %2913 = vmatmul.mubr.bf16.gmra.mxu0 %v2867
    %v2914 = vpop.f32.mrf.mxu0
    %v2915 = vadd.f32 0.0, %v2914
    %v2916 = vpop.f32.mrf.mxu0
    %v2917 = vpop.f32.mrf.mxu0
    %v2918 = vpop.f32.mrf.mxu0
    %2919 = vdwg.mxu0
    %2922 = vrot.lane.b32.xlu0 %v2308, 96
    %v2923 = vpop.permute.xlu0 %2922
    %2924 = vrot.lane.b32.xlu0 %v2309, 96
    %v2925 = vpop.permute.xlu0 %2924
    %v2928 = vsel %vm928, %v2854, 0
    %v2931 = vsel %vm928, %v2855, 0
    %v2934 = vsel %vm1005, %v2925, 0
    %2936 = vmatprep.subr.bf16.mxu0 0
    %2937 = vmatpush1.bf16.msra.mxu0 0
    %2938 = vmatprep.subr.bf16.mxu0 0
    %2939 = vmatpush1.bf16.msra.mxu0 0
    %2940 = vmatprep.subr.bf16.mxu0 0
    %2941 = vmatpush1.bf16.msra.mxu0 0
    %2942 = vmatprep.subr.bf16.mxu0 0
    %2943 = vmatpush1.bf16.msra.mxu0 0
    %2944 = vmatprep.subr.bf16.mxu0 0
    %2945 = vmatpush1.bf16.msra.mxu0 0
    %2946 = vmatprep.subr.bf16.mxu0 0
    %2947 = vmatpush1.bf16.msra.mxu0 0
    %2948 = vmatprep.subr.bf16.mxu0 0
    %2949 = vmatpush1.bf16.msra.mxu0 %v2934
    %2950 = vmatprep.subr.bf16.mxu0 0
    %2951 = vmatpush1.bf16.msra.mxu0 %v2923
    %2952 = vmatprep.subr.bf16.mxu0 0
    %2953 = vmatpush2.bf16.msra.mxu0 0
    %2954 = vmatprep.subr.bf16.mxu0 0
    %2955 = vmatpush2.bf16.msra.mxu0 0
    %2956 = vmatprep.subr.bf16.mxu0 0
    %2957 = vmatpush2.bf16.msra.mxu0 0
    %2958 = vmatprep.subr.bf16.mxu0 0
    %2959 = vmatpush2.bf16.msra.mxu0 0
    %2960 = vmatprep.subr.bf16.mxu0 0
    %2961 = vmatpush2.bf16.msra.mxu0 0
    %2962 = vmatprep.subr.bf16.mxu0 0
    %2963 = vmatpush2.bf16.msra.mxu0 0
    %2964 = vmatprep.subr.bf16.mxu0 0
    %2965 = vmatpush2.bf16.msra.mxu0 0
    %2966 = vmatprep.subr.bf16.mxu0 0
    %2967 = vmatpush2.bf16.msra.mxu0 0
    %2968 = vmatprep.mubr.bf16.mxu0 0
    %2969 = vmatmul.mubr.bf16.gmra.mxu0 %v2928
    %v2970 = vpop.f32.mrf.mxu0
    %v2971 = vadd.f32 0.0, %v2970
    %v2972 = vpop.f32.mrf.mxu0
    %v2973 = vpop.f32.mrf.mxu0
    %v2974 = vadd.f32 0.0, %v2973
    %v2975 = vpop.f32.mrf.mxu0
    %2976 = vmatprep.mubr.bf16.mxu0 0
    %2977 = vmatmul.mubr.bf16.gmra.mxu0 %v2931
    %v2978 = vpop.f32.mrf.mxu0
    %v2979 = vadd.f32 0.0, %v2978
    %v2980 = vpop.f32.mrf.mxu0
    %v2981 = vpop.f32.mrf.mxu0
    %v2982 = vpop.f32.mrf.mxu0
    %2983 = vdwg.mxu0
    %2990 = vrot.lane.b32.xlu0 %v2907, 32
    %v2991 = vpop.permute.xlu0 %2990
    %2992 = vrot.lane.b32.xlu0 %v2910, 32
    %v2993 = vpop.permute.xlu0 %2992
    %2994 = vrot.lane.b32.xlu0 %v2915, 32
    %v2995 = vpop.permute.xlu0 %2994
    %2996 = vrot.lane.b32.xlu0 %v2971, 32
    %v2997 = vpop.permute.xlu0 %2996
    %2998 = vrot.lane.b32.xlu0 %v2974, 32
    %v2999 = vpop.permute.xlu0 %2998
    %3000 = vrot.lane.b32.xlu0 %v2979, 32
    %v3001 = vpop.permute.xlu0 %3000
    %v3008 = vsel %vm779, %v2568, %v2991
    %v3009 = vsel %vm779, %v2571, %v2993
    %v3010 = vsel %vm779, %v2576, %v2995
    %v3011 = vsel %vm779, %v2625, %v2997
    %v3012 = vsel %vm779, %v2628, %v2999
    %v3013 = vsel %vm779, %v2633, %v3001
    %s3014 = scalar_lea.vmem %s14, 32
    %v3015 = vld [vmem:[%s3014] sm:$0xf]
    %v3016 = vld [vmem:[%s3014 + $0x4] sm:$0xf]
    %v3017 = vld [vmem:[%s3014 + $0x8] sm:$0xf]
    %v3018 = vld [vmem:[%s3014 + $0xc] sm:$0xf]
    %v3019 = vld [vmem:[%s3014 + $0x10] sm:$0xf]
    %v3020 = vld [vmem:[%s3014 + $0x14] sm:$0xf]
    %v3021 = vld [vmem:[%s3014 + $0x18] sm:$0xf]
    %v3022 = vld [vmem:[%s3014 + $0x1c] sm:$0xf]
    %v3023 = vpack.c.bf16 %v3009, %v3008
    %v3024 = vpack.c.bf16 %v3011, %v3010
    %v3025 = vpack.c.bf16 %v3013, %v3012
    %v3034 = vunpack.c.l.b16 %v3015
    %v3035 = vunpack.c.l.b16 %v3016
    %v3036 = vunpack.c.l.b16 %v3017
    %v3037 = vunpack.c.l.b16 %v3018
    %v3038 = vunpack.c.l.b16 %v3019
    %v3039 = vunpack.c.l.b16 %v3020
    %v3040 = vunpack.c.l.b16 %v3021
    %v3041 = vunpack.c.l.b16 %v3022
    %v3042 = vpack.c.b16 %v3035, %v3034
    %v3043 = vpack.c.b16 %v3037, %v3036
    %v3044 = vpack.c.b16 %v3039, %v3038
    %v3045 = vpack.c.b16 %v3041, %v3040
    %v3051 = vsel %vm252, %v3023, 0
    %v3054 = vsel %vm252, %v3024, 0
    %v3057 = vsel %vm252, %v3025, 0
    %3059 = vmatprep.subr.bf16.mxu0 0
    %3060 = vmatpush1.bf16.msra.mxu0 0
    %3061 = vmatprep.subr.bf16.mxu0 0
    %3062 = vmatpush1.bf16.msra.mxu0 0
    %3063 = vmatprep.subr.bf16.mxu0 0
    %3064 = vmatpush1.bf16.msra.mxu0 0
    %3065 = vmatprep.subr.bf16.mxu0 0
    %3066 = vmatpush1.bf16.msra.mxu0 0
    %3067 = vmatprep.subr.bf16.mxu0 0
    %3068 = vmatpush1.bf16.msra.mxu0 %v3045
    %3069 = vmatprep.subr.bf16.mxu0 0
    %3070 = vmatpush1.bf16.msra.mxu0 %v3044
    %3071 = vmatprep.subr.bf16.mxu0 0
    %3072 = vmatpush1.bf16.msra.mxu0 %v3043
    %3073 = vmatprep.subr.bf16.mxu0 0
    %3074 = vmatpush1.bf16.msra.mxu0 %v3042
    %3075 = vmatprep.subr.bf16.mxu0 0
    %3076 = vmatpush2.bf16.msra.mxu0 0
    %3077 = vmatprep.subr.bf16.mxu0 0
    %3078 = vmatpush2.bf16.msra.mxu0 0
    %3079 = vmatprep.subr.bf16.mxu0 0
    %3080 = vmatpush2.bf16.msra.mxu0 0
    %3081 = vmatprep.subr.bf16.mxu0 0
    %3082 = vmatpush2.bf16.msra.mxu0 0
    %3083 = vmatprep.subr.bf16.mxu0 0
    %3084 = vmatpush2.bf16.msra.mxu0 0
    %3085 = vmatprep.subr.bf16.mxu0 0
    %3086 = vmatpush2.bf16.msra.mxu0 0
    %3087 = vmatprep.subr.bf16.mxu0 0
    %3088 = vmatpush2.bf16.msra.mxu0 0
    %3089 = vmatprep.subr.bf16.mxu0 0
    %3090 = vmatpush2.bf16.msra.mxu0 0
    %3091 = vmatprep.mubr.bf16.mxu0 0
    %3092 = vmatmul.mubr.bf16.gmra.mxu0 %v3051
    %v3093 = vpop.f32.mrf.mxu0
    %v3094 = vadd.f32 0.0, %v3093
    %v3095 = vpop.f32.mrf.mxu0
    %v3096 = vpop.f32.mrf.mxu0
    %v3097 = vadd.f32 0.0, %v3096
    %v3098 = vpop.f32.mrf.mxu0
    %3099 = vmatprep.mubr.bf16.mxu0 0
    %3100 = vmatmul.mubr.bf16.gmra.mxu0 %v3054
    %v3101 = vpop.f32.mrf.mxu0
    %v3102 = vadd.f32 0.0, %v3101
    %v3103 = vpop.f32.mrf.mxu0
    %v3104 = vpop.f32.mrf.mxu0
    %v3105 = vadd.f32 0.0, %v3104
    %v3106 = vpop.f32.mrf.mxu0
    %3107 = vmatprep.mubr.bf16.mxu0 0
    %3108 = vmatmul.mubr.bf16.gmra.mxu0 %v3057
    %v3109 = vpop.f32.mrf.mxu0
    %v3110 = vadd.f32 0.0, %v3109
    %v3111 = vpop.f32.mrf.mxu0
    %v3112 = vpop.f32.mrf.mxu0
    %v3113 = vadd.f32 0.0, %v3112
    %v3114 = vpop.f32.mrf.mxu0
    %3115 = vdwg.mxu0
    %v3116 = vadd.f32 %v2059, %v3094
    %v3117 = vadd.f32 %v2060, %v3097
    %v3118 = vadd.f32 %v2061, %v3102
    %v3119 = vadd.f32 %v2062, %v3105
    %v3120 = vadd.f32 %v2063, %v3110
    %v3121 = vadd.f32 %v2064, %v3113
    %s3122 = scalar_lea.vmem %s15, 1
    %v3123 = vld [vmem:[%s3122] sm:$0x1]
    %v3125 = vlaneseq
    %v3126 = vshrl.u32 %v3125, 7
    %v3127 = vsub.s32 0, %v3126
    %v3128 = vrot.slane %v3123, %v3127
    %v3130 = vadd.f32 %v3116, %v3128
    %v3131 = vadd.f32 %v3117, %v3128
    %v3132 = vadd.f32 %v3118, %v3128
    %v3133 = vadd.f32 %v3119, %v3128
    %v3134 = vadd.f32 %v3120, %v3128
    %v3135 = vadd.f32 %v3121, %v3128
    %v3136 = vsel %vm252, %v3130, 0.0
    %3137 = vadd.xlane.f32.xlu0 %v3136
    %v3138 = vpop.xlane.xlu0 %3137
    %v3139 = vsel %vm252, %v3131, 0.0
    %3140 = vadd.xlane.f32.xlu0 %v3139
    %v3141 = vpop.xlane.xlu0 %3140
    %v3142 = vsel %vm252, %v3132, 0.0
    %3143 = vadd.xlane.f32.xlu0 %v3142
    %v3144 = vpop.xlane.xlu0 %3143
    %v3145 = vsel %vm252, %v3133, 0.0
    %3146 = vadd.xlane.f32.xlu0 %v3145
    %v3147 = vpop.xlane.xlu0 %3146
    %v3148 = vsel %vm252, %v3134, 0.0
    %3149 = vadd.xlane.f32.xlu0 %v3148
    %v3150 = vpop.xlane.xlu0 %3149
    %v3151 = vsel %vm252, %v3135, 0.0
    %3152 = vadd.xlane.f32.xlu0 %v3151
    %v3153 = vpop.xlane.xlu0 %3152
    %v3154 = vmul.f32 %v3138, %v549
    %v3155 = vmul.f32 %v3141, %v549
    %v3156 = vmul.f32 %v3144, %v549
    %v3157 = vmul.f32 %v3147, %v549
    %v3158 = vmul.f32 %v3150, %v549
    %v3159 = vmul.f32 %v3153, %v549
    %v3160 = vsub.f32 %v3130, %v3154
    %v3161 = vsub.f32 %v3131, %v3155
    %v3162 = vsub.f32 %v3132, %v3156
    %v3163 = vsub.f32 %v3133, %v3157
    %v3164 = vsub.f32 %v3134, %v3158
    %v3165 = vsub.f32 %v3135, %v3159
    %v3166 = vmul.f32 %v3160, %v3160
    %v3167 = vmul.f32 %v3161, %v3161
    %v3168 = vmul.f32 %v3162, %v3162
    %v3169 = vmul.f32 %v3163, %v3163
    %v3170 = vmul.f32 %v3164, %v3164
    %v3171 = vmul.f32 %v3165, %v3165
    %v3172 = vsel %vm252, %v3166, 0.0
    %3173 = vadd.xlane.f32.xlu0 %v3172
    %v3174 = vpop.xlane.xlu0 %3173
    %v3175 = vsel %vm252, %v3167, 0.0
    %3176 = vadd.xlane.f32.xlu0 %v3175
    %v3177 = vpop.xlane.xlu0 %3176
    %v3178 = vsel %vm252, %v3168, 0.0
    %3179 = vadd.xlane.f32.xlu0 %v3178
    %v3180 = vpop.xlane.xlu0 %3179
    %v3181 = vsel %vm252, %v3169, 0.0
    %3182 = vadd.xlane.f32.xlu0 %v3181
    %v3183 = vpop.xlane.xlu0 %3182
    %v3184 = vsel %vm252, %v3170, 0.0
    %3185 = vadd.xlane.f32.xlu0 %v3184
    %v3186 = vpop.xlane.xlu0 %3185
    %v3187 = vsel %vm252, %v3171, 0.0
    %3188 = vadd.xlane.f32.xlu0 %v3187
    %v3189 = vpop.xlane.xlu0 %3188
    %v3190 = vmul.f32 %v3174, %v549
    %v3191 = vmul.f32 %v3177, %v549
    %v3192 = vmul.f32 %v3180, %v549
    %v3193 = vmul.f32 %v3183, %v549
    %v3194 = vmul.f32 %v3186, %v549
    %v3195 = vmul.f32 %v3189, %v549
    %v3196 = vadd.f32 %v3190, 1e-05
    %v3197 = vadd.f32 %v3191, 1e-05
    %v3198 = vadd.f32 %v3192, 1e-05
    %v3199 = vadd.f32 %v3193, 1e-05
    %v3200 = vadd.f32 %v3194, 1e-05
    %v3201 = vadd.f32 %v3195, 1e-05
    %v3202 = vrsqrt.pop %v3196
    %v3203 = vrsqrt.pop %v3197
    %v3204 = vrsqrt.pop %v3198
    %v3205 = vrsqrt.pop %v3199
    %v3206 = vrsqrt.pop %v3200
    %v3207 = vrsqrt.pop %v3201
    %v3208 = vmul.f32 %v3160, %v3202
    %v3209 = vmul.f32 %v3161, %v3203
    %v3210 = vmul.f32 %v3162, %v3204
    %v3211 = vmul.f32 %v3163, %v3205
    %v3212 = vmul.f32 %v3164, %v3206
    %v3213 = vmul.f32 %v3165, %v3207
    %v3214 = vlaneseq
    %v3215 = vshrl.u32 %v3214, 7
    %v3216 = vsub.s32 2, %v3215
    %v3217 = vrot.slane %v2066, %v3216
    %v3218 = vmul.f32 %v3208, %v3217
    %v3219 = vmul.f32 %v3209, %v3217
    %v3220 = vmul.f32 %v3210, %v3217
    %v3221 = vmul.f32 %v3211, %v3217
    %v3222 = vmul.f32 %v3212, %v3217
    %v3223 = vmul.f32 %v3213, %v3217
    %v3224 = vlaneseq
    %v3225 = vshrl.u32 %v3224, 7
    %v3226 = vsub.s32 3, %v3225
    %v3227 = vrot.slane %v2066, %v3226
    %v3228 = vadd.f32 %v3218, %v3227
    %v3229 = vadd.f32 %v3219, %v3227
    %v3230 = vadd.f32 %v3220, %v3227
    %v3231 = vadd.f32 %v3221, %v3227
    %v3232 = vadd.f32 %v3222, %v3227
    %v3233 = vadd.f32 %v3223, %v3227
    %s3234 = scalar_lea.vmem %s16, 64
    %v3235 = vld [vmem:[%s3234] sm:$0xff]
    %v3236 = vld [vmem:[%s3234 + $0x8] sm:$0xff]
    %v3237 = vld [vmem:[%s3234 + $0x10] sm:$0xff]
    %v3238 = vld [vmem:[%s3234 + $0x18] sm:$0xff]
    %v3239 = vld [vmem:[%s3234 + $0x20] sm:$0xff]
    %v3240 = vld [vmem:[%s3234 + $0x28] sm:$0xff]
    %v3241 = vld [vmem:[%s3234 + $0x30] sm:$0xff]
    %v3242 = vld [vmem:[%s3234 + $0x38] sm:$0xff]
    %v3243 = vpack.c.bf16 %v3229, %v3228
    %v3244 = vpack.c.bf16 %v3231, %v3230
    %v3245 = vpack.c.bf16 %v3233, %v3232
    %s3246 = scalar_lea.vmem %s17, 2
    %v3247 = vld [vmem:[%s3246] sm:$0x3]
    %v3249 = vlaneseq
    %v3250 = vshrl.u32 %v3249, 7
    %v3251 = vsub.s32 0, %v3250
    %v3252 = vrot.slane %v3247, %v3251
    %v3253 = vlaneseq
    %v3254 = vshrl.u32 %v3253, 7
    %v3255 = vsub.s32 1, %v3254
    %v3256 = vrot.slane %v3247, %v3255
    %v3267 = vunpack.c.l.b16 %v3235
    %v3268 = vunpack.c.h.b16 %v3235
    %v3269 = vunpack.c.l.b16 %v3236
    %v3270 = vunpack.c.h.b16 %v3236
    %v3271 = vunpack.c.l.b16 %v3237
    %v3272 = vunpack.c.h.b16 %v3237
    %v3273 = vunpack.c.l.b16 %v3238
    %v3274 = vunpack.c.h.b16 %v3238
    %v3275 = vunpack.c.l.b16 %v3239
    %v3276 = vunpack.c.h.b16 %v3239
    %v3277 = vunpack.c.l.b16 %v3240
    %v3278 = vunpack.c.h.b16 %v3240
    %v3279 = vunpack.c.l.b16 %v3241
    %v3280 = vunpack.c.h.b16 %v3241
    %v3281 = vunpack.c.l.b16 %v3242
    %v3282 = vunpack.c.h.b16 %v3242
    %v3283 = vpack.c.b16 %v3269, %v3267
    %v3284 = vpack.c.b16 %v3270, %v3268
    %v3285 = vpack.c.b16 %v3273, %v3271
    %v3286 = vpack.c.b16 %v3274, %v3272
    %v3287 = vpack.c.b16 %v3277, %v3275
    %v3288 = vpack.c.b16 %v3278, %v3276
    %v3289 = vpack.c.b16 %v3281, %v3279
    %v3290 = vpack.c.b16 %v3282, %v3280
    %v3300 = vsel %vm252, %v3243, 0
    %v3303 = vsel %vm252, %v3244, 0
    %v3306 = vsel %vm252, %v3245, 0
    %3308 = vmatprep.subr.bf16.mxu0 0
    %3309 = vmatpush1.bf16.msra.mxu0 0
    %3310 = vmatprep.subr.bf16.mxu0 0
    %3311 = vmatpush1.bf16.msra.mxu0 0
    %3312 = vmatprep.subr.bf16.mxu0 0
    %3313 = vmatpush1.bf16.msra.mxu0 0
    %3314 = vmatprep.subr.bf16.mxu0 0
    %3315 = vmatpush1.bf16.msra.mxu0 0
    %3316 = vmatprep.subr.bf16.mxu0 %v3290
    %3317 = vmatpush1.bf16.msra.mxu0 %v3289
    %3318 = vmatprep.subr.bf16.mxu0 %v3288
    %3319 = vmatpush1.bf16.msra.mxu0 %v3287
    %3320 = vmatprep.subr.bf16.mxu0 %v3286
    %3321 = vmatpush1.bf16.msra.mxu0 %v3285
    %3322 = vmatprep.subr.bf16.mxu0 %v3284
    %3323 = vmatpush1.bf16.msra.mxu0 %v3283
    %3324 = vmatprep.subr.bf16.mxu0 0
    %3325 = vmatpush2.bf16.msra.mxu0 0
    %3326 = vmatprep.subr.bf16.mxu0 0
    %3327 = vmatpush2.bf16.msra.mxu0 0
    %3328 = vmatprep.subr.bf16.mxu0 0
    %3329 = vmatpush2.bf16.msra.mxu0 0
    %3330 = vmatprep.subr.bf16.mxu0 0
    %3331 = vmatpush2.bf16.msra.mxu0 0
    %3332 = vmatprep.subr.bf16.mxu0 0
    %3333 = vmatpush2.bf16.msra.mxu0 0
    %3334 = vmatprep.subr.bf16.mxu0 0
    %3335 = vmatpush2.bf16.msra.mxu0 0
    %3336 = vmatprep.subr.bf16.mxu0 0
    %3337 = vmatpush2.bf16.msra.mxu0 0
    %3338 = vmatprep.subr.bf16.mxu0 0
    %3339 = vmatpush2.bf16.msra.mxu0 0
    %3340 = vmatprep.mubr.bf16.mxu0 0
    %3341 = vmatmul.mubr.bf16.gmra.mxu0 %v3300
    %v3342 = vpop.f32.mrf.mxu0
    %v3343 = vadd.f32 %v3252, %v3342
    %v3344 = vpop.f32.mrf.mxu0
    %v3345 = vadd.f32 %v3256, %v3344
    %v3346 = vpop.f32.mrf.mxu0
    %v3347 = vadd.f32 %v3252, %v3346
    %v3348 = vpop.f32.mrf.mxu0
    %v3349 = vadd.f32 %v3256, %v3348
    %3350 = vmatprep.mubr.bf16.mxu0 0
    %3351 = vmatmul.mubr.bf16.gmra.mxu0 %v3303
    %v3352 = vpop.f32.mrf.mxu0
    %v3353 = vadd.f32 %v3252, %v3352
    %v3354 = vpop.f32.mrf.mxu0
    %v3355 = vadd.f32 %v3256, %v3354
    %v3356 = vpop.f32.mrf.mxu0
    %v3357 = vadd.f32 %v3252, %v3356
    %v3358 = vpop.f32.mrf.mxu0
    %v3359 = vadd.f32 %v3256, %v3358
    %3360 = vmatprep.mubr.bf16.mxu0 0
    %3361 = vmatmul.mubr.bf16.gmra.mxu0 %v3306
    %v3362 = vpop.f32.mrf.mxu0
    %v3363 = vadd.f32 %v3252, %v3362
    %v3364 = vpop.f32.mrf.mxu0
    %v3365 = vadd.f32 %v3256, %v3364
    %v3366 = vpop.f32.mrf.mxu0
    %v3367 = vadd.f32 %v3252, %v3366
    %v3368 = vpop.f32.mrf.mxu0
    %v3369 = vadd.f32 %v3256, %v3368
    %3370 = vdwg.mxu0
    %v3371 = vmax.f32 %v3343, 0.0
    %v3372 = vmax.f32 %v3345, 0.0
    %v3373 = vmax.f32 %v3347, 0.0
    %v3374 = vmax.f32 %v3349, 0.0
    %v3375 = vmax.f32 %v3353, 0.0
    %v3376 = vmax.f32 %v3355, 0.0
    %v3377 = vmax.f32 %v3357, 0.0
    %v3378 = vmax.f32 %v3359, 0.0
    %v3379 = vmax.f32 %v3363, 0.0
    %v3380 = vmax.f32 %v3365, 0.0
    %v3381 = vmax.f32 %v3367, 0.0
    %v3382 = vmax.f32 %v3369, 0.0
    %s3383 = scalar_lea.vmem %s18, 128
    %v3384 = vld [vmem:[%s3383] sm:$0xf]
    %v3385 = vld [vmem:[%s3383 + $0x4] sm:$0xf]
    %v3386 = vld [vmem:[%s3383 + $0x8] sm:$0xf]
    %v3387 = vld [vmem:[%s3383 + $0xc] sm:$0xf]
    %v3388 = vld [vmem:[%s3383 + $0x10] sm:$0xf]
    %v3389 = vld [vmem:[%s3383 + $0x14] sm:$0xf]
    %v3390 = vld [vmem:[%s3383 + $0x18] sm:$0xf]
    %v3391 = vld [vmem:[%s3383 + $0x1c] sm:$0xf]
    %v3392 = vld [vmem:[%s3383 + $0x20] sm:$0xf]
    %v3393 = vld [vmem:[%s3383 + $0x24] sm:$0xf]
    %v3394 = vld [vmem:[%s3383 + $0x28] sm:$0xf]
    %v3395 = vld [vmem:[%s3383 + $0x2c] sm:$0xf]
    %v3396 = vld [vmem:[%s3383 + $0x30] sm:$0xf]
    %v3397 = vld [vmem:[%s3383 + $0x34] sm:$0xf]
    %v3398 = vld [vmem:[%s3383 + $0x38] sm:$0xf]
    %v3399 = vld [vmem:[%s3383 + $0x3c] sm:$0xf]
    %v3400 = vld [vmem:[%s3383 + $0x40] sm:$0xf]
    %v3401 = vld [vmem:[%s3383 + $0x44] sm:$0xf]
    %v3402 = vld [vmem:[%s3383 + $0x48] sm:$0xf]
    %v3403 = vld [vmem:[%s3383 + $0x4c] sm:$0xf]
    %v3404 = vld [vmem:[%s3383 + $0x50] sm:$0xf]
    %v3405 = vld [vmem:[%s3383 + $0x54] sm:$0xf]
    %v3406 = vld [vmem:[%s3383 + $0x58] sm:$0xf]
    %v3407 = vld [vmem:[%s3383 + $0x5c] sm:$0xf]
    %v3408 = vld [vmem:[%s3383 + $0x60] sm:$0xf]
    %v3409 = vld [vmem:[%s3383 + $0x64] sm:$0xf]
    %v3410 = vld [vmem:[%s3383 + $0x68] sm:$0xf]
    %v3411 = vld [vmem:[%s3383 + $0x6c] sm:$0xf]
    %v3412 = vld [vmem:[%s3383 + $0x70] sm:$0xf]
    %v3413 = vld [vmem:[%s3383 + $0x74] sm:$0xf]
    %v3414 = vld [vmem:[%s3383 + $0x78] sm:$0xf]
    %v3415 = vld [vmem:[%s3383 + $0x7c] sm:$0xf]
    %v3416 = vpack.c.bf16 %v3373, %v3371
    %v3417 = vpack.c.bf16 %v3374, %v3372
    %v3418 = vpack.c.bf16 %v3377, %v3375
    %v3419 = vpack.c.bf16 %v3378, %v3376
    %v3420 = vpack.c.bf16 %v3381, %v3379
    %v3421 = vpack.c.bf16 %v3382, %v3380
    %v3454 = vunpack.c.l.b16 %v3384
    %v3455 = vunpack.c.l.b16 %v3385
    %v3456 = vunpack.c.l.b16 %v3386
    %v3457 = vunpack.c.l.b16 %v3387
    %v3458 = vunpack.c.l.b16 %v3388
    %v3459 = vunpack.c.l.b16 %v3389
    %v3460 = vunpack.c.l.b16 %v3390
    %v3461 = vunpack.c.l.b16 %v3391
    %v3462 = vunpack.c.l.b16 %v3392
    %v3463 = vunpack.c.l.b16 %v3393
    %v3464 = vunpack.c.l.b16 %v3394
    %v3465 = vunpack.c.l.b16 %v3395
    %v3466 = vunpack.c.l.b16 %v3396
    %v3467 = vunpack.c.l.b16 %v3397
    %v3468 = vunpack.c.l.b16 %v3398
    %v3469 = vunpack.c.l.b16 %v3399
    %v3470 = vunpack.c.l.b16 %v3400
    %v3471 = vunpack.c.l.b16 %v3401
    %v3472 = vunpack.c.l.b16 %v3402
    %v3473 = vunpack.c.l.b16 %v3403
    %v3474 = vunpack.c.l.b16 %v3404
    %v3475 = vunpack.c.l.b16 %v3405
    %v3476 = vunpack.c.l.b16 %v3406
    %v3477 = vunpack.c.l.b16 %v3407
    %v3478 = vunpack.c.l.b16 %v3408
    %v3479 = vunpack.c.l.b16 %v3409
    %v3480 = vunpack.c.l.b16 %v3410
    %v3481 = vunpack.c.l.b16 %v3411
    %v3482 = vunpack.c.l.b16 %v3412
    %v3483 = vunpack.c.l.b16 %v3413
    %v3484 = vunpack.c.l.b16 %v3414
    %v3485 = vunpack.c.l.b16 %v3415
    %v3486 = vpack.c.b16 %v3455, %v3454
    %v3487 = vpack.c.b16 %v3457, %v3456
    %v3488 = vpack.c.b16 %v3459, %v3458
    %v3489 = vpack.c.b16 %v3461, %v3460
    %v3490 = vpack.c.b16 %v3463, %v3462
    %v3491 = vpack.c.b16 %v3465, %v3464
    %v3492 = vpack.c.b16 %v3467, %v3466
    %v3493 = vpack.c.b16 %v3469, %v3468
    %v3494 = vpack.c.b16 %v3471, %v3470
    %v3495 = vpack.c.b16 %v3473, %v3472
    %v3496 = vpack.c.b16 %v3475, %v3474
    %v3497 = vpack.c.b16 %v3477, %v3476
    %v3498 = vpack.c.b16 %v3479, %v3478
    %v3499 = vpack.c.b16 %v3481, %v3480
    %v3500 = vpack.c.b16 %v3483, %v3482
    %v3501 = vpack.c.b16 %v3485, %v3484
    %3518 = vmatprep.subr.bf16.mxu0 0
    %3519 = vmatpush1.bf16.msra.mxu0 %v3493
    %3520 = vmatprep.subr.bf16.mxu0 0
    %3521 = vmatpush1.bf16.msra.mxu0 %v3492
    %3522 = vmatprep.subr.bf16.mxu0 0
    %3523 = vmatpush1.bf16.msra.mxu0 %v3491
    %3524 = vmatprep.subr.bf16.mxu0 0
    %3525 = vmatpush1.bf16.msra.mxu0 %v3490
    %3526 = vmatprep.subr.bf16.mxu0 0
    %3527 = vmatpush1.bf16.msra.mxu0 %v3489
    %3528 = vmatprep.subr.bf16.mxu0 0
    %3529 = vmatpush1.bf16.msra.mxu0 %v3488
    %3530 = vmatprep.subr.bf16.mxu0 0
    %3531 = vmatpush1.bf16.msra.mxu0 %v3487
    %3532 = vmatprep.subr.bf16.mxu0 0
    %3533 = vmatpush1.bf16.msra.mxu0 %v3486
    %3534 = vmatprep.subr.bf16.mxu0 0
    %3535 = vmatpush2.bf16.msra.mxu0 %v3501
    %3536 = vmatprep.subr.bf16.mxu0 0
    %3537 = vmatpush2.bf16.msra.mxu0 %v3500
    %3538 = vmatprep.subr.bf16.mxu0 0
    %3539 = vmatpush2.bf16.msra.mxu0 %v3499
    %3540 = vmatprep.subr.bf16.mxu0 0
    %3541 = vmatpush2.bf16.msra.mxu0 %v3498
    %3542 = vmatprep.subr.bf16.mxu0 0
    %3543 = vmatpush2.bf16.msra.mxu0 %v3497
    %3544 = vmatprep.subr.bf16.mxu0 0
    %3545 = vmatpush2.bf16.msra.mxu0 %v3496
    %3546 = vmatprep.subr.bf16.mxu0 0
    %3547 = vmatpush2.bf16.msra.mxu0 %v3495
    %3548 = vmatprep.subr.bf16.mxu0 0
    %3549 = vmatpush2.bf16.msra.mxu0 %v3494
    %3550 = vmatprep.mubr.bf16.mxu0 %v3417
    %3551 = vmatmul.mubr.bf16.gmra.mxu0 %v3416
    %v3552 = vpop.f32.mrf.mxu0
    %v3553 = vadd.f32 0.0, %v3552
    %v3554 = vpop.f32.mrf.mxu0
    %v3555 = vpop.f32.mrf.mxu0
    %v3556 = vadd.f32 0.0, %v3555
    %v3557 = vpop.f32.mrf.mxu0
    %3558 = vmatprep.mubr.bf16.mxu0 %v3419
    %3559 = vmatmul.mubr.bf16.gmra.mxu0 %v3418
    %v3560 = vpop.f32.mrf.mxu0
    %v3561 = vadd.f32 0.0, %v3560
    %v3562 = vpop.f32.mrf.mxu0
    %v3563 = vpop.f32.mrf.mxu0
    %v3564 = vadd.f32 0.0, %v3563
    %v3565 = vpop.f32.mrf.mxu0
    %3566 = vmatprep.mubr.bf16.mxu0 %v3421
    %3567 = vmatmul.mubr.bf16.gmra.mxu0 %v3420
    %v3568 = vpop.f32.mrf.mxu0
    %v3569 = vadd.f32 0.0, %v3568
    %v3570 = vpop.f32.mrf.mxu0
    %v3571 = vpop.f32.mrf.mxu0
    %v3572 = vadd.f32 0.0, %v3571
    %v3573 = vpop.f32.mrf.mxu0
    %3574 = vdwg.mxu0
    %v3575 = vadd.f32 %v3130, %v3553
    %v3576 = vadd.f32 %v3131, %v3556
    %v3577 = vadd.f32 %v3132, %v3561
    %v3578 = vadd.f32 %v3133, %v3564
    %v3579 = vadd.f32 %v3134, %v3569
    %v3580 = vadd.f32 %v3135, %v3572
    %s3581 = scalar_lea.vmem %s19, 1
    %v3582 = vld [vmem:[%s3581] sm:$0x1]
    %v3584 = vlaneseq
    %v3585 = vshrl.u32 %v3584, 7
    %v3586 = vsub.s32 0, %v3585
    %v3587 = vrot.slane %v3582, %v3586
    %v3589 = vadd.f32 %v3575, %v3587
    %v3590 = vadd.f32 %v3576, %v3587
    %v3591 = vadd.f32 %v3577, %v3587
    %v3592 = vadd.f32 %v3578, %v3587
    %v3593 = vadd.f32 %v3579, %v3587
    %v3594 = vadd.f32 %v3580, %v3587
    %s3595 = scalar_lea.vmem %s11, 8
    %v3596 = vld [vmem:[%s3595] sm:$0xf]
    %v3597 = vsel %vm252, %v3589, 0.0
    %3598 = vadd.xlane.f32.xlu0 %v3597
    %v3599 = vpop.xlane.xlu0 %3598
    %v3600 = vsel %vm252, %v3590, 0.0
    %3601 = vadd.xlane.f32.xlu0 %v3600
    %v3602 = vpop.xlane.xlu0 %3601
    %v3603 = vsel %vm252, %v3591, 0.0
    %3604 = vadd.xlane.f32.xlu0 %v3603
    %v3605 = vpop.xlane.xlu0 %3604
    %v3606 = vsel %vm252, %v3592, 0.0
    %3607 = vadd.xlane.f32.xlu0 %v3606
    %v3608 = vpop.xlane.xlu0 %3607
    %v3609 = vsel %vm252, %v3593, 0.0
    %3610 = vadd.xlane.f32.xlu0 %v3609
    %v3611 = vpop.xlane.xlu0 %3610
    %v3612 = vsel %vm252, %v3594, 0.0
    %3613 = vadd.xlane.f32.xlu0 %v3612
    %v3614 = vpop.xlane.xlu0 %3613
    %v3615 = vmul.f32 %v3599, %v549
    %v3616 = vmul.f32 %v3602, %v549
    %v3617 = vmul.f32 %v3605, %v549
    %v3618 = vmul.f32 %v3608, %v549
    %v3619 = vmul.f32 %v3611, %v549
    %v3620 = vmul.f32 %v3614, %v549
    %v3621 = vsub.f32 %v3589, %v3615
    %v3622 = vsub.f32 %v3590, %v3616
    %v3623 = vsub.f32 %v3591, %v3617
    %v3624 = vsub.f32 %v3592, %v3618
    %v3625 = vsub.f32 %v3593, %v3619
    %v3626 = vsub.f32 %v3594, %v3620
    %v3627 = vmul.f32 %v3621, %v3621
    %v3628 = vmul.f32 %v3622, %v3622
    %v3629 = vmul.f32 %v3623, %v3623
    %v3630 = vmul.f32 %v3624, %v3624
    %v3631 = vmul.f32 %v3625, %v3625
    %v3632 = vmul.f32 %v3626, %v3626
    %v3633 = vsel %vm252, %v3627, 0.0
    %3634 = vadd.xlane.f32.xlu0 %v3633
    %v3635 = vpop.xlane.xlu0 %3634
    %v3636 = vsel %vm252, %v3628, 0.0
    %3637 = vadd.xlane.f32.xlu0 %v3636
    %v3638 = vpop.xlane.xlu0 %3637
    %v3639 = vsel %vm252, %v3629, 0.0
    %3640 = vadd.xlane.f32.xlu0 %v3639
    %v3641 = vpop.xlane.xlu0 %3640
    %v3642 = vsel %vm252, %v3630, 0.0
    %3643 = vadd.xlane.f32.xlu0 %v3642
    %v3644 = vpop.xlane.xlu0 %3643
    %v3645 = vsel %vm252, %v3631, 0.0
    %3646 = vadd.xlane.f32.xlu0 %v3645
    %v3647 = vpop.xlane.xlu0 %3646
    %v3648 = vsel %vm252, %v3632, 0.0
    %3649 = vadd.xlane.f32.xlu0 %v3648
    %v3650 = vpop.xlane.xlu0 %3649
    %v3651 = vmul.f32 %v3635, %v549
    %v3652 = vmul.f32 %v3638, %v549
    %v3653 = vmul.f32 %v3641, %v549
    %v3654 = vmul.f32 %v3644, %v549
    %v3655 = vmul.f32 %v3647, %v549
    %v3656 = vmul.f32 %v3650, %v549
    %v3657 = vadd.f32 %v3651, 1e-05
    %v3658 = vadd.f32 %v3652, 1e-05
    %v3659 = vadd.f32 %v3653, 1e-05
    %v3660 = vadd.f32 %v3654, 1e-05
    %v3661 = vadd.f32 %v3655, 1e-05
    %v3662 = vadd.f32 %v3656, 1e-05
    %v3663 = vrsqrt.pop %v3657
    %v3664 = vrsqrt.pop %v3658
    %v3665 = vrsqrt.pop %v3659
    %v3666 = vrsqrt.pop %v3660
    %v3667 = vrsqrt.pop %v3661
    %v3668 = vrsqrt.pop %v3662
    %v3669 = vmul.f32 %v3621, %v3663
    %v3670 = vmul.f32 %v3622, %v3664
    %v3671 = vmul.f32 %v3623, %v3665
    %v3672 = vmul.f32 %v3624, %v3666
    %v3673 = vmul.f32 %v3625, %v3667
    %v3674 = vmul.f32 %v3626, %v3668
    %v3675 = vlaneseq
    %v3676 = vshrl.u32 %v3675, 7
    %v3677 = vsub.s32 0, %v3676
    %v3678 = vrot.slane %v3596, %v3677
    %v3679 = vmul.f32 %v3669, %v3678
    %v3680 = vmul.f32 %v3670, %v3678
    %v3681 = vmul.f32 %v3671, %v3678
    %v3682 = vmul.f32 %v3672, %v3678
    %v3683 = vmul.f32 %v3673, %v3678
    %v3684 = vmul.f32 %v3674, %v3678
    %v3685 = vlaneseq
    %v3686 = vshrl.u32 %v3685, 7
    %v3687 = vsub.s32 1, %v3686
    %v3688 = vrot.slane %v3596, %v3687
    %v3689 = vadd.f32 %v3679, %v3688
    %v3690 = vadd.f32 %v3680, %v3688
    %v3691 = vadd.f32 %v3681, %v3688
    %v3692 = vadd.f32 %v3682, %v3688
    %v3693 = vadd.f32 %v3683, %v3688
    %v3694 = vadd.f32 %v3684, %v3688
    %s3695 = scalar_lea.vmem %s12, 128
    %v3696 = vld [vmem:[%s3695] sm:$0xff]
    %v3697 = vld [vmem:[%s3695 + $0x8] sm:$0xff]
    %v3698 = vld [vmem:[%s3695 + $0x10] sm:$0xff]
    %v3699 = vld [vmem:[%s3695 + $0x18] sm:$0xff]
    %v3700 = vld [vmem:[%s3695 + $0x20] sm:$0xff]
    %v3701 = vld [vmem:[%s3695 + $0x28] sm:$0xff]
    %v3702 = vld [vmem:[%s3695 + $0x30] sm:$0xff]
    %v3703 = vld [vmem:[%s3695 + $0x38] sm:$0xff]
    %v3704 = vpack.c.bf16 %v3690, %v3689
    %v3705 = vpack.c.bf16 %v3692, %v3691
    %v3706 = vpack.c.bf16 %v3694, %v3693
    %s3707 = scalar_lea.vmem %s13, 4
    %v3708 = vld [vmem:[%s3707] sm:$0x3]
    %v3710 = vlaneseq
    %v3711 = vshrl.u32 %v3710, 7
    %v3712 = vsub.s32 0, %v3711
    %v3713 = vrot.slane %v3708, %v3712
    %v3714 = vlaneseq
    %v3715 = vshrl.u32 %v3714, 7
    %v3716 = vsub.s32 1, %v3715
    %v3717 = vrot.slane %v3708, %v3716
    %v3728 = vunpack.c.l.b16 %v3696
    %v3729 = vunpack.c.h.b16 %v3696
    %v3730 = vunpack.c.l.b16 %v3697
    %v3731 = vunpack.c.h.b16 %v3697
    %v3732 = vunpack.c.l.b16 %v3698
    %v3733 = vunpack.c.h.b16 %v3698
    %v3734 = vunpack.c.l.b16 %v3699
    %v3735 = vunpack.c.h.b16 %v3699
    %v3736 = vunpack.c.l.b16 %v3700
    %v3737 = vunpack.c.h.b16 %v3700
    %v3738 = vunpack.c.l.b16 %v3701
    %v3739 = vunpack.c.h.b16 %v3701
    %v3740 = vunpack.c.l.b16 %v3702
    %v3741 = vunpack.c.h.b16 %v3702
    %v3742 = vunpack.c.l.b16 %v3703
    %v3743 = vunpack.c.h.b16 %v3703
    %v3744 = vpack.c.b16 %v3730, %v3728
    %v3745 = vpack.c.b16 %v3731, %v3729
    %v3746 = vpack.c.b16 %v3734, %v3732
    %v3747 = vpack.c.b16 %v3735, %v3733
    %v3748 = vpack.c.b16 %v3738, %v3736
    %v3749 = vpack.c.b16 %v3739, %v3737
    %v3750 = vpack.c.b16 %v3742, %v3740
    %v3751 = vpack.c.b16 %v3743, %v3741
    %v3761 = vsel %vm252, %v3704, 0
    %v3764 = vsel %vm252, %v3705, 0
    %v3767 = vsel %vm252, %v3706, 0
    %3769 = vmatprep.subr.bf16.mxu0 0
    %3770 = vmatpush1.bf16.msra.mxu0 0
    %3771 = vmatprep.subr.bf16.mxu0 0
    %3772 = vmatpush1.bf16.msra.mxu0 0
    %3773 = vmatprep.subr.bf16.mxu0 0
    %3774 = vmatpush1.bf16.msra.mxu0 0
    %3775 = vmatprep.subr.bf16.mxu0 0
    %3776 = vmatpush1.bf16.msra.mxu0 0
    %3777 = vmatprep.subr.bf16.mxu0 %v3751
    %3778 = vmatpush1.bf16.msra.mxu0 %v3750
    %3779 = vmatprep.subr.bf16.mxu0 %v3749
    %3780 = vmatpush1.bf16.msra.mxu0 %v3748
    %3781 = vmatprep.subr.bf16.mxu0 %v3747
    %3782 = vmatpush1.bf16.msra.mxu0 %v3746
    %3783 = vmatprep.subr.bf16.mxu0 %v3745
    %3784 = vmatpush1.bf16.msra.mxu0 %v3744
    %3785 = vmatprep.subr.bf16.mxu0 0
    %3786 = vmatpush2.bf16.msra.mxu0 0
    %3787 = vmatprep.subr.bf16.mxu0 0
    %3788 = vmatpush2.bf16.msra.mxu0 0
    %3789 = vmatprep.subr.bf16.mxu0 0
    %3790 = vmatpush2.bf16.msra.mxu0 0
    %3791 = vmatprep.subr.bf16.mxu0 0
    %3792 = vmatpush2.bf16.msra.mxu0 0
    %3793 = vmatprep.subr.bf16.mxu0 0
    %3794 = vmatpush2.bf16.msra.mxu0 0
    %3795 = vmatprep.subr.bf16.mxu0 0
    %3796 = vmatpush2.bf16.msra.mxu0 0
    %3797 = vmatprep.subr.bf16.mxu0 0
    %3798 = vmatpush2.bf16.msra.mxu0 0
    %3799 = vmatprep.subr.bf16.mxu0 0
    %3800 = vmatpush2.bf16.msra.mxu0 0
    %3801 = vmatprep.mubr.bf16.mxu0 0
    %3802 = vmatmul.mubr.bf16.gmra.mxu0 %v3761
    %v3803 = vpop.f32.mrf.mxu0
    %v3804 = vadd.f32 %v3713, %v3803
    %v3805 = vpop.f32.mrf.mxu0
    %v3806 = vadd.f32 %v3717, %v3805
    %v3807 = vpop.f32.mrf.mxu0
    %v3808 = vadd.f32 %v3713, %v3807
    %v3809 = vpop.f32.mrf.mxu0
    %v3810 = vadd.f32 %v3717, %v3809
    %3811 = vmatprep.mubr.bf16.mxu0 0
    %3812 = vmatmul.mubr.bf16.gmra.mxu0 %v3764
    %v3813 = vpop.f32.mrf.mxu0
    %v3814 = vadd.f32 %v3713, %v3813
    %v3815 = vpop.f32.mrf.mxu0
    %v3816 = vadd.f32 %v3717, %v3815
    %v3817 = vpop.f32.mrf.mxu0
    %v3818 = vadd.f32 %v3713, %v3817
    %v3819 = vpop.f32.mrf.mxu0
    %v3820 = vadd.f32 %v3717, %v3819
    %3821 = vmatprep.mubr.bf16.mxu0 0
    %3822 = vmatmul.mubr.bf16.gmra.mxu0 %v3767
    %v3823 = vpop.f32.mrf.mxu0
    %v3824 = vadd.f32 %v3713, %v3823
    %v3825 = vpop.f32.mrf.mxu0
    %v3826 = vadd.f32 %v3717, %v3825
    %v3827 = vpop.f32.mrf.mxu0
    %v3828 = vadd.f32 %v3713, %v3827
    %v3829 = vpop.f32.mrf.mxu0
    %v3830 = vadd.f32 %v3717, %v3829
    %3831 = vdwg.mxu0
    %v3832 = vpack.c.bf16 %v3808, %v3804
    %v3833 = vpack.c.bf16 %v3814, %v3814
    %v3834 = vpack.c.bf16 %v3824, %v3818
    %v3835 = vpack.c.bf16 %v3828, %v3828
    %v3836 = vpack.c.bf16 %v3810, %v3806
    %v3837 = vpack.c.bf16 %v3816, %v3816
    %v3838 = vpack.c.bf16 %v3826, %v3820
    %v3839 = vpack.c.bf16 %v3830, %v3830
    %3842 = vrot.lane.b32.xlu0 %v3832, 64
    %v3843 = vpop.permute.xlu0 %3842
    %3844 = vrot.lane.b32.xlu0 %v3833, 64
    %v3845 = vpop.permute.xlu0 %3844
    %v3847 = vsel %vm779, %v3832, 0
    %v3850 = vsel %vm779, %v3833, 0
    %v3853 = vsel %vm779, %v3843, 0
    %v3856 = vsel %vm779, %v3845, 0
    %3858 = vmatprep.subr.bf16.mxu0 0
    %3859 = vmatpush1.bf16.xpose.msra.mxu0 0
    %3860 = vmatprep.subr.bf16.mxu0 0
    %3861 = vmatpush1.bf16.xpose.msra.mxu0 0
    %3862 = vmatprep.subr.bf16.mxu0 0
    %3863 = vmatpush1.bf16.xpose.msra.mxu0 0
    %3864 = vmatprep.subr.bf16.mxu0 0
    %3865 = vmatpush1.bf16.xpose.msra.mxu0 0
    %3866 = vmatprep.subr.bf16.mxu0 0
    %3867 = vmatpush1.bf16.xpose.msra.mxu0 0
    %3868 = vmatprep.subr.bf16.mxu0 0
    %3869 = vmatpush1.bf16.xpose.msra.mxu0 0
    %3870 = vmatprep.subr.bf16.mxu0 0
    %3871 = vmatpush1.bf16.xpose.msra.mxu0 %v3856
    %3872 = vmatprep.subr.bf16.mxu0 0
    %3873 = vmatpush1.bf16.xpose.msra.mxu0 %v3853
    %3874 = vmatprep.subr.bf16.mxu0 0
    %3875 = vmatpush2.bf16.xpose.msra.mxu0 0
    %3876 = vmatprep.subr.bf16.mxu0 0
    %3877 = vmatpush2.bf16.xpose.msra.mxu0 0
    %3878 = vmatprep.subr.bf16.mxu0 0
    %3879 = vmatpush2.bf16.xpose.msra.mxu0 0
    %3880 = vmatprep.subr.bf16.mxu0 0
    %3881 = vmatpush2.bf16.xpose.msra.mxu0 0
    %3882 = vmatprep.subr.bf16.mxu0 0
    %3883 = vmatpush2.bf16.xpose.msra.mxu0 0
    %3884 = vmatprep.subr.bf16.mxu0 0
    %3885 = vmatpush2.bf16.xpose.msra.mxu0 0
    %3886 = vmatprep.subr.bf16.mxu0 0
    %3887 = vmatpush2.bf16.xpose.msra.mxu0 0
    %3888 = vmatprep.subr.bf16.mxu0 0
    %3889 = vmatpush2.bf16.xpose.msra.mxu0 0
    %3890 = vmatprep.mubr.bf16.mxu0 0
    %3891 = vmatmul.mubr.bf16.gmra.mxu0 %v3847
    %v3892 = vpop.f32.mrf.mxu0
    %v3893 = vadd.f32 0.0, %v3892
    %v3894 = vpop.f32.mrf.mxu0
    %v3895 = vpop.f32.mrf.mxu0
    %v3896 = vadd.f32 0.0, %v3895
    %v3897 = vpop.f32.mrf.mxu0
    %3898 = vmatprep.mubr.bf16.mxu0 0
    %3899 = vmatmul.mubr.bf16.gmra.mxu0 %v3850
    %v3900 = vpop.f32.mrf.mxu0
    %v3901 = vadd.f32 0.0, %v3900
    %v3902 = vpop.f32.mrf.mxu0
    %v3903 = vpop.f32.mrf.mxu0
    %v3904 = vpop.f32.mrf.mxu0
    %3905 = vdwg.mxu0
    %3908 = vrot.lane.b32.xlu0 %v3834, 64
    %v3909 = vpop.permute.xlu0 %3908
    %3910 = vrot.lane.b32.xlu0 %v3835, 64
    %v3911 = vpop.permute.xlu0 %3910
    %v3913 = vsel %vm779, %v3834, 0
    %v3916 = vsel %vm779, %v3835, 0
    %v3919 = vsel %vm779, %v3909, 0
    %v3922 = vsel %vm779, %v3911, 0
    %3924 = vmatprep.subr.bf16.mxu0 0
    %3925 = vmatpush1.bf16.xpose.msra.mxu0 0
    %3926 = vmatprep.subr.bf16.mxu0 0
    %3927 = vmatpush1.bf16.xpose.msra.mxu0 0
    %3928 = vmatprep.subr.bf16.mxu0 0
    %3929 = vmatpush1.bf16.xpose.msra.mxu0 0
    %3930 = vmatprep.subr.bf16.mxu0 0
    %3931 = vmatpush1.bf16.xpose.msra.mxu0 0
    %3932 = vmatprep.subr.bf16.mxu0 0
    %3933 = vmatpush1.bf16.xpose.msra.mxu0 0
    %3934 = vmatprep.subr.bf16.mxu0 0
    %3935 = vmatpush1.bf16.xpose.msra.mxu0 0
    %3936 = vmatprep.subr.bf16.mxu0 0
    %3937 = vmatpush1.bf16.xpose.msra.mxu0 %v3922
    %3938 = vmatprep.subr.bf16.mxu0 0
    %3939 = vmatpush1.bf16.xpose.msra.mxu0 %v3919
    %3940 = vmatprep.subr.bf16.mxu0 0
    %3941 = vmatpush2.bf16.xpose.msra.mxu0 0
    %3942 = vmatprep.subr.bf16.mxu0 0
    %3943 = vmatpush2.bf16.xpose.msra.mxu0 0
    %3944 = vmatprep.subr.bf16.mxu0 0
    %3945 = vmatpush2.bf16.xpose.msra.mxu0 0
    %3946 = vmatprep.subr.bf16.mxu0 0
    %3947 = vmatpush2.bf16.xpose.msra.mxu0 0
    %3948 = vmatprep.subr.bf16.mxu0 0
    %3949 = vmatpush2.bf16.xpose.msra.mxu0 0
    %3950 = vmatprep.subr.bf16.mxu0 0
    %3951 = vmatpush2.bf16.xpose.msra.mxu0 0
    %3952 = vmatprep.subr.bf16.mxu0 0
    %3953 = vmatpush2.bf16.xpose.msra.mxu0 0
    %3954 = vmatprep.subr.bf16.mxu0 0
    %3955 = vmatpush2.bf16.xpose.msra.mxu0 0
    %3956 = vmatprep.mubr.bf16.mxu0 0
    %3957 = vmatmul.mubr.bf16.gmra.mxu0 %v3913
    %v3958 = vpop.f32.mrf.mxu0
    %v3959 = vadd.f32 0.0, %v3958
    %v3960 = vpop.f32.mrf.mxu0
    %v3961 = vpop.f32.mrf.mxu0
    %v3962 = vadd.f32 0.0, %v3961
    %v3963 = vpop.f32.mrf.mxu0
    %3964 = vmatprep.mubr.bf16.mxu0 0
    %3965 = vmatmul.mubr.bf16.gmra.mxu0 %v3916
    %v3966 = vpop.f32.mrf.mxu0
    %v3967 = vadd.f32 0.0, %v3966
    %v3968 = vpop.f32.mrf.mxu0
    %v3969 = vpop.f32.mrf.mxu0
    %v3970 = vpop.f32.mrf.mxu0
    %3971 = vdwg.mxu0
    %v3972 = vmul.f32 %v3893, 0.17677669
    %v3973 = vmul.f32 %v3896, 0.17677669
    %v3974 = vmul.f32 %v3901, 0.17677669
    %v3975 = vmul.f32 %v3959, 0.17677669
    %v3976 = vmul.f32 %v3962, 0.17677669
    %v3977 = vmul.f32 %v3967, 0.17677669
    %v3978 = vadd.f32 %v3972, %v915
    %v3979 = vadd.f32 %v3973, %v915
    %v3980 = vadd.f32 %v3974, %v915
    %v3981 = vadd.f32 %v3975, %v919
    %v3982 = vadd.f32 %v3976, %v919
    %v3983 = vadd.f32 %v3977, %v919
    %v3984 = vsel %vm928, %v3978, -inf
    %3985 = vmax.xlane.f32.xlu0 %v3984
    %v3986 = vpop.xlane.xlu0 %3985
    %v3987 = vsel %vm928, %v3979, -inf
    %3988 = vmax.xlane.f32.xlu0 %v3987
    %v3989 = vpop.xlane.xlu0 %3988
    %v3990 = vsel %vm928, %v3980, -inf
    %3991 = vmax.xlane.f32.xlu0 %v3990
    %v3992 = vpop.xlane.xlu0 %3991
    %v3993 = vsel %vm928, %v3981, -inf
    %3994 = vmax.xlane.f32.xlu0 %v3993
    %v3995 = vpop.xlane.xlu0 %3994
    %v3996 = vsel %vm928, %v3982, -inf
    %3997 = vmax.xlane.f32.xlu0 %v3996
    %v3998 = vpop.xlane.xlu0 %3997
    %v3999 = vsel %vm928, %v3983, -inf
    %4000 = vmax.xlane.f32.xlu0 %v3999
    %v4001 = vpop.xlane.xlu0 %4000
    %v4002 = vsub.f32 %v3978, %v3986
    %v4003 = vsub.f32 %v3979, %v3989
    %v4004 = vsub.f32 %v3980, %v3992
    %v4005 = vsub.f32 %v3981, %v3995
    %v4006 = vsub.f32 %v3982, %v3998
    %v4007 = vsub.f32 %v3983, %v4001
    %v4008 = vmul.f32 %v4002, 1.442695
    %v4009 = vpow.pop %v4008
    %v4010 = vmul.f32 %v4003, 1.442695
    %v4011 = vpow.pop %v4010
    %v4012 = vmul.f32 %v4004, 1.442695
    %v4013 = vpow.pop %v4012
    %v4014 = vmul.f32 %v4005, 1.442695
    %v4015 = vpow.pop %v4014
    %v4016 = vmul.f32 %v4006, 1.442695
    %v4017 = vpow.pop %v4016
    %v4018 = vmul.f32 %v4007, 1.442695
    %v4019 = vpow.pop %v4018
    %v4020 = vsel %vm928, %v4009, 0.0
    %4021 = vadd.xlane.f32.xlu0 %v4020
    %v4022 = vpop.xlane.xlu0 %4021
    %v4023 = vsel %vm928, %v4011, 0.0
    %4024 = vadd.xlane.f32.xlu0 %v4023
    %v4025 = vpop.xlane.xlu0 %4024
    %v4026 = vsel %vm928, %v4013, 0.0
    %4027 = vadd.xlane.f32.xlu0 %v4026
    %v4028 = vpop.xlane.xlu0 %4027
    %v4029 = vsel %vm928, %v4015, 0.0
    %4030 = vadd.xlane.f32.xlu0 %v4029
    %v4031 = vpop.xlane.xlu0 %4030
    %v4032 = vsel %vm928, %v4017, 0.0
    %4033 = vadd.xlane.f32.xlu0 %v4032
    %v4034 = vpop.xlane.xlu0 %4033
    %v4035 = vsel %vm928, %v4019, 0.0
    %4036 = vadd.xlane.f32.xlu0 %v4035
    %v4037 = vpop.xlane.xlu0 %4036
    %v4038 = vrcp.pop %v4022
    %v4039 = vrcp.pop %v4025
    %v4040 = vrcp.pop %v4028
    %v4041 = vrcp.pop %v4031
    %v4042 = vrcp.pop %v4034
    %v4043 = vrcp.pop %v4037
    %v4044 = vmul.f32 %v4009, %v4038
    %v4045 = vmul.f32 %v4011, %v4039
    %v4046 = vmul.f32 %v4013, %v4040
    %v4047 = vmul.f32 %v4015, %v4041
    %v4048 = vmul.f32 %v4017, %v4042
    %v4049 = vmul.f32 %v4019, %v4043
    %v4050 = vpack.c.bf16 %v4045, %v4044
    %v4051 = vpack.c.bf16 %v4046, %v4046
    %v4052 = vpack.c.bf16 %v4048, %v4047
    %v4053 = vpack.c.bf16 %v4049, %v4049
    %v4055 = vsel %vm928, %v4050, 0
    %v4058 = vsel %vm928, %v4051, 0
    %v4061 = vsel %vm1005, %v3837, 0
    %4063 = vmatprep.subr.bf16.mxu0 0
    %4064 = vmatpush1.bf16.msra.mxu0 0
    %4065 = vmatprep.subr.bf16.mxu0 0
    %4066 = vmatpush1.bf16.msra.mxu0 0
    %4067 = vmatprep.subr.bf16.mxu0 0
    %4068 = vmatpush1.bf16.msra.mxu0 0
    %4069 = vmatprep.subr.bf16.mxu0 0
    %4070 = vmatpush1.bf16.msra.mxu0 0
    %4071 = vmatprep.subr.bf16.mxu0 0
    %4072 = vmatpush1.bf16.msra.mxu0 0
    %4073 = vmatprep.subr.bf16.mxu0 0
    %4074 = vmatpush1.bf16.msra.mxu0 0
    %4075 = vmatprep.subr.bf16.mxu0 0
    %4076 = vmatpush1.bf16.msra.mxu0 %v4061
    %4077 = vmatprep.subr.bf16.mxu0 0
    %4078 = vmatpush1.bf16.msra.mxu0 %v3836
    %4079 = vmatprep.subr.bf16.mxu0 0
    %4080 = vmatpush2.bf16.msra.mxu0 0
    %4081 = vmatprep.subr.bf16.mxu0 0
    %4082 = vmatpush2.bf16.msra.mxu0 0
    %4083 = vmatprep.subr.bf16.mxu0 0
    %4084 = vmatpush2.bf16.msra.mxu0 0
    %4085 = vmatprep.subr.bf16.mxu0 0
    %4086 = vmatpush2.bf16.msra.mxu0 0
    %4087 = vmatprep.subr.bf16.mxu0 0
    %4088 = vmatpush2.bf16.msra.mxu0 0
    %4089 = vmatprep.subr.bf16.mxu0 0
    %4090 = vmatpush2.bf16.msra.mxu0 0
    %4091 = vmatprep.subr.bf16.mxu0 0
    %4092 = vmatpush2.bf16.msra.mxu0 0
    %4093 = vmatprep.subr.bf16.mxu0 0
    %4094 = vmatpush2.bf16.msra.mxu0 0
    %4095 = vmatprep.mubr.bf16.mxu0 0
    %4096 = vmatmul.mubr.bf16.gmra.mxu0 %v4055
    %v4097 = vpop.f32.mrf.mxu0
    %v4098 = vadd.f32 0.0, %v4097
    %v4099 = vpop.f32.mrf.mxu0
    %v4100 = vpop.f32.mrf.mxu0
    %v4101 = vadd.f32 0.0, %v4100
    %v4102 = vpop.f32.mrf.mxu0
    %4103 = vmatprep.mubr.bf16.mxu0 0
    %4104 = vmatmul.mubr.bf16.gmra.mxu0 %v4058
    %v4105 = vpop.f32.mrf.mxu0
    %v4106 = vadd.f32 0.0, %v4105
    %v4107 = vpop.f32.mrf.mxu0
    %v4108 = vpop.f32.mrf.mxu0
    %v4109 = vpop.f32.mrf.mxu0
    %4110 = vdwg.mxu0
    %v4112 = vsel %vm928, %v4052, 0
    %v4115 = vsel %vm928, %v4053, 0
    %v4118 = vsel %vm1005, %v3839, 0
    %4120 = vmatprep.subr.bf16.mxu0 0
    %4121 = vmatpush1.bf16.msra.mxu0 0
    %4122 = vmatprep.subr.bf16.mxu0 0
    %4123 = vmatpush1.bf16.msra.mxu0 0
    %4124 = vmatprep.subr.bf16.mxu0 0
    %4125 = vmatpush1.bf16.msra.mxu0 0
    %4126 = vmatprep.subr.bf16.mxu0 0
    %4127 = vmatpush1.bf16.msra.mxu0 0
    %4128 = vmatprep.subr.bf16.mxu0 0
    %4129 = vmatpush1.bf16.msra.mxu0 0
    %4130 = vmatprep.subr.bf16.mxu0 0
    %4131 = vmatpush1.bf16.msra.mxu0 0
    %4132 = vmatprep.subr.bf16.mxu0 0
    %4133 = vmatpush1.bf16.msra.mxu0 %v4118
    %4134 = vmatprep.subr.bf16.mxu0 0
    %4135 = vmatpush1.bf16.msra.mxu0 %v3838
    %4136 = vmatprep.subr.bf16.mxu0 0
    %4137 = vmatpush2.bf16.msra.mxu0 0
    %4138 = vmatprep.subr.bf16.mxu0 0
    %4139 = vmatpush2.bf16.msra.mxu0 0
    %4140 = vmatprep.subr.bf16.mxu0 0
    %4141 = vmatpush2.bf16.msra.mxu0 0
    %4142 = vmatprep.subr.bf16.mxu0 0
    %4143 = vmatpush2.bf16.msra.mxu0 0
    %4144 = vmatprep.subr.bf16.mxu0 0
    %4145 = vmatpush2.bf16.msra.mxu0 0
    %4146 = vmatprep.subr.bf16.mxu0 0
    %4147 = vmatpush2.bf16.msra.mxu0 0
    %4148 = vmatprep.subr.bf16.mxu0 0
    %4149 = vmatpush2.bf16.msra.mxu0 0
    %4150 = vmatprep.subr.bf16.mxu0 0
    %4151 = vmatpush2.bf16.msra.mxu0 0
    %4152 = vmatprep.mubr.bf16.mxu0 0
    %4153 = vmatmul.mubr.bf16.gmra.mxu0 %v4112
    %v4154 = vpop.f32.mrf.mxu0
    %v4155 = vadd.f32 0.0, %v4154
    %v4156 = vpop.f32.mrf.mxu0
    %v4157 = vpop.f32.mrf.mxu0
    %v4158 = vadd.f32 0.0, %v4157
    %v4159 = vpop.f32.mrf.mxu0
    %4160 = vmatprep.mubr.bf16.mxu0 0
    %4161 = vmatmul.mubr.bf16.gmra.mxu0 %v4115
    %v4162 = vpop.f32.mrf.mxu0
    %v4163 = vadd.f32 0.0, %v4162
    %v4164 = vpop.f32.mrf.mxu0
    %v4165 = vpop.f32.mrf.mxu0
    %v4166 = vpop.f32.mrf.mxu0
    %4167 = vdwg.mxu0
    %4168 = vrot.lane.b32.xlu0 %v3832, 96
    %v4169 = vpop.permute.xlu0 %4168
    %4170 = vrot.lane.b32.xlu0 %v3833, 96
    %v4171 = vpop.permute.xlu0 %4170
    %4172 = vrot.lane.b32.xlu0 %v3832, 32
    %v4173 = vpop.permute.xlu0 %4172
    %4174 = vrot.lane.b32.xlu0 %v3833, 32
    %v4175 = vpop.permute.xlu0 %4174
    %v4177 = vsel %vm779, %v4169, 0
    %v4180 = vsel %vm779, %v4171, 0
    %v4183 = vsel %vm779, %v4173, 0
    %v4186 = vsel %vm779, %v4175, 0
    %4188 = vmatprep.subr.bf16.mxu0 0
    %4189 = vmatpush1.bf16.xpose.msra.mxu0 0
    %4190 = vmatprep.subr.bf16.mxu0 0
    %4191 = vmatpush1.bf16.xpose.msra.mxu0 0
    %4192 = vmatprep.subr.bf16.mxu0 0
    %4193 = vmatpush1.bf16.xpose.msra.mxu0 0
    %4194 = vmatprep.subr.bf16.mxu0 0
    %4195 = vmatpush1.bf16.xpose.msra.mxu0 0
    %4196 = vmatprep.subr.bf16.mxu0 0
    %4197 = vmatpush1.bf16.xpose.msra.mxu0 0
    %4198 = vmatprep.subr.bf16.mxu0 0
    %4199 = vmatpush1.bf16.xpose.msra.mxu0 0
    %4200 = vmatprep.subr.bf16.mxu0 0
    %4201 = vmatpush1.bf16.xpose.msra.mxu0 %v4186
    %4202 = vmatprep.subr.bf16.mxu0 0
    %4203 = vmatpush1.bf16.xpose.msra.mxu0 %v4183
    %4204 = vmatprep.subr.bf16.mxu0 0
    %4205 = vmatpush2.bf16.xpose.msra.mxu0 0
    %4206 = vmatprep.subr.bf16.mxu0 0
    %4207 = vmatpush2.bf16.xpose.msra.mxu0 0
    %4208 = vmatprep.subr.bf16.mxu0 0
    %4209 = vmatpush2.bf16.xpose.msra.mxu0 0
    %4210 = vmatprep.subr.bf16.mxu0 0
    %4211 = vmatpush2.bf16.xpose.msra.mxu0 0
    %4212 = vmatprep.subr.bf16.mxu0 0
    %4213 = vmatpush2.bf16.xpose.msra.mxu0 0
    %4214 = vmatprep.subr.bf16.mxu0 0
    %4215 = vmatpush2.bf16.xpose.msra.mxu0 0
    %4216 = vmatprep.subr.bf16.mxu0 0
    %4217 = vmatpush2.bf16.xpose.msra.mxu0 0
    %4218 = vmatprep.subr.bf16.mxu0 0
    %4219 = vmatpush2.bf16.xpose.msra.mxu0 0
    %4220 = vmatprep.mubr.bf16.mxu0 0
    %4221 = vmatmul.mubr.bf16.gmra.mxu0 %v4177
    %v4222 = vpop.f32.mrf.mxu0
    %v4223 = vadd.f32 0.0, %v4222
    %v4224 = vpop.f32.mrf.mxu0
    %v4225 = vpop.f32.mrf.mxu0
    %v4226 = vadd.f32 0.0, %v4225
    %v4227 = vpop.f32.mrf.mxu0
    %4228 = vmatprep.mubr.bf16.mxu0 0
    %4229 = vmatmul.mubr.bf16.gmra.mxu0 %v4180
    %v4230 = vpop.f32.mrf.mxu0
    %v4231 = vadd.f32 0.0, %v4230
    %v4232 = vpop.f32.mrf.mxu0
    %v4233 = vpop.f32.mrf.mxu0
    %v4234 = vpop.f32.mrf.mxu0
    %4235 = vdwg.mxu0
    %4236 = vrot.lane.b32.xlu0 %v3834, 96
    %v4237 = vpop.permute.xlu0 %4236
    %4238 = vrot.lane.b32.xlu0 %v3835, 96
    %v4239 = vpop.permute.xlu0 %4238
    %4240 = vrot.lane.b32.xlu0 %v3834, 32
    %v4241 = vpop.permute.xlu0 %4240
    %4242 = vrot.lane.b32.xlu0 %v3835, 32
    %v4243 = vpop.permute.xlu0 %4242
    %v4245 = vsel %vm779, %v4237, 0
    %v4248 = vsel %vm779, %v4239, 0
    %v4251 = vsel %vm779, %v4241, 0
    %v4254 = vsel %vm779, %v4243, 0
    %4256 = vmatprep.subr.bf16.mxu0 0
    %4257 = vmatpush1.bf16.xpose.msra.mxu0 0
    %4258 = vmatprep.subr.bf16.mxu0 0
    %4259 = vmatpush1.bf16.xpose.msra.mxu0 0
    %4260 = vmatprep.subr.bf16.mxu0 0
    %4261 = vmatpush1.bf16.xpose.msra.mxu0 0
    %4262 = vmatprep.subr.bf16.mxu0 0
    %4263 = vmatpush1.bf16.xpose.msra.mxu0 0
    %4264 = vmatprep.subr.bf16.mxu0 0
    %4265 = vmatpush1.bf16.xpose.msra.mxu0 0
    %4266 = vmatprep.subr.bf16.mxu0 0
    %4267 = vmatpush1.bf16.xpose.msra.mxu0 0
    %4268 = vmatprep.subr.bf16.mxu0 0
    %4269 = vmatpush1.bf16.xpose.msra.mxu0 %v4254
    %4270 = vmatprep.subr.bf16.mxu0 0
    %4271 = vmatpush1.bf16.xpose.msra.mxu0 %v4251
    %4272 = vmatprep.subr.bf16.mxu0 0
    %4273 = vmatpush2.bf16.xpose.msra.mxu0 0
    %4274 = vmatprep.subr.bf16.mxu0 0
    %4275 = vmatpush2.bf16.xpose.msra.mxu0 0
    %4276 = vmatprep.subr.bf16.mxu0 0
    %4277 = vmatpush2.bf16.xpose.msra.mxu0 0
    %4278 = vmatprep.subr.bf16.mxu0 0
    %4279 = vmatpush2.bf16.xpose.msra.mxu0 0
    %4280 = vmatprep.subr.bf16.mxu0 0
    %4281 = vmatpush2.bf16.xpose.msra.mxu0 0
    %4282 = vmatprep.subr.bf16.mxu0 0
    %4283 = vmatpush2.bf16.xpose.msra.mxu0 0
    %4284 = vmatprep.subr.bf16.mxu0 0
    %4285 = vmatpush2.bf16.xpose.msra.mxu0 0
    %4286 = vmatprep.subr.bf16.mxu0 0
    %4287 = vmatpush2.bf16.xpose.msra.mxu0 0
    %4288 = vmatprep.mubr.bf16.mxu0 0
    %4289 = vmatmul.mubr.bf16.gmra.mxu0 %v4245
    %v4290 = vpop.f32.mrf.mxu0
    %v4291 = vadd.f32 0.0, %v4290
    %v4292 = vpop.f32.mrf.mxu0
    %v4293 = vpop.f32.mrf.mxu0
    %v4294 = vadd.f32 0.0, %v4293
    %v4295 = vpop.f32.mrf.mxu0
    %4296 = vmatprep.mubr.bf16.mxu0 0
    %4297 = vmatmul.mubr.bf16.gmra.mxu0 %v4248
    %v4298 = vpop.f32.mrf.mxu0
    %v4299 = vadd.f32 0.0, %v4298
    %v4300 = vpop.f32.mrf.mxu0
    %v4301 = vpop.f32.mrf.mxu0
    %v4302 = vpop.f32.mrf.mxu0
    %4303 = vdwg.mxu0
    %v4304 = vmul.f32 %v4223, 0.17677669
    %v4305 = vmul.f32 %v4226, 0.17677669
    %v4306 = vmul.f32 %v4231, 0.17677669
    %v4307 = vmul.f32 %v4291, 0.17677669
    %v4308 = vmul.f32 %v4294, 0.17677669
    %v4309 = vmul.f32 %v4299, 0.17677669
    %v4310 = vadd.f32 %v4304, %v915
    %v4311 = vadd.f32 %v4305, %v915
    %v4312 = vadd.f32 %v4306, %v915
    %v4313 = vadd.f32 %v4307, %v919
    %v4314 = vadd.f32 %v4308, %v919
    %v4315 = vadd.f32 %v4309, %v919
    %v4316 = vsel %vm928, %v4310, -inf
    %4317 = vmax.xlane.f32.xlu0 %v4316
    %v4318 = vpop.xlane.xlu0 %4317
    %v4319 = vsel %vm928, %v4311, -inf
    %4320 = vmax.xlane.f32.xlu0 %v4319
    %v4321 = vpop.xlane.xlu0 %4320
    %v4322 = vsel %vm928, %v4312, -inf
    %4323 = vmax.xlane.f32.xlu0 %v4322
    %v4324 = vpop.xlane.xlu0 %4323
    %v4325 = vsel %vm928, %v4313, -inf
    %4326 = vmax.xlane.f32.xlu0 %v4325
    %v4327 = vpop.xlane.xlu0 %4326
    %v4328 = vsel %vm928, %v4314, -inf
    %4329 = vmax.xlane.f32.xlu0 %v4328
    %v4330 = vpop.xlane.xlu0 %4329
    %v4331 = vsel %vm928, %v4315, -inf
    %4332 = vmax.xlane.f32.xlu0 %v4331
    %v4333 = vpop.xlane.xlu0 %4332
    %v4334 = vsub.f32 %v4310, %v4318
    %v4335 = vsub.f32 %v4311, %v4321
    %v4336 = vsub.f32 %v4312, %v4324
    %v4337 = vsub.f32 %v4313, %v4327
    %v4338 = vsub.f32 %v4314, %v4330
    %v4339 = vsub.f32 %v4315, %v4333
    %v4340 = vmul.f32 %v4334, 1.442695
    %v4341 = vpow.pop %v4340
    %v4342 = vmul.f32 %v4335, 1.442695
    %v4343 = vpow.pop %v4342
    %v4344 = vmul.f32 %v4336, 1.442695
    %v4345 = vpow.pop %v4344
    %v4346 = vmul.f32 %v4337, 1.442695
    %v4347 = vpow.pop %v4346
    %v4348 = vmul.f32 %v4338, 1.442695
    %v4349 = vpow.pop %v4348
    %v4350 = vmul.f32 %v4339, 1.442695
    %v4351 = vpow.pop %v4350
    %v4352 = vsel %vm928, %v4341, 0.0
    %4353 = vadd.xlane.f32.xlu0 %v4352
    %v4354 = vpop.xlane.xlu0 %4353
    %v4355 = vsel %vm928, %v4343, 0.0
    %4356 = vadd.xlane.f32.xlu0 %v4355
    %v4357 = vpop.xlane.xlu0 %4356
    %v4358 = vsel %vm928, %v4345, 0.0
    %4359 = vadd.xlane.f32.xlu0 %v4358
    %v4360 = vpop.xlane.xlu0 %4359
    %v4361 = vsel %vm928, %v4347, 0.0
    %4362 = vadd.xlane.f32.xlu0 %v4361
    %v4363 = vpop.xlane.xlu0 %4362
    %v4364 = vsel %vm928, %v4349, 0.0
    %4365 = vadd.xlane.f32.xlu0 %v4364
    %v4366 = vpop.xlane.xlu0 %4365
    %v4367 = vsel %vm928, %v4351, 0.0
    %4368 = vadd.xlane.f32.xlu0 %v4367
    %v4369 = vpop.xlane.xlu0 %4368
    %v4370 = vrcp.pop %v4354
    %v4371 = vrcp.pop %v4357
    %v4372 = vrcp.pop %v4360
    %v4373 = vrcp.pop %v4363
    %v4374 = vrcp.pop %v4366
    %v4375 = vrcp.pop %v4369
    %v4376 = vmul.f32 %v4341, %v4370
    %v4377 = vmul.f32 %v4343, %v4371
    %v4378 = vmul.f32 %v4345, %v4372
    %v4379 = vmul.f32 %v4347, %v4373
    %v4380 = vmul.f32 %v4349, %v4374
    %v4381 = vmul.f32 %v4351, %v4375
    %v4382 = vpack.c.bf16 %v4377, %v4376
    %v4383 = vpack.c.bf16 %v4378, %v4378
    %v4384 = vpack.c.bf16 %v4380, %v4379
    %v4385 = vpack.c.bf16 %v4381, %v4381
    %4388 = vrot.lane.b32.xlu0 %v3836, 96
    %v4389 = vpop.permute.xlu0 %4388
    %4390 = vrot.lane.b32.xlu0 %v3837, 96
    %v4391 = vpop.permute.xlu0 %4390
    %v4394 = vsel %vm928, %v4382, 0
    %v4397 = vsel %vm928, %v4383, 0
    %v4400 = vsel %vm1005, %v4391, 0
    %4402 = vmatprep.subr.bf16.mxu0 0
    %4403 = vmatpush1.bf16.msra.mxu0 0
    %4404 = vmatprep.subr.bf16.mxu0 0
    %4405 = vmatpush1.bf16.msra.mxu0 0
    %4406 = vmatprep.subr.bf16.mxu0 0
    %4407 = vmatpush1.bf16.msra.mxu0 0
    %4408 = vmatprep.subr.bf16.mxu0 0
    %4409 = vmatpush1.bf16.msra.mxu0 0
    %4410 = vmatprep.subr.bf16.mxu0 0
    %4411 = vmatpush1.bf16.msra.mxu0 0
    %4412 = vmatprep.subr.bf16.mxu0 0
    %4413 = vmatpush1.bf16.msra.mxu0 0
    %4414 = vmatprep.subr.bf16.mxu0 0
    %4415 = vmatpush1.bf16.msra.mxu0 %v4400
    %4416 = vmatprep.subr.bf16.mxu0 0
    %4417 = vmatpush1.bf16.msra.mxu0 %v4389
    %4418 = vmatprep.subr.bf16.mxu0 0
    %4419 = vmatpush2.bf16.msra.mxu0 0
    %4420 = vmatprep.subr.bf16.mxu0 0
    %4421 = vmatpush2.bf16.msra.mxu0 0
    %4422 = vmatprep.subr.bf16.mxu0 0
    %4423 = vmatpush2.bf16.msra.mxu0 0
    %4424 = vmatprep.subr.bf16.mxu0 0
    %4425 = vmatpush2.bf16.msra.mxu0 0
    %4426 = vmatprep.subr.bf16.mxu0 0
    %4427 = vmatpush2.bf16.msra.mxu0 0
    %4428 = vmatprep.subr.bf16.mxu0 0
    %4429 = vmatpush2.bf16.msra.mxu0 0
    %4430 = vmatprep.subr.bf16.mxu0 0
    %4431 = vmatpush2.bf16.msra.mxu0 0
    %4432 = vmatprep.subr.bf16.mxu0 0
    %4433 = vmatpush2.bf16.msra.mxu0 0
    %4434 = vmatprep.mubr.bf16.mxu0 0
    %4435 = vmatmul.mubr.bf16.gmra.mxu0 %v4394
    %v4436 = vpop.f32.mrf.mxu0
    %v4437 = vadd.f32 0.0, %v4436
    %v4438 = vpop.f32.mrf.mxu0
    %v4439 = vpop.f32.mrf.mxu0
    %v4440 = vadd.f32 0.0, %v4439
    %v4441 = vpop.f32.mrf.mxu0
    %4442 = vmatprep.mubr.bf16.mxu0 0
    %4443 = vmatmul.mubr.bf16.gmra.mxu0 %v4397
    %v4444 = vpop.f32.mrf.mxu0
    %v4445 = vadd.f32 0.0, %v4444
    %v4446 = vpop.f32.mrf.mxu0
    %v4447 = vpop.f32.mrf.mxu0
    %v4448 = vpop.f32.mrf.mxu0
    %4449 = vdwg.mxu0
    %4452 = vrot.lane.b32.xlu0 %v3838, 96
    %v4453 = vpop.permute.xlu0 %4452
    %4454 = vrot.lane.b32.xlu0 %v3839, 96
    %v4455 = vpop.permute.xlu0 %4454
    %v4458 = vsel %vm928, %v4384, 0
    %v4461 = vsel %vm928, %v4385, 0
    %v4464 = vsel %vm1005, %v4455, 0
    %4466 = vmatprep.subr.bf16.mxu0 0
    %4467 = vmatpush1.bf16.msra.mxu0 0
    %4468 = vmatprep.subr.bf16.mxu0 0
    %4469 = vmatpush1.bf16.msra.mxu0 0
    %4470 = vmatprep.subr.bf16.mxu0 0
    %4471 = vmatpush1.bf16.msra.mxu0 0
    %4472 = vmatprep.subr.bf16.mxu0 0
    %4473 = vmatpush1.bf16.msra.mxu0 0
    %4474 = vmatprep.subr.bf16.mxu0 0
    %4475 = vmatpush1.bf16.msra.mxu0 0
    %4476 = vmatprep.subr.bf16.mxu0 0
    %4477 = vmatpush1.bf16.msra.mxu0 0
    %4478 = vmatprep.subr.bf16.mxu0 0
    %4479 = vmatpush1.bf16.msra.mxu0 %v4464
    %4480 = vmatprep.subr.bf16.mxu0 0
    %4481 = vmatpush1.bf16.msra.mxu0 %v4453
    %4482 = vmatprep.subr.bf16.mxu0 0
    %4483 = vmatpush2.bf16.msra.mxu0 0
    %4484 = vmatprep.subr.bf16.mxu0 0
    %4485 = vmatpush2.bf16.msra.mxu0 0
    %4486 = vmatprep.subr.bf16.mxu0 0
    %4487 = vmatpush2.bf16.msra.mxu0 0
    %4488 = vmatprep.subr.bf16.mxu0 0
    %4489 = vmatpush2.bf16.msra.mxu0 0
    %4490 = vmatprep.subr.bf16.mxu0 0
    %4491 = vmatpush2.bf16.msra.mxu0 0
    %4492 = vmatprep.subr.bf16.mxu0 0
    %4493 = vmatpush2.bf16.msra.mxu0 0
    %4494 = vmatprep.subr.bf16.mxu0 0
    %4495 = vmatpush2.bf16.msra.mxu0 0
    %4496 = vmatprep.subr.bf16.mxu0 0
    %4497 = vmatpush2.bf16.msra.mxu0 0
    %4498 = vmatprep.mubr.bf16.mxu0 0
    %4499 = vmatmul.mubr.bf16.gmra.mxu0 %v4458
    %v4500 = vpop.f32.mrf.mxu0
    %v4501 = vadd.f32 0.0, %v4500
    %v4502 = vpop.f32.mrf.mxu0
    %v4503 = vpop.f32.mrf.mxu0
    %v4504 = vadd.f32 0.0, %v4503
    %v4505 = vpop.f32.mrf.mxu0
    %4506 = vmatprep.mubr.bf16.mxu0 0
    %4507 = vmatmul.mubr.bf16.gmra.mxu0 %v4461
    %v4508 = vpop.f32.mrf.mxu0
    %v4509 = vadd.f32 0.0, %v4508
    %v4510 = vpop.f32.mrf.mxu0
    %v4511 = vpop.f32.mrf.mxu0
    %v4512 = vpop.f32.mrf.mxu0
    %4513 = vdwg.mxu0
    %4520 = vrot.lane.b32.xlu0 %v4437, 32
    %v4521 = vpop.permute.xlu0 %4520
    %4522 = vrot.lane.b32.xlu0 %v4440, 32
    %v4523 = vpop.permute.xlu0 %4522
    %4524 = vrot.lane.b32.xlu0 %v4445, 32
    %v4525 = vpop.permute.xlu0 %4524
    %4526 = vrot.lane.b32.xlu0 %v4501, 32
    %v4527 = vpop.permute.xlu0 %4526
    %4528 = vrot.lane.b32.xlu0 %v4504, 32
    %v4529 = vpop.permute.xlu0 %4528
    %4530 = vrot.lane.b32.xlu0 %v4509, 32
    %v4531 = vpop.permute.xlu0 %4530
    %v4538 = vsel %vm779, %v4098, %v4521
    %v4539 = vsel %vm779, %v4101, %v4523
    %v4540 = vsel %vm779, %v4106, %v4525
    %v4541 = vsel %vm779, %v4155, %v4527
    %v4542 = vsel %vm779, %v4158, %v4529
    %v4543 = vsel %vm779, %v4163, %v4531
    %s4544 = scalar_lea.vmem %s14, 64
    %v4545 = vld [vmem:[%s4544] sm:$0xf]
    %v4546 = vld [vmem:[%s4544 + $0x4] sm:$0xf]
    %v4547 = vld [vmem:[%s4544 + $0x8] sm:$0xf]
    %v4548 = vld [vmem:[%s4544 + $0xc] sm:$0xf]
    %v4549 = vld [vmem:[%s4544 + $0x10] sm:$0xf]
    %v4550 = vld [vmem:[%s4544 + $0x14] sm:$0xf]
    %v4551 = vld [vmem:[%s4544 + $0x18] sm:$0xf]
    %v4552 = vld [vmem:[%s4544 + $0x1c] sm:$0xf]
    %v4553 = vpack.c.bf16 %v4539, %v4538
    %v4554 = vpack.c.bf16 %v4541, %v4540
    %v4555 = vpack.c.bf16 %v4543, %v4542
    %v4564 = vunpack.c.l.b16 %v4545
    %v4565 = vunpack.c.l.b16 %v4546
    %v4566 = vunpack.c.l.b16 %v4547
    %v4567 = vunpack.c.l.b16 %v4548
    %v4568 = vunpack.c.l.b16 %v4549
    %v4569 = vunpack.c.l.b16 %v4550
    %v4570 = vunpack.c.l.b16 %v4551
    %v4571 = vunpack.c.l.b16 %v4552
    %v4572 = vpack.c.b16 %v4565, %v4564
    %v4573 = vpack.c.b16 %v4567, %v4566
    %v4574 = vpack.c.b16 %v4569, %v4568
    %v4575 = vpack.c.b16 %v4571, %v4570
    %v4581 = vsel %vm252, %v4553, 0
    %v4584 = vsel %vm252, %v4554, 0
    %v4587 = vsel %vm252, %v4555, 0
    %4589 = vmatprep.subr.bf16.mxu0 0
    %4590 = vmatpush1.bf16.msra.mxu0 0
    %4591 = vmatprep.subr.bf16.mxu0 0
    %4592 = vmatpush1.bf16.msra.mxu0 0
    %4593 = vmatprep.subr.bf16.mxu0 0
    %4594 = vmatpush1.bf16.msra.mxu0 0
    %4595 = vmatprep.subr.bf16.mxu0 0
    %4596 = vmatpush1.bf16.msra.mxu0 0
    %4597 = vmatprep.subr.bf16.mxu0 0
    %4598 = vmatpush1.bf16.msra.mxu0 %v4575
    %4599 = vmatprep.subr.bf16.mxu0 0
    %4600 = vmatpush1.bf16.msra.mxu0 %v4574
    %4601 = vmatprep.subr.bf16.mxu0 0
    %4602 = vmatpush1.bf16.msra.mxu0 %v4573
    %4603 = vmatprep.subr.bf16.mxu0 0
    %4604 = vmatpush1.bf16.msra.mxu0 %v4572
    %4605 = vmatprep.subr.bf16.mxu0 0
    %4606 = vmatpush2.bf16.msra.mxu0 0
    %4607 = vmatprep.subr.bf16.mxu0 0
    %4608 = vmatpush2.bf16.msra.mxu0 0
    %4609 = vmatprep.subr.bf16.mxu0 0
    %4610 = vmatpush2.bf16.msra.mxu0 0
    %4611 = vmatprep.subr.bf16.mxu0 0
    %4612 = vmatpush2.bf16.msra.mxu0 0
    %4613 = vmatprep.subr.bf16.mxu0 0
    %4614 = vmatpush2.bf16.msra.mxu0 0
    %4615 = vmatprep.subr.bf16.mxu0 0
    %4616 = vmatpush2.bf16.msra.mxu0 0
    %4617 = vmatprep.subr.bf16.mxu0 0
    %4618 = vmatpush2.bf16.msra.mxu0 0
    %4619 = vmatprep.subr.bf16.mxu0 0
    %4620 = vmatpush2.bf16.msra.mxu0 0
    %4621 = vmatprep.mubr.bf16.mxu0 0
    %4622 = vmatmul.mubr.bf16.gmra.mxu0 %v4581
    %v4623 = vpop.f32.mrf.mxu0
    %v4624 = vadd.f32 0.0, %v4623
    %v4625 = vpop.f32.mrf.mxu0
    %v4626 = vpop.f32.mrf.mxu0
    %v4627 = vadd.f32 0.0, %v4626
    %v4628 = vpop.f32.mrf.mxu0
    %4629 = vmatprep.mubr.bf16.mxu0 0
    %4630 = vmatmul.mubr.bf16.gmra.mxu0 %v4584
    %v4631 = vpop.f32.mrf.mxu0
    %v4632 = vadd.f32 0.0, %v4631
    %v4633 = vpop.f32.mrf.mxu0
    %v4634 = vpop.f32.mrf.mxu0
    %v4635 = vadd.f32 0.0, %v4634
    %v4636 = vpop.f32.mrf.mxu0
    %4637 = vmatprep.mubr.bf16.mxu0 0
    %4638 = vmatmul.mubr.bf16.gmra.mxu0 %v4587
    %v4639 = vpop.f32.mrf.mxu0
    %v4640 = vadd.f32 0.0, %v4639
    %v4641 = vpop.f32.mrf.mxu0
    %v4642 = vpop.f32.mrf.mxu0
    %v4643 = vadd.f32 0.0, %v4642
    %v4644 = vpop.f32.mrf.mxu0
    %4645 = vdwg.mxu0
    %v4646 = vadd.f32 %v3589, %v4624
    %v4647 = vadd.f32 %v3590, %v4627
    %v4648 = vadd.f32 %v3591, %v4632
    %v4649 = vadd.f32 %v3592, %v4635
    %v4650 = vadd.f32 %v3593, %v4640
    %v4651 = vadd.f32 %v3594, %v4643
    %s4652 = scalar_lea.vmem %s15, 2
    %v4653 = vld [vmem:[%s4652] sm:$0x1]
    %v4655 = vlaneseq
    %v4656 = vshrl.u32 %v4655, 7
    %v4657 = vsub.s32 0, %v4656
    %v4658 = vrot.slane %v4653, %v4657
    %v4660 = vadd.f32 %v4646, %v4658
    %v4661 = vadd.f32 %v4647, %v4658
    %v4662 = vadd.f32 %v4648, %v4658
    %v4663 = vadd.f32 %v4649, %v4658
    %v4664 = vadd.f32 %v4650, %v4658
    %v4665 = vadd.f32 %v4651, %v4658
    %v4666 = vsel %vm252, %v4660, 0.0
    %4667 = vadd.xlane.f32.xlu0 %v4666
    %v4668 = vpop.xlane.xlu0 %4667
    %v4669 = vsel %vm252, %v4661, 0.0
    %4670 = vadd.xlane.f32.xlu0 %v4669
    %v4671 = vpop.xlane.xlu0 %4670
    %v4672 = vsel %vm252, %v4662, 0.0
    %4673 = vadd.xlane.f32.xlu0 %v4672
    %v4674 = vpop.xlane.xlu0 %4673
    %v4675 = vsel %vm252, %v4663, 0.0
    %4676 = vadd.xlane.f32.xlu0 %v4675
    %v4677 = vpop.xlane.xlu0 %4676
    %v4678 = vsel %vm252, %v4664, 0.0
    %4679 = vadd.xlane.f32.xlu0 %v4678
    %v4680 = vpop.xlane.xlu0 %4679
    %v4681 = vsel %vm252, %v4665, 0.0
    %4682 = vadd.xlane.f32.xlu0 %v4681
    %v4683 = vpop.xlane.xlu0 %4682
    %v4684 = vmul.f32 %v4668, %v549
    %v4685 = vmul.f32 %v4671, %v549
    %v4686 = vmul.f32 %v4674, %v549
    %v4687 = vmul.f32 %v4677, %v549
    %v4688 = vmul.f32 %v4680, %v549
    %v4689 = vmul.f32 %v4683, %v549
    %v4690 = vsub.f32 %v4660, %v4684
    %v4691 = vsub.f32 %v4661, %v4685
    %v4692 = vsub.f32 %v4662, %v4686
    %v4693 = vsub.f32 %v4663, %v4687
    %v4694 = vsub.f32 %v4664, %v4688
    %v4695 = vsub.f32 %v4665, %v4689
    %v4696 = vmul.f32 %v4690, %v4690
    %v4697 = vmul.f32 %v4691, %v4691
    %v4698 = vmul.f32 %v4692, %v4692
    %v4699 = vmul.f32 %v4693, %v4693
    %v4700 = vmul.f32 %v4694, %v4694
    %v4701 = vmul.f32 %v4695, %v4695
    %v4702 = vsel %vm252, %v4696, 0.0
    %4703 = vadd.xlane.f32.xlu0 %v4702
    %v4704 = vpop.xlane.xlu0 %4703
    %v4705 = vsel %vm252, %v4697, 0.0
    %4706 = vadd.xlane.f32.xlu0 %v4705
    %v4707 = vpop.xlane.xlu0 %4706
    %v4708 = vsel %vm252, %v4698, 0.0
    %4709 = vadd.xlane.f32.xlu0 %v4708
    %v4710 = vpop.xlane.xlu0 %4709
    %v4711 = vsel %vm252, %v4699, 0.0
    %4712 = vadd.xlane.f32.xlu0 %v4711
    %v4713 = vpop.xlane.xlu0 %4712
    %v4714 = vsel %vm252, %v4700, 0.0
    %4715 = vadd.xlane.f32.xlu0 %v4714
    %v4716 = vpop.xlane.xlu0 %4715
    %v4717 = vsel %vm252, %v4701, 0.0
    %4718 = vadd.xlane.f32.xlu0 %v4717
    %v4719 = vpop.xlane.xlu0 %4718
    %v4720 = vmul.f32 %v4704, %v549
    %v4721 = vmul.f32 %v4707, %v549
    %v4722 = vmul.f32 %v4710, %v549
    %v4723 = vmul.f32 %v4713, %v549
    %v4724 = vmul.f32 %v4716, %v549
    %v4725 = vmul.f32 %v4719, %v549
    %v4726 = vadd.f32 %v4720, 1e-05
    %v4727 = vadd.f32 %v4721, 1e-05
    %v4728 = vadd.f32 %v4722, 1e-05
    %v4729 = vadd.f32 %v4723, 1e-05
    %v4730 = vadd.f32 %v4724, 1e-05
    %v4731 = vadd.f32 %v4725, 1e-05
    %v4732 = vrsqrt.pop %v4726
    %v4733 = vrsqrt.pop %v4727
    %v4734 = vrsqrt.pop %v4728
    %v4735 = vrsqrt.pop %v4729
    %v4736 = vrsqrt.pop %v4730
    %v4737 = vrsqrt.pop %v4731
    %v4738 = vmul.f32 %v4690, %v4732
    %v4739 = vmul.f32 %v4691, %v4733
    %v4740 = vmul.f32 %v4692, %v4734
    %v4741 = vmul.f32 %v4693, %v4735
    %v4742 = vmul.f32 %v4694, %v4736
    %v4743 = vmul.f32 %v4695, %v4737
    %v4744 = vlaneseq
    %v4745 = vshrl.u32 %v4744, 7
    %v4746 = vsub.s32 2, %v4745
    %v4747 = vrot.slane %v3596, %v4746
    %v4748 = vmul.f32 %v4738, %v4747
    %v4749 = vmul.f32 %v4739, %v4747
    %v4750 = vmul.f32 %v4740, %v4747
    %v4751 = vmul.f32 %v4741, %v4747
    %v4752 = vmul.f32 %v4742, %v4747
    %v4753 = vmul.f32 %v4743, %v4747
    %v4754 = vlaneseq
    %v4755 = vshrl.u32 %v4754, 7
    %v4756 = vsub.s32 3, %v4755
    %v4757 = vrot.slane %v3596, %v4756
    %v4758 = vadd.f32 %v4748, %v4757
    %v4759 = vadd.f32 %v4749, %v4757
    %v4760 = vadd.f32 %v4750, %v4757
    %v4761 = vadd.f32 %v4751, %v4757
    %v4762 = vadd.f32 %v4752, %v4757
    %v4763 = vadd.f32 %v4753, %v4757
    %s4764 = scalar_lea.vmem %s16, 128
    %v4765 = vld [vmem:[%s4764] sm:$0xff]
    %v4766 = vld [vmem:[%s4764 + $0x8] sm:$0xff]
    %v4767 = vld [vmem:[%s4764 + $0x10] sm:$0xff]
    %v4768 = vld [vmem:[%s4764 + $0x18] sm:$0xff]
    %v4769 = vld [vmem:[%s4764 + $0x20] sm:$0xff]
    %v4770 = vld [vmem:[%s4764 + $0x28] sm:$0xff]
    %v4771 = vld [vmem:[%s4764 + $0x30] sm:$0xff]
    %v4772 = vld [vmem:[%s4764 + $0x38] sm:$0xff]
    %v4773 = vpack.c.bf16 %v4759, %v4758
    %v4774 = vpack.c.bf16 %v4761, %v4760
    %v4775 = vpack.c.bf16 %v4763, %v4762
    %s4776 = scalar_lea.vmem %s17, 4
    %v4777 = vld [vmem:[%s4776] sm:$0x3]
    %v4779 = vlaneseq
    %v4780 = vshrl.u32 %v4779, 7
    %v4781 = vsub.s32 0, %v4780
    %v4782 = vrot.slane %v4777, %v4781
    %v4783 = vlaneseq
    %v4784 = vshrl.u32 %v4783, 7
    %v4785 = vsub.s32 1, %v4784
    %v4786 = vrot.slane %v4777, %v4785
    %v4797 = vunpack.c.l.b16 %v4765
    %v4798 = vunpack.c.h.b16 %v4765
    %v4799 = vunpack.c.l.b16 %v4766
    %v4800 = vunpack.c.h.b16 %v4766
    %v4801 = vunpack.c.l.b16 %v4767
    %v4802 = vunpack.c.h.b16 %v4767
    %v4803 = vunpack.c.l.b16 %v4768
    %v4804 = vunpack.c.h.b16 %v4768
    %v4805 = vunpack.c.l.b16 %v4769
    %v4806 = vunpack.c.h.b16 %v4769
    %v4807 = vunpack.c.l.b16 %v4770
    %v4808 = vunpack.c.h.b16 %v4770
    %v4809 = vunpack.c.l.b16 %v4771
    %v4810 = vunpack.c.h.b16 %v4771
    %v4811 = vunpack.c.l.b16 %v4772
    %v4812 = vunpack.c.h.b16 %v4772
    %v4813 = vpack.c.b16 %v4799, %v4797
    %v4814 = vpack.c.b16 %v4800, %v4798
    %v4815 = vpack.c.b16 %v4803, %v4801
    %v4816 = vpack.c.b16 %v4804, %v4802
    %v4817 = vpack.c.b16 %v4807, %v4805
    %v4818 = vpack.c.b16 %v4808, %v4806
    %v4819 = vpack.c.b16 %v4811, %v4809
    %v4820 = vpack.c.b16 %v4812, %v4810
    %v4830 = vsel %vm252, %v4773, 0
    %v4833 = vsel %vm252, %v4774, 0
    %v4836 = vsel %vm252, %v4775, 0
    %4838 = vmatprep.subr.bf16.mxu0 0
    %4839 = vmatpush1.bf16.msra.mxu0 0
    %4840 = vmatprep.subr.bf16.mxu0 0
    %4841 = vmatpush1.bf16.msra.mxu0 0
    %4842 = vmatprep.subr.bf16.mxu0 0
    %4843 = vmatpush1.bf16.msra.mxu0 0
    %4844 = vmatprep.subr.bf16.mxu0 0
    %4845 = vmatpush1.bf16.msra.mxu0 0
    %4846 = vmatprep.subr.bf16.mxu0 %v4820
    %4847 = vmatpush1.bf16.msra.mxu0 %v4819
    %4848 = vmatprep.subr.bf16.mxu0 %v4818
    %4849 = vmatpush1.bf16.msra.mxu0 %v4817
    %4850 = vmatprep.subr.bf16.mxu0 %v4816
    %4851 = vmatpush1.bf16.msra.mxu0 %v4815
    %4852 = vmatprep.subr.bf16.mxu0 %v4814
    %4853 = vmatpush1.bf16.msra.mxu0 %v4813
    %4854 = vmatprep.subr.bf16.mxu0 0
    %4855 = vmatpush2.bf16.msra.mxu0 0
    %4856 = vmatprep.subr.bf16.mxu0 0
    %4857 = vmatpush2.bf16.msra.mxu0 0
    %4858 = vmatprep.subr.bf16.mxu0 0
    %4859 = vmatpush2.bf16.msra.mxu0 0
    %4860 = vmatprep.subr.bf16.mxu0 0
    %4861 = vmatpush2.bf16.msra.mxu0 0
    %4862 = vmatprep.subr.bf16.mxu0 0
    %4863 = vmatpush2.bf16.msra.mxu0 0
    %4864 = vmatprep.subr.bf16.mxu0 0
    %4865 = vmatpush2.bf16.msra.mxu0 0
    %4866 = vmatprep.subr.bf16.mxu0 0
    %4867 = vmatpush2.bf16.msra.mxu0 0
    %4868 = vmatprep.subr.bf16.mxu0 0
    %4869 = vmatpush2.bf16.msra.mxu0 0
    %4870 = vmatprep.mubr.bf16.mxu0 0
    %4871 = vmatmul.mubr.bf16.gmra.mxu0 %v4830
    %v4872 = vpop.f32.mrf.mxu0
    %v4873 = vadd.f32 %v4782, %v4872
    %v4874 = vpop.f32.mrf.mxu0
    %v4875 = vadd.f32 %v4786, %v4874
    %v4876 = vpop.f32.mrf.mxu0
    %v4877 = vadd.f32 %v4782, %v4876
    %v4878 = vpop.f32.mrf.mxu0
    %v4879 = vadd.f32 %v4786, %v4878
    %4880 = vmatprep.mubr.bf16.mxu0 0
    %4881 = vmatmul.mubr.bf16.gmra.mxu0 %v4833
    %v4882 = vpop.f32.mrf.mxu0
    %v4883 = vadd.f32 %v4782, %v4882
    %v4884 = vpop.f32.mrf.mxu0
    %v4885 = vadd.f32 %v4786, %v4884
    %v4886 = vpop.f32.mrf.mxu0
    %v4887 = vadd.f32 %v4782, %v4886
    %v4888 = vpop.f32.mrf.mxu0
    %v4889 = vadd.f32 %v4786, %v4888
    %4890 = vmatprep.mubr.bf16.mxu0 0
    %4891 = vmatmul.mubr.bf16.gmra.mxu0 %v4836
    %v4892 = vpop.f32.mrf.mxu0
    %v4893 = vadd.f32 %v4782, %v4892
    %v4894 = vpop.f32.mrf.mxu0
    %v4895 = vadd.f32 %v4786, %v4894
    %v4896 = vpop.f32.mrf.mxu0
    %v4897 = vadd.f32 %v4782, %v4896
    %v4898 = vpop.f32.mrf.mxu0
    %v4899 = vadd.f32 %v4786, %v4898
    %4900 = vdwg.mxu0
    %v4901 = vmax.f32 %v4873, 0.0
    %v4902 = vmax.f32 %v4875, 0.0
    %v4903 = vmax.f32 %v4877, 0.0
    %v4904 = vmax.f32 %v4879, 0.0
    %v4905 = vmax.f32 %v4883, 0.0
    %v4906 = vmax.f32 %v4885, 0.0
    %v4907 = vmax.f32 %v4887, 0.0
    %v4908 = vmax.f32 %v4889, 0.0
    %v4909 = vmax.f32 %v4893, 0.0
    %v4910 = vmax.f32 %v4895, 0.0
    %v4911 = vmax.f32 %v4897, 0.0
    %v4912 = vmax.f32 %v4899, 0.0
    %s4913 = scalar_lea.vmem %s18, 256
    %v4914 = vld [vmem:[%s4913] sm:$0xf]
    %v4915 = vld [vmem:[%s4913 + $0x4] sm:$0xf]
    %v4916 = vld [vmem:[%s4913 + $0x8] sm:$0xf]
    %v4917 = vld [vmem:[%s4913 + $0xc] sm:$0xf]
    %v4918 = vld [vmem:[%s4913 + $0x10] sm:$0xf]
    %v4919 = vld [vmem:[%s4913 + $0x14] sm:$0xf]
    %v4920 = vld [vmem:[%s4913 + $0x18] sm:$0xf]
    %v4921 = vld [vmem:[%s4913 + $0x1c] sm:$0xf]
    %v4922 = vld [vmem:[%s4913 + $0x20] sm:$0xf]
    %v4923 = vld [vmem:[%s4913 + $0x24] sm:$0xf]
    %v4924 = vld [vmem:[%s4913 + $0x28] sm:$0xf]
    %v4925 = vld [vmem:[%s4913 + $0x2c] sm:$0xf]
    %v4926 = vld [vmem:[%s4913 + $0x30] sm:$0xf]
    %v4927 = vld [vmem:[%s4913 + $0x34] sm:$0xf]
    %v4928 = vld [vmem:[%s4913 + $0x38] sm:$0xf]
    %v4929 = vld [vmem:[%s4913 + $0x3c] sm:$0xf]
    %v4930 = vld [vmem:[%s4913 + $0x40] sm:$0xf]
    %v4931 = vld [vmem:[%s4913 + $0x44] sm:$0xf]
    %v4932 = vld [vmem:[%s4913 + $0x48] sm:$0xf]
    %v4933 = vld [vmem:[%s4913 + $0x4c] sm:$0xf]
    %v4934 = vld [vmem:[%s4913 + $0x50] sm:$0xf]
    %v4935 = vld [vmem:[%s4913 + $0x54] sm:$0xf]
    %v4936 = vld [vmem:[%s4913 + $0x58] sm:$0xf]
    %v4937 = vld [vmem:[%s4913 + $0x5c] sm:$0xf]
    %v4938 = vld [vmem:[%s4913 + $0x60] sm:$0xf]
    %v4939 = vld [vmem:[%s4913 + $0x64] sm:$0xf]
    %v4940 = vld [vmem:[%s4913 + $0x68] sm:$0xf]
    %v4941 = vld [vmem:[%s4913 + $0x6c] sm:$0xf]
    %v4942 = vld [vmem:[%s4913 + $0x70] sm:$0xf]
    %v4943 = vld [vmem:[%s4913 + $0x74] sm:$0xf]
    %v4944 = vld [vmem:[%s4913 + $0x78] sm:$0xf]
    %v4945 = vld [vmem:[%s4913 + $0x7c] sm:$0xf]
    %v4946 = vpack.c.bf16 %v4903, %v4901
    %v4947 = vpack.c.bf16 %v4904, %v4902
    %v4948 = vpack.c.bf16 %v4907, %v4905
    %v4949 = vpack.c.bf16 %v4908, %v4906
    %v4950 = vpack.c.bf16 %v4911, %v4909
    %v4951 = vpack.c.bf16 %v4912, %v4910
    %v4984 = vunpack.c.l.b16 %v4914
    %v4985 = vunpack.c.l.b16 %v4915
    %v4986 = vunpack.c.l.b16 %v4916
    %v4987 = vunpack.c.l.b16 %v4917
    %v4988 = vunpack.c.l.b16 %v4918
    %v4989 = vunpack.c.l.b16 %v4919
    %v4990 = vunpack.c.l.b16 %v4920
    %v4991 = vunpack.c.l.b16 %v4921
    %v4992 = vunpack.c.l.b16 %v4922
    %v4993 = vunpack.c.l.b16 %v4923
    %v4994 = vunpack.c.l.b16 %v4924
    %v4995 = vunpack.c.l.b16 %v4925
    %v4996 = vunpack.c.l.b16 %v4926
    %v4997 = vunpack.c.l.b16 %v4927
    %v4998 = vunpack.c.l.b16 %v4928
    %v4999 = vunpack.c.l.b16 %v4929
    %v5000 = vunpack.c.l.b16 %v4930
    %v5001 = vunpack.c.l.b16 %v4931
    %v5002 = vunpack.c.l.b16 %v4932
    %v5003 = vunpack.c.l.b16 %v4933
    %v5004 = vunpack.c.l.b16 %v4934
    %v5005 = vunpack.c.l.b16 %v4935
    %v5006 = vunpack.c.l.b16 %v4936
    %v5007 = vunpack.c.l.b16 %v4937
    %v5008 = vunpack.c.l.b16 %v4938
    %v5009 = vunpack.c.l.b16 %v4939
    %v5010 = vunpack.c.l.b16 %v4940
    %v5011 = vunpack.c.l.b16 %v4941
    %v5012 = vunpack.c.l.b16 %v4942
    %v5013 = vunpack.c.l.b16 %v4943
    %v5014 = vunpack.c.l.b16 %v4944
    %v5015 = vunpack.c.l.b16 %v4945
    %v5016 = vpack.c.b16 %v4985, %v4984
    %v5017 = vpack.c.b16 %v4987, %v4986
    %v5018 = vpack.c.b16 %v4989, %v4988
    %v5019 = vpack.c.b16 %v4991, %v4990
    %v5020 = vpack.c.b16 %v4993, %v4992
    %v5021 = vpack.c.b16 %v4995, %v4994
    %v5022 = vpack.c.b16 %v4997, %v4996
    %v5023 = vpack.c.b16 %v4999, %v4998
    %v5024 = vpack.c.b16 %v5001, %v5000
    %v5025 = vpack.c.b16 %v5003, %v5002
    %v5026 = vpack.c.b16 %v5005, %v5004
    %v5027 = vpack.c.b16 %v5007, %v5006
    %v5028 = vpack.c.b16 %v5009, %v5008
    %v5029 = vpack.c.b16 %v5011, %v5010
    %v5030 = vpack.c.b16 %v5013, %v5012
    %v5031 = vpack.c.b16 %v5015, %v5014
    %5048 = vmatprep.subr.bf16.mxu0 0
    %5049 = vmatpush1.bf16.msra.mxu0 %v5023
    %5050 = vmatprep.subr.bf16.mxu0 0
    %5051 = vmatpush1.bf16.msra.mxu0 %v5022
    %5052 = vmatprep.subr.bf16.mxu0 0
    %5053 = vmatpush1.bf16.msra.mxu0 %v5021
    %5054 = vmatprep.subr.bf16.mxu0 0
    %5055 = vmatpush1.bf16.msra.mxu0 %v5020
    %5056 = vmatprep.subr.bf16.mxu0 0
    %5057 = vmatpush1.bf16.msra.mxu0 %v5019
    %5058 = vmatprep.subr.bf16.mxu0 0
    %5059 = vmatpush1.bf16.msra.mxu0 %v5018
    %5060 = vmatprep.subr.bf16.mxu0 0
    %5061 = vmatpush1.bf16.msra.mxu0 %v5017
    %5062 = vmatprep.subr.bf16.mxu0 0
    %5063 = vmatpush1.bf16.msra.mxu0 %v5016
    %5064 = vmatprep.subr.bf16.mxu0 0
    %5065 = vmatpush2.bf16.msra.mxu0 %v5031
    %5066 = vmatprep.subr.bf16.mxu0 0
    %5067 = vmatpush2.bf16.msra.mxu0 %v5030
    %5068 = vmatprep.subr.bf16.mxu0 0
    %5069 = vmatpush2.bf16.msra.mxu0 %v5029
    %5070 = vmatprep.subr.bf16.mxu0 0
    %5071 = vmatpush2.bf16.msra.mxu0 %v5028
    %5072 = vmatprep.subr.bf16.mxu0 0
    %5073 = vmatpush2.bf16.msra.mxu0 %v5027
    %5074 = vmatprep.subr.bf16.mxu0 0
    %5075 = vmatpush2.bf16.msra.mxu0 %v5026
    %5076 = vmatprep.subr.bf16.mxu0 0
    %5077 = vmatpush2.bf16.msra.mxu0 %v5025
    %5078 = vmatprep.subr.bf16.mxu0 0
    %5079 = vmatpush2.bf16.msra.mxu0 %v5024
    %5080 = vmatprep.mubr.bf16.mxu0 %v4947
    %5081 = vmatmul.mubr.bf16.gmra.mxu0 %v4946
    %v5082 = vpop.f32.mrf.mxu0
    %v5083 = vadd.f32 0.0, %v5082
    %v5084 = vpop.f32.mrf.mxu0
    %v5085 = vpop.f32.mrf.mxu0
    %v5086 = vadd.f32 0.0, %v5085
    %v5087 = vpop.f32.mrf.mxu0
    %5088 = vmatprep.mubr.bf16.mxu0 %v4949
    %5089 = vmatmul.mubr.bf16.gmra.mxu0 %v4948
    %v5090 = vpop.f32.mrf.mxu0
    %v5091 = vadd.f32 0.0, %v5090
    %v5092 = vpop.f32.mrf.mxu0
    %v5093 = vpop.f32.mrf.mxu0
    %v5094 = vadd.f32 0.0, %v5093
    %v5095 = vpop.f32.mrf.mxu0
    %5096 = vmatprep.mubr.bf16.mxu0 %v4951
    %5097 = vmatmul.mubr.bf16.gmra.mxu0 %v4950
    %v5098 = vpop.f32.mrf.mxu0
    %v5099 = vadd.f32 0.0, %v5098
    %v5100 = vpop.f32.mrf.mxu0
    %v5101 = vpop.f32.mrf.mxu0
    %v5102 = vadd.f32 0.0, %v5101
    %v5103 = vpop.f32.mrf.mxu0
    %5104 = vdwg.mxu0
    %v5105 = vadd.f32 %v4660, %v5083
    %v5106 = vadd.f32 %v4661, %v5086
    %v5107 = vadd.f32 %v4662, %v5091
    %v5108 = vadd.f32 %v4663, %v5094
    %v5109 = vadd.f32 %v4664, %v5099
    %v5110 = vadd.f32 %v4665, %v5102
    %s5111 = scalar_lea.vmem %s19, 2
    %v5112 = vld [vmem:[%s5111] sm:$0x1]
    %v5114 = vlaneseq
    %v5115 = vshrl.u32 %v5114, 7
    %v5116 = vsub.s32 0, %v5115
    %v5117 = vrot.slane %v5112, %v5116
    %v5119 = vadd.f32 %v5105, %v5117
    %v5120 = vadd.f32 %v5106, %v5117
    %v5121 = vadd.f32 %v5107, %v5117
    %v5122 = vadd.f32 %v5108, %v5117
    %v5123 = vadd.f32 %v5109, %v5117
    %v5124 = vadd.f32 %v5110, %v5117
    %vm5125 = vcmask 189440
    %v5126 = vsel %vm5125, %v81, 0.0
    %5127 = vadd.xlane.f32.xlu0 %v5126
    %v5128 = vpop.xlane.xlu0 %5127
    %v5129 = vmax.f32 %v5128, 1.0
    %v5130 = vrcp.pop %v5129
    %v5131 = vmul.f32 1.0, %v5130
    %v5132 = vmul.f32 %v81, %v5131
    %v5133 = vlaneseq
    %v5134 = vshrl.u32 %v5133, 7
    %v5135 = vsub.s32 0, %v5134
    %v5136 = vrot.slane %v5132, %v5135
    %5138 = vbcast.lane.b32.xlu0 %v5136, 256
    %v5139 = vpop.permute.xlu0 %5138
    %s5141 = sor.u32 256, 8
    %5142 = vbcast.lane.b32.xlu0 %v5136, %s5141
    %v5143 = vpop.permute.xlu0 %5142
    %s5145 = sor.u32 256, 16
    %5146 = vbcast.lane.b32.xlu0 %v5136, %s5145
    %v5147 = vpop.permute.xlu0 %5146
    %v5148 = vlaneseq
    %v5149 = vshrl.u32 %v5148, 7
    %v5150 = vsub.s32 1, %v5149
    %v5151 = vrot.slane %v5132, %v5150
    %5153 = vbcast.lane.b32.xlu0 %v5151, 256
    %v5154 = vpop.permute.xlu0 %5153
    %s5156 = sor.u32 256, 8
    %5157 = vbcast.lane.b32.xlu0 %v5151, %s5156
    %v5158 = vpop.permute.xlu0 %5157
    %s5160 = sor.u32 256, 16
    %5161 = vbcast.lane.b32.xlu0 %v5151, %s5160
    %v5162 = vpop.permute.xlu0 %5161
    %v5163 = vmul.f32 %v5119, %v5139
    %v5164 = vmul.f32 %v5120, %v5143
    %v5165 = vmul.f32 %v5121, %v5147
    %v5166 = vmul.f32 %v5122, %v5154
    %v5167 = vmul.f32 %v5123, %v5158
    %v5168 = vmul.f32 %v5124, %v5162
    %v5169 = vsel %vm252, %v5163, 0.0
    %v5170 = vsel %vm252, %v5164, 0.0
    %v5171 = vadd.f32 %v5169, %v5170
    %v5172 = vsel %vm252, %v5165, 0.0
    %v5173 = vadd.f32 %v5171, %v5172
    %v5174 = vrot.slane %v5173, 4
    %v5175 = vadd.f32 %v5173, %v5174
    %v5176 = vrot.slane %v5175, 2
    %v5177 = vadd.f32 %v5175, %v5176
    %v5178 = vrot.slane %v5177, 1
    %v5179 = vadd.f32 %v5177, %v5178
    %v5180 = vsel %vm252, %v5166, 0.0
    %v5181 = vsel %vm252, %v5167, 0.0
    %v5182 = vadd.f32 %v5180, %v5181
    %v5183 = vsel %vm252, %v5168, 0.0
    %v5184 = vadd.f32 %v5182, %v5183
    %v5185 = vrot.slane %v5184, 4
    %v5186 = vadd.f32 %v5184, %v5185
    %v5187 = vrot.slane %v5186, 2
    %v5188 = vadd.f32 %v5186, %v5187
    %v5189 = vrot.slane %v5188, 1
    %v5190 = vadd.f32 %v5188, %v5189
    %vm5193 = vcmask 1041409
    %v5194 = vsel %vm5193, %v5190, %v5179
    %v5198 = vrot.slane %v5124, 7
    %v5199 = vsel %vm5193, %v5198, %v5121
    %5200 = vrot.lane.b32.xlu0 %v5199, 64
    %v5201 = vpop.permute.xlu0 %5200
    %v5203 = vsel %vm252, %v5194, %v5201
    %v5204 = vld [vmem:[%s20] sm:$0xf]
    %v5205 = vld [vmem:[%s20 + $0x4] sm:$0xf]
    %v5206 = vld [vmem:[%s20 + $0x8] sm:$0xf]
    %v5207 = vld [vmem:[%s20 + $0xc] sm:$0xf]
    %v5208 = vld [vmem:[%s20 + $0x10] sm:$0xf]
    %v5209 = vld [vmem:[%s20 + $0x14] sm:$0xf]
    %v5210 = vld [vmem:[%s20 + $0x18] sm:$0xf]
    %v5211 = vld [vmem:[%s20 + $0x1c] sm:$0xf]
    %v5212 = vld [vmem:[%s20 + $0x20] sm:$0xf]
    %v5213 = vld [vmem:[%s20 + $0x24] sm:$0xf]
    %v5214 = vld [vmem:[%s20 + $0x28] sm:$0xf]
    %v5215 = vld [vmem:[%s20 + $0x2c] sm:$0xf]
    %v5216 = vld [vmem:[%s20 + $0x30] sm:$0xf]
    %v5217 = vld [vmem:[%s20 + $0x34] sm:$0xf]
    %v5218 = vld [vmem:[%s20 + $0x38] sm:$0xf]
    %v5219 = vld [vmem:[%s20 + $0x3c] sm:$0xf]
    %v5220 = vpack.c.bf16 %v5203, %v5203
    %v5221 = vld [vmem:[%s21] sm:$0x1]
    %v5223 = vlaneseq
    %v5224 = vshrl.u32 %v5223, 7
    %v5225 = vsub.s32 0, %v5224
    %v5226 = vrot.slane %v5221, %v5225
    %v5244 = vunpack.c.l.b16 %v5204
    %v5245 = vunpack.c.l.b16 %v5205
    %v5246 = vunpack.c.l.b16 %v5206
    %v5247 = vunpack.c.l.b16 %v5207
    %v5248 = vunpack.c.l.b16 %v5208
    %v5249 = vunpack.c.l.b16 %v5209
    %v5250 = vunpack.c.l.b16 %v5210
    %v5251 = vunpack.c.l.b16 %v5211
    %v5252 = vunpack.c.l.b16 %v5212
    %v5253 = vunpack.c.l.b16 %v5213
    %v5254 = vunpack.c.l.b16 %v5214
    %v5255 = vunpack.c.l.b16 %v5215
    %v5256 = vunpack.c.l.b16 %v5216
    %v5257 = vunpack.c.l.b16 %v5217
    %v5258 = vunpack.c.l.b16 %v5218
    %v5259 = vunpack.c.l.b16 %v5219
    %v5260 = vpack.c.b16 %v5245, %v5244
    %v5261 = vpack.c.b16 %v5247, %v5246
    %v5262 = vpack.c.b16 %v5249, %v5248
    %v5263 = vpack.c.b16 %v5251, %v5250
    %v5264 = vpack.c.b16 %v5253, %v5252
    %v5265 = vpack.c.b16 %v5255, %v5254
    %v5266 = vpack.c.b16 %v5257, %v5256
    %v5267 = vpack.c.b16 %v5259, %v5258
    %5276 = vmatprep.subr.bf16.mxu0 0
    %5277 = vmatpush1.bf16.msra.mxu0 %v5267
    %5278 = vmatprep.subr.bf16.mxu0 0
    %5279 = vmatpush1.bf16.msra.mxu0 %v5266
    %5280 = vmatprep.subr.bf16.mxu0 0
    %5281 = vmatpush1.bf16.msra.mxu0 %v5265
    %5282 = vmatprep.subr.bf16.mxu0 0
    %5283 = vmatpush1.bf16.msra.mxu0 %v5264
    %5284 = vmatprep.subr.bf16.mxu0 0
    %5285 = vmatpush1.bf16.msra.mxu0 %v5263
    %5286 = vmatprep.subr.bf16.mxu0 0
    %5287 = vmatpush1.bf16.msra.mxu0 %v5262
    %5288 = vmatprep.subr.bf16.mxu0 0
    %5289 = vmatpush1.bf16.msra.mxu0 %v5261
    %5290 = vmatprep.subr.bf16.mxu0 0
    %5291 = vmatpush1.bf16.msra.mxu0 %v5260
    %5292 = vmatprep.subr.bf16.mxu0 0
    %5293 = vmatpush2.bf16.msra.mxu0 0
    %5294 = vmatprep.subr.bf16.mxu0 0
    %5295 = vmatpush2.bf16.msra.mxu0 0
    %5296 = vmatprep.subr.bf16.mxu0 0
    %5297 = vmatpush2.bf16.msra.mxu0 0
    %5298 = vmatprep.subr.bf16.mxu0 0
    %5299 = vmatpush2.bf16.msra.mxu0 0
    %5300 = vmatprep.subr.bf16.mxu0 0
    %5301 = vmatpush2.bf16.msra.mxu0 0
    %5302 = vmatprep.subr.bf16.mxu0 0
    %5303 = vmatpush2.bf16.msra.mxu0 0
    %5304 = vmatprep.subr.bf16.mxu0 0
    %5305 = vmatpush2.bf16.msra.mxu0 0
    %5306 = vmatprep.subr.bf16.mxu0 0
    %5307 = vmatpush2.bf16.msra.mxu0 0
    %5308 = vmatprep.mubr.bf16.mxu0 0
    %5309 = vmatmul.mubr.bf16.gmra.mxu0 %v5220
    %v5310 = vpop.f32.mrf.mxu0
    %v5311 = vadd.f32 %v5226, %v5310
    %v5312 = vpop.f32.mrf.mxu0
    %v5313 = vpop.f32.mrf.mxu0
    %v5314 = vpop.f32.mrf.mxu0
    %5315 = vdwg.mxu0
    %v5316 = vmax.f32 %v5311, 0.0
    %v5317 = vld [vmem:[%s22] sm:$0xf]
    %v5318 = vld [vmem:[%s22 + $0x4] sm:$0xf]
    %v5319 = vld [vmem:[%s22 + $0x8] sm:$0xf]
    %v5320 = vld [vmem:[%s22 + $0xc] sm:$0xf]
    %v5321 = vld [vmem:[%s22 + $0x10] sm:$0xf]
    %v5322 = vld [vmem:[%s22 + $0x14] sm:$0xf]
    %v5323 = vld [vmem:[%s22 + $0x18] sm:$0xf]
    %v5324 = vld [vmem:[%s22 + $0x1c] sm:$0xf]
    %v5325 = vld [vmem:[%s22 + $0x20] sm:$0xf]
    %v5326 = vld [vmem:[%s22 + $0x24] sm:$0xf]
    %v5327 = vld [vmem:[%s22 + $0x28] sm:$0xf]
    %v5328 = vld [vmem:[%s22 + $0x2c] sm:$0xf]
    %v5329 = vld [vmem:[%s22 + $0x30] sm:$0xf]
    %v5330 = vld [vmem:[%s22 + $0x34] sm:$0xf]
    %v5331 = vld [vmem:[%s22 + $0x38] sm:$0xf]
    %v5332 = vld [vmem:[%s22 + $0x3c] sm:$0xf]
    %v5333 = vpack.c.bf16 %v5316, %v5316
    %v5334 = vld [vmem:[#allocation2] sm:$0x1]
    %v5336 = vlaneseq
    %v5337 = vshrl.u32 %v5336, 7
    %v5338 = vsub.s32 0, %v5337
    %v5339 = vrot.slane %v5334, %v5338
    %v5357 = vunpack.c.l.b16 %v5317
    %v5358 = vunpack.c.l.b16 %v5318
    %v5359 = vunpack.c.l.b16 %v5319
    %v5360 = vunpack.c.l.b16 %v5320
    %v5361 = vunpack.c.l.b16 %v5321
    %v5362 = vunpack.c.l.b16 %v5322
    %v5363 = vunpack.c.l.b16 %v5323
    %v5364 = vunpack.c.l.b16 %v5324
    %v5365 = vunpack.c.l.b16 %v5325
    %v5366 = vunpack.c.l.b16 %v5326
    %v5367 = vunpack.c.l.b16 %v5327
    %v5368 = vunpack.c.l.b16 %v5328
    %v5369 = vunpack.c.l.b16 %v5329
    %v5370 = vunpack.c.l.b16 %v5330
    %v5371 = vunpack.c.l.b16 %v5331
    %v5372 = vunpack.c.l.b16 %v5332
    %v5373 = vpack.c.b16 %v5358, %v5357
    %v5374 = vpack.c.b16 %v5360, %v5359
    %v5375 = vpack.c.b16 %v5362, %v5361
    %v5376 = vpack.c.b16 %v5364, %v5363
    %v5377 = vpack.c.b16 %v5366, %v5365
    %v5378 = vpack.c.b16 %v5368, %v5367
    %v5379 = vpack.c.b16 %v5370, %v5369
    %v5380 = vpack.c.b16 %v5372, %v5371
    %5389 = vmatprep.subr.bf16.mxu0 0
    %5390 = vmatpush1.bf16.msra.mxu0 %v5380
    %5391 = vmatprep.subr.bf16.mxu0 0
    %5392 = vmatpush1.bf16.msra.mxu0 %v5379
    %5393 = vmatprep.subr.bf16.mxu0 0
    %5394 = vmatpush1.bf16.msra.mxu0 %v5378
    %5395 = vmatprep.subr.bf16.mxu0 0
    %5396 = vmatpush1.bf16.msra.mxu0 %v5377
    %5397 = vmatprep.subr.bf16.mxu0 0
    %5398 = vmatpush1.bf16.msra.mxu0 %v5376
    %5399 = vmatprep.subr.bf16.mxu0 0
    %5400 = vmatpush1.bf16.msra.mxu0 %v5375
    %5401 = vmatprep.subr.bf16.mxu0 0
    %5402 = vmatpush1.bf16.msra.mxu0 %v5374
    %5403 = vmatprep.subr.bf16.mxu0 0
    %5404 = vmatpush1.bf16.msra.mxu0 %v5373
    %5405 = vmatprep.subr.bf16.mxu0 0
    %5406 = vmatpush2.bf16.msra.mxu0 0
    %5407 = vmatprep.subr.bf16.mxu0 0
    %5408 = vmatpush2.bf16.msra.mxu0 0
    %5409 = vmatprep.subr.bf16.mxu0 0
    %5410 = vmatpush2.bf16.msra.mxu0 0
    %5411 = vmatprep.subr.bf16.mxu0 0
    %5412 = vmatpush2.bf16.msra.mxu0 0
    %5413 = vmatprep.subr.bf16.mxu0 0
    %5414 = vmatpush2.bf16.msra.mxu0 0
    %5415 = vmatprep.subr.bf16.mxu0 0
    %5416 = vmatpush2.bf16.msra.mxu0 0
    %5417 = vmatprep.subr.bf16.mxu0 0
    %5418 = vmatpush2.bf16.msra.mxu0 0
    %5419 = vmatprep.subr.bf16.mxu0 0
    %5420 = vmatpush2.bf16.msra.mxu0 0
    %5421 = vmatprep.mubr.bf16.mxu0 0
    %5422 = vmatmul.mubr.bf16.gmra.mxu0 %v5333
    %v5423 = vpop.f32.mrf.mxu0
    %v5424 = vadd.f32 %v5339, %v5423
    %v5425 = vpop.f32.mrf.mxu0
    %v5426 = vpop.f32.mrf.mxu0
    %v5427 = vpop.f32.mrf.mxu0
    %5428 = vdwg.mxu0
    %5430 = vset.pattern.permute.xlu0 0
    %5431 = vperm.xlu0 %5430, %v5424
    %v5432 = vpop.permute.xlu0 %5431
    %v5434 = vcombine.low %v5203, %v5432
    %v5436 = vunpack.c.l.s4 1983009808
    %v5437 = vunpack.c.0.s8 %v5436
    %v5438 = vlaneseq
    %v5439 = vshrl.u32 %v5438, 7
    %v5440 = vsub.s32 %v5437, %v5439
    %v5441 = vrot.slane %v5434, %v5440
    %5443 = vst [vmem:[#allocation3] sm:$0xf] %v5441
    // Predicated region
    $region98: #{tpu_custom_call.1} parent=1 // pred_check
      _
    $region99: #{tpu_custom_call.1} parent=1 // pred_check_branch
      %5445 = sbr.rel (0) target = $region101
    $region100: #{tpu_custom_call.1} parent=1 // pred_region
      %s5447 = ssub.s32 64, 64
      %5448 = vsyncadd [#allocation4], %s5447
      %s5450 = sshll.u32 [#allocation3], 4
      %s5451 = int_to_ptr.vmem [resolvable:$true] %s5450
      %5453 = dma.vmem_to_hbm [thread:$0]  %s5451, 64, %s24, [#allocation4]
    $region101: #{tpu_custom_call.1} parent=1 // pred_fallthru
      _
    // Predicated region
    $region102: #{tpu_custom_call.1} parent=1 // pred_check
      _
    $region103: #{tpu_custom_call.1} parent=1 // pred_check_branch
      %5455 = sbr.rel (0) target = $region105
    $region104: #{tpu_custom_call.1} parent=1 // pred_region
      %5456 = dma.done [#allocation4], 64
    $region105: #{tpu_custom_call.1} parent=1 // pred_fallthru
      _
    %5457 = vsyncpa [#allocation4], 1

</llo_original>
